<compile_context>
chip_gen: v7x
topology: tpu7x:2x2x1
jax: 0.10.0
libtpu: 0.0.40
codegen_flags: <defaults>
</compile_context>

<pallas_src>
import functools

import jax
import jax.numpy as jnp
from jax import lax
from jax.experimental import pallas as pl
from jax.experimental.pallas import tpu as pltpu

_PREC = lax.Precision.HIGHEST  # used only by the pure-JAX reference


# ----------------------------- one block, traced inside the fused stage kernel --------

def _block_compute(x, w_ph_ref, w_cd_ref, rows_ref, pad_h_ref, meta, H, W, C, PH):
    """One AudioInceptionNeXtBlock on a lane-dense (H, W*Cin) f32 slab -> (H, W*Cout)."""
    WC = W * C
    has_proj, r0, cd0, kts, kfs = meta

    def row(i):  # (1, W*C) parameter row; broadcasts over H (sublane axis)
        return rows_ref[r0 + i:r0 + i + 1, :]

    # --- branch1 (shortcut) and a_head 1x1 convs: ONE block-diagonal bf16 MXU matmul.
    xb = x.astype(jnp.bfloat16)
    if has_proj:
        ph = jnp.dot(xb, w_ph_ref[...], preferred_element_type=jnp.float32)  # (H, 2*WC)
        short = ph[:, :WC] + row(0)
        head = ph[:, WC:] + row(1)
    else:
        short = x
        head = jnp.dot(xb, w_ph_ref[...], preferred_element_type=jnp.float32) + row(1)

    # --- temporal depthwise convs a / a_small / a_medium (shift along H = sublanes).
    # All three read `head`: write it once into the shared zero-halo scratch and iterate
    # the UNION of tap offsets so each shifted (H, W*C) slab is loaded exactly once.
    pad_h_ref[PH:PH + H, :] = head

    wt_off = [r0 + 9]
    for K in kts[:-1]:
        wt_off.append(wt_off[-1] + K)
    wf_off = [wt_off[-1] + kts[-1]]
    for K in kfs[:-1]:
        wf_off.append(wf_off[-1] + K)

    pads = [K // 2 for K in kts]
    pmax = max(pads)
    t_out = [None, None, None]
    for d in range(-pmax, pmax + 1):
        s = pad_h_ref[PH + d:PH + d + H, :]
        for j in range(3):
            if abs(d) <= pads[j]:
                k = d + pads[j]
                w = rows_ref[wt_off[j] + k:wt_off[j] + k + 1, :]
                t_out[j] = s * w if t_out[j] is None else t_out[j] + s * w

    # --- frequency depthwise convs b / b_small / b_medium: roll along the lane axis by
    # k*C (XLU slot); zero-padding is reproduced by zeros pre-baked into the host-masked
    # weight rows (wrapped lanes get multiplied by 0).
    def fconv(u, off, K):
        p = K // 2
        out = None
        for k in range(K):
            d = k - p
            w = rows_ref[off + k:off + k + 1, :]
            v = u if d == 0 else pltpu.roll(u, shift=(-d * C) % WC, axis=1)
            out = v * w if out is None else out + v * w
        return out

    acc = None
    for j in range(3):  # paths: (a, b), (a_small, b_small), (a_medium, b_medium)
        u = jax.nn.relu(t_out[j] + row(2 + j))
        u = jax.nn.relu(fconv(u, wf_off[j], kfs[j]) + row(5 + j))
        acc = u if acc is None else acc + u

    # --- folded bottleneck conv_c . c_bn . conv_d . d_bn: ONE bf16 MXU matmul.
    comb = jnp.dot(acc.astype(jnp.bfloat16), w_cd_ref[cd0:cd0 + WC, :],
                   preferred_element_type=jnp.float32) + row(8)

    return jax.nn.relu(short + comb)


# ----------------------------- fused stage kernel (all blocks, one batch element) -----

def stage_kernel(*refs, nb, block_meta, H, W, C, PH):
    x_ref = refs[0]
    w_ph_refs = refs[1:1 + nb]
    w_cd_ref = refs[1 + nb]
    rows_ref = refs[2 + nb]
    out_ref = refs[3 + nb]
    pad_h_ref = refs[4 + nb]
    WC = W * C

    # Zero only the halo rows of the shared temporal-pad scratch. This runs every grid
    # step on purpose: scratch is per-core under megacore sharding, so it must NOT be
    # gated behind program_id == 0.
    if PH > 0:
        z = jnp.zeros((PH, WC), jnp.float32)
        pad_h_ref[0:PH, :] = z
        pad_h_ref[PH + H:PH + 2 * PH + H, :] = z

    x = x_ref[...].reshape(H, x_ref.shape[-1]).astype(jnp.float32)
    for bi in range(nb):
        x = _block_compute(x, w_ph_refs[bi], w_cd_ref, rows_ref, pad_h_ref,
                           block_meta[bi], H, W, C, PH)
    out_ref[...] = x.reshape(1, H, WC).astype(out_ref.dtype)


# ----------------------------- host-side parameter prep (BN fold, packing) ------------

def prep_block_params(p, has_proj, W):
    """Fold eval-mode BN scales into conv weights, expand the 1x1 convs to lane-dense
    block-diagonal bf16 matrices, fold c∘d, and pack all per-channel rows (tiled to W*C,
    frequency taps edge-masked) into one f32 slab."""
    s, b = p["bns_scale"], p["bns_bias"]
    C = s.shape[1]
    eye_w = jnp.eye(W, dtype=jnp.float32)

    def bd(w):                      # (cin, cout) -> block-diagonal (W*cin, W*cout)
        return jnp.kron(eye_w, w)

    def tile_row(v):                # (C,) -> (W*C,) with index w*C + c
        return jnp.tile(v, W)

    out = {}
    # [branch1 | a_head] fused 1x1 matmul (bf16 operands for a single MXU pass)
    w_head = p["w_head"] * s[1][None, :]
    if has_proj:
        w_proj = p["w_proj"] * s[0][None, :]
        w_ph = jnp.concatenate([bd(w_proj), bd(w_head)], axis=1)
    else:
        w_ph = bd(w_head)
    out["w_ph"] = w_ph.astype(jnp.bfloat16)

    # conv_c . c_bn . conv_d . d_bn folded into one matrix + bias
    w_c = p["w_c"] * p["c_scale"][0][None, :]
    w_d = p["w_d"] * s[8][None, :]
    out["w_cd"] = bd(w_c @ w_d).astype(jnp.bfloat16)
    bias_cd = p["c_bias"][0] @ w_d + b[8]

    rows = []
    # 9 bias rows: [short, head, a, a_small, a_medium, b, b_small, b_medium, cd]
    rows.append(tile_row(b[0]) if has_proj else jnp.zeros((W * C,), jnp.float32))
    rows.append(tile_row(b[1]))
    for i in range(2, 8):
        rows.append(tile_row(b[i]))
    rows.append(tile_row(bias_cd))

    kts = []
    for name, i in (("w_a", 2), ("w_as", 3), ("w_am", 4)):      # temporal taps
        wk = p[name] * s[i][None, :]
        kts.append(wk.shape[0])
        for k in range(wk.shape[0]):
            rows.append(tile_row(wk[k]))

    kfs = []
    wpos = jnp.arange(W)
    for name, i in (("w_b", 5), ("w_bs", 6), ("w_bm", 7)):      # frequency taps (masked)
        wk = p[name] * s[i][None, :]
        K = wk.shape[0]
        pw = K // 2
        kfs.append(K)
        for k in range(K):
            d = k - pw
            valid = ((wpos + d >= 0) & (wpos + d < W)).astype(jnp.float32)   # (W,)
            rows.append((valid[:, None] * wk[k][None, :]).reshape(-1))        # (W*C,)

    out["rows"] = jnp.stack(rows).astype(jnp.float32)
    out["kts"] = tuple(kts)
    out["kfs"] = tuple(kfs)
    out["ph"] = max(kts) // 2
    return out


def run_stage_pathway(x, blocks):
    """x: (N, H, W, Cin) f32 NHWC (stage stride already applied).
    blocks: list of (params, has_proj). Returns lane-dense (N, H, W*Cout) f32."""
    N, H, W, Cin = x.shape
    C = blocks[0][0]["bns_bias"].shape[1]
    WC = W * C

    prepped = [prep_block_params(p, hp, W) for p, hp in blocks]
    PH = max(pp["ph"] for pp in prepped)

    w_ph_args = [pp["w_ph"] for pp in prepped]
    w_cd_all = jnp.concatenate([pp["w_cd"] for pp in prepped], axis=0)   # (nb*WC, WC) bf16
    rows_list = [pp["rows"] for pp in prepped]
    row_off, off = [], 0
    for r in rows_list:
        row_off.append(off)
        off += r.shape[0]
    rows_all = jnp.concatenate(rows_list, axis=0)                        # (rows, WC) f32

    block_meta = tuple(
        (blocks[i][1], row_off[i], i * WC, prepped[i]["kts"], prepped[i]["kfs"])
        for i in range(len(blocks)))

    args = [x.reshape(N, H, W * Cin)] + w_ph_args + [w_cd_all, rows_all]
    in_specs = [pl.BlockSpec((1, H, W * Cin), lambda n: (n, 0, 0))]
    for a in args[1:]:
        in_specs.append(pl.BlockSpec(a.shape, lambda n, _nd=a.ndim: (0,) * _nd))

    return pl.pallas_call(
        functools.partial(stage_kernel, nb=len(blocks), block_meta=block_meta,
                          H=H, W=W, C=C, PH=PH),
        out_shape=jax.ShapeDtypeStruct((N, H, WC), jnp.float32),
        grid=(N,),
        in_specs=in_specs,
        out_specs=pl.BlockSpec((1, H, WC), lambda n: (n, 0, 0)),
        scratch_shapes=[pltpu.VMEM((H + 2 * PH, WC), jnp.float32)],   # temporal zero-pad
        compiler_params=pltpu.CompilerParams(dimension_semantics=("parallel",)),
    )(*args)


def stage_forward(inputs, stage_blocks):
    """AudioInceptionNeXtStage.forward: list of NCHW tensors -> list of NCHW tensors."""
    outputs = []
    for pathway, x_nchw in enumerate(inputs):
        x = jnp.transpose(x_nchw, (0, 2, 3, 1))                  # NCHW -> NHWC
        blocks = []
        for i, (p, has_proj, stride) in enumerate(stage_blocks[pathway]):
            if stride != (1, 1):
                # Stride of the strided 1x1 convs (branch1 & a_head) == spatial
                # subsampling of the block input; only block 0 of a stage is strided.
                assert i == 0, "only the first block of a stage may be strided"
                x = x[:, ::stride[0], ::stride[1], :]
            blocks.append((p, has_proj))
        N, H, W, _ = x.shape
        C = stage_blocks[pathway][0][0]["bns_bias"].shape[1]
        y = run_stage_pathway(x, blocks)                         # (N, H, W*Cout)
        y = y.reshape(N, H, W, C)
        outputs.append(jnp.transpose(y, (0, 3, 1, 2)))           # NHWC -> NCHW
    return outputs


# ----------------------------- pure-JAX reference (for validation) --------------------

def _ref_block(x, p, has_proj, stride):
    dn = ('NHWC', 'HWIO', 'NHWC')

    def c1x1(t, w, s=(1, 1)):
        return lax.conv_general_dilated(t, w.reshape(1, 1, *w.shape), s, 'VALID',
                                        dimension_numbers=dn, precision=_PREC)

    def dw(t, w, axis):
        K, C = w.shape
        if axis == 1:
            kern = w.reshape(K, 1, 1, C); pad = [(K // 2, K // 2), (0, 0)]
        else:
            kern = w.reshape(1, K, 1, C); pad = [(0, 0), (K // 2, K // 2)]
        return lax.conv_general_dilated(t, kern, (1, 1), pad, dimension_numbers=dn,
                                        feature_group_count=C, precision=_PREC)

    def bn(t, s, b):
        return t * s.reshape(1, 1, 1, -1) + b.reshape(1, 1, 1, -1)

    relu = jax.nn.relu
    bs, bb = p["bns_scale"], p["bns_bias"]
    if has_proj:
        shortcut = bn(c1x1(x, p["w_proj"], stride), bs[0], bb[0])
        head = bn(c1x1(x, p["w_head"], stride), bs[1], bb[1])
    else:
        shortcut = x
        head = bn(c1x1(x, p["w_head"]), bs[1], bb[1])

    def path(wa, ia, wb, ib):
        t = relu(bn(dw(head, wa, 1), bs[ia], bb[ia]))
        return relu(bn(dw(t, wb, 2), bs[ib], bb[ib]))

    x1 = path(p["w_a"], 2, p["w_b"], 5)
    x2 = path(p["w_as"], 3, p["w_bs"], 6)
    x3 = path(p["w_am"], 4, p["w_bm"], 7)
    comb = x1 + x2 + x3
    comb = bn(c1x1(comb, p["w_c"]), p["c_scale"][0], p["c_bias"][0])
    comb = bn(c1x1(comb, p["w_d"]), bs[8], bb[8])
    return relu(shortcut + comb)


def ref_stage(inputs, stage_blocks):
    outputs = []
    for pathway, x_nchw in enumerate(inputs):
        x = jnp.transpose(x_nchw, (0, 2, 3, 1))
        for (p, has_proj, stride) in stage_blocks[pathway]:
            x = _ref_block(x, p, has_proj, stride)
        outputs.append(jnp.transpose(x, (0, 3, 1, 2)))
    return outputs


# ----------------------------- deterministic parameter construction -------------------

def make_block_params(key, cin, cout, cinner, T, F, has_proj):
    ks = iter(jax.random.split(key, 64))

    def w(shape, scale=0.1):
        return jax.random.normal(next(ks), shape, jnp.float32) * scale

    def bn_fold(c, eps=1e-5):
        gamma = 1.0 + 0.1 * jax.random.normal(next(ks), (c,), jnp.float32)
        beta = 0.1 * jax.random.normal(next(ks), (c,), jnp.float32)
        mean = 0.1 * jax.random.normal(next(ks), (c,), jnp.float32)
        var = jnp.abs(1.0 + 0.1 * jax.random.normal(next(ks), (c,), jnp.float32))
        s = gamma * lax.rsqrt(var + eps)
        return s, beta - mean * s

    p = {}
    if has_proj:
        p["w_proj"] = w((cin, cout))            # branch1 1x1
    p["w_head"] = w((cin, cout))                # a_head 1x1
    p["w_a"] = w((T, cout))                     # depthwise Tx1
    p["w_as"] = w((3, cout))                    # depthwise 3x1
    p["w_am"] = w((11, cout))                   # depthwise 11x1
    p["w_b"] = w((F, cout))                     # depthwise 1xF
    p["w_bs"] = w((3, cout))                    # depthwise 1x3
    p["w_bm"] = w((11, cout))                   # depthwise 1x11
    p["w_c"] = w((cout, cinner))                # c 1x1
    p["w_d"] = w((cinner, cout))                # d 1x1
    # folded BN rows: [branch1, head, a, a_small, a_medium, b, b_small, b_medium, d]
    bns = [bn_fold(cout) for _ in range(9)]
    p["bns_scale"] = jnp.stack([s for s, _ in bns])
    p["bns_bias"] = jnp.stack([b for _, b in bns])
    cs, cb = bn_fold(cinner)                    # c_bn
    p["c_scale"] = cs.reshape(1, cinner)
    p["c_bias"] = cb.reshape(1, cinner)
    return p


if __name__ == "__main__":
    # AudioInceptionNeXtStage config (single pathway):
    #   dim_in=[16], dim_out=[32], dim_inner=[16], num_blocks=[2],
    #   temp_kernel_sizes=[[5]], freq_kernel_sizes=[[5]],
    #   num_block_temp_kernel=[2], num_block_freq_kernel=[2], stride=[[2],[2]],
    #   trans_func_name='ms_threeway_dw_bottleneck_transform'
    N, Cin, H, W = 2, 16, 16, 16
    Cout, Cinner = 32, 16
    T, F = 5, 5
    num_blocks = 2
    stage_stride = (2, 2)

    key = jax.random.PRNGKey(0)
    kx, kp = jax.random.split(key)
    x = jax.random.normal(kx, (N, Cin, H, W), jnp.float32)    # PyTorch NCHW input

    block_keys = jax.random.split(kp, num_blocks)
    blocks = []
    for i in range(num_blocks):
        cin_i = Cin if i == 0 else Cout
        stride_i = stage_stride if i == 0 else (1, 1)
        has_proj = (cin_i != Cout) or stride_i != (1, 1)
        params = make_block_params(block_keys[i], cin_i, Cout, Cinner, T, F, has_proj)
        blocks.append((params, has_proj, stride_i))

    outs = stage_forward([x], [blocks])
    outs = [jax.block_until_ready(o) for o in outs]

    refs = ref_stage([x], [blocks])
    for o, r in zip(outs, refs):
        assert o.shape == r.shape, (o.shape, r.shape)
        err = float(jnp.max(jnp.abs(o - r)))
        # bf16 MXU operands (per perf review) vs the f32 HIGHEST reference: observed
        # error is ~1e-2 worst-case at these magnitudes; 3e-2 keeps margin while still
        # catching structural bugs (a wrong tap/mask would be O(0.1)).
        assert err < 3e-2, f"max abs error {err}"
    print("KERNEL_OK")
</pallas_src>

<mosaic_0001>
module attributes {stable_mosaic.version = 11 : i64} {
  func.func @stage_kernel(%arg0: i32, %arg1: memref<1x8x128xf32, #tpu.memory_space<vmem>>, %arg2: memref<128x512xbf16, #tpu.memory_space<vmem>>, %arg3: memref<256x256xbf16, #tpu.memory_space<vmem>>, %arg4: memref<512x256xbf16, #tpu.memory_space<vmem>>, %arg5: memref<94x256xf32, #tpu.memory_space<vmem>>, %arg6: memref<1x8x256xf32, #tpu.memory_space<vmem>>, %arg7: memref<18x256xf32, #tpu.memory_space<vmem>>) attributes {dimension_semantics = [#tpu.dimension_semantics<parallel>], iteration_bounds = array<i64: 2>, scalar_prefetch = 0 : i64, scratch_operands = 1 : i64, tpu.core_type = #tpu.core_type<tc>, window_params = [{transform_indices = @transform_0, window_bounds = array<i64: 1, 8, 128>}, {pipeline_mode = #tpu.pipeline_mode<synchronous>, transform_indices = @transform_1, window_bounds = array<i64: 128, 512>}, {pipeline_mode = #tpu.pipeline_mode<synchronous>, transform_indices = @transform_2, window_bounds = array<i64: 256, 256>}, {pipeline_mode = #tpu.pipeline_mode<synchronous>, transform_indices = @transform_3, window_bounds = array<i64: 512, 256>}, {pipeline_mode = #tpu.pipeline_mode<synchronous>, transform_indices = @transform_4, window_bounds = array<i64: 94, 256>}, {transform_indices = @transform_5, window_bounds = array<i64: 1, 8, 256>}]} {
    %cst = arith.constant 0.000000e+00 : f32
    %0 = vector.broadcast %cst : f32 to vector<5x256xf32>
    %c0 = arith.constant 0 : index
    %c0_0 = arith.constant 0 : index
    %1 = vector.load %arg7[%c0, %c0_0] : memref<18x256xf32, #tpu.memory_space<vmem>>, vector<5x256xf32>
    tpu.vector_store %arg7[%c0, %c0_0], %0 {strides = array<i32>} : memref<18x256xf32, #tpu.memory_space<vmem>>, vector<5x256xf32>,
    %c13 = arith.constant 13 : index
    %c0_1 = arith.constant 0 : index
    %2 = vector.load %arg7[%c13, %c0_1] : memref<18x256xf32, #tpu.memory_space<vmem>>, vector<5x256xf32>
    tpu.vector_store %arg7[%c13, %c0_1], %0 {strides = array<i32>} : memref<18x256xf32, #tpu.memory_space<vmem>>, vector<5x256xf32>,
    %c0_2 = arith.constant 0 : index
    %c0_3 = arith.constant 0 : index
    %c0_4 = arith.constant 0 : index
    %3 = vector.load %arg1[%c0_2, %c0_3, %c0_4] : memref<1x8x128xf32, #tpu.memory_space<vmem>>, vector<1x8x128xf32>
    %4 = vector.shape_cast %3 : vector<1x8x128xf32> to vector<8x128xf32>
    %5 = arith.truncf %4 : vector<8x128xf32> to vector<8x128xbf16>
    %c0_5 = arith.constant 0 : index
    %c0_6 = arith.constant 0 : index
    %6 = vector.load %arg2[%c0_5, %c0_6] : memref<128x512xbf16, #tpu.memory_space<vmem>>, vector<128x512xbf16>
    %cst_7 = arith.constant dense<0.000000e+00> : vector<8x512xf32>
    %7 = tpu.matmul %5, %6, %cst_7 {dimension_numbers = #tpu.dot_dimension_numbers<[1], [0], [0], [1], [0, 0, 1, 1], [], []>} : vector<8x128xbf16>, vector<128x512xbf16>, vector<8x512xf32> -> vector<8x512xf32>
    %8 = vector.extract_strided_slice %7 {offsets = [0, 0], sizes = [8, 256], strides = [1, 1]} : vector<8x512xf32> to vector<8x256xf32>
    %c0_8 = arith.constant 0 : index
    %c0_9 = arith.constant 0 : index
    %9 = vector.load %arg5[%c0_8, %c0_9] : memref<94x256xf32, #tpu.memory_space<vmem>>, vector<1x256xf32>
    %10 = vector.broadcast %9 : vector<1x256xf32> to vector<8x256xf32>
    %11 = arith.addf %8, %10 : vector<8x256xf32>
    %12 = vector.extract_strided_slice %7 {offsets = [0, 256], sizes = [8, 256], strides = [1, 1]} : vector<8x512xf32> to vector<8x256xf32>
    %c1 = arith.constant 1 : index
    %c0_10 = arith.constant 0 : index
    %13 = vector.load %arg5[%c1, %c0_10] : memref<94x256xf32, #tpu.memory_space<vmem>>, vector<1x256xf32>
    %14 = vector.broadcast %13 : vector<1x256xf32> to vector<8x256xf32>
    %15 = arith.addf %12, %14 : vector<8x256xf32>
    %c5 = arith.constant 5 : index
    %c0_11 = arith.constant 0 : index
    %16 = vector.load %arg7[%c5, %c0_11] : memref<18x256xf32, #tpu.memory_space<vmem>>, vector<8x256xf32>
    tpu.vector_store %arg7[%c5, %c0_11], %15 {strides = array<i32>} : memref<18x256xf32, #tpu.memory_space<vmem>>, vector<8x256xf32>,
    %c0_12 = arith.constant 0 : index
    %c0_13 = arith.constant 0 : index
    %17 = vector.load %arg7[%c0_12, %c0_13] : memref<18x256xf32, #tpu.memory_space<vmem>>, vector<8x256xf32>
    %c17 = arith.constant 17 : index
    %c0_14 = arith.constant 0 : index
    %18 = vector.load %arg5[%c17, %c0_14] : memref<94x256xf32, #tpu.memory_space<vmem>>, vector<1x256xf32>
    %19 = vector.broadcast %18 : vector<1x256xf32> to vector<8x256xf32>
    %20 = arith.mulf %17, %19 : vector<8x256xf32>
    %c1_15 = arith.constant 1 : index
    %c0_16 = arith.constant 0 : index
    %21 = vector.load %arg7[%c1_15, %c0_16] : memref<18x256xf32, #tpu.memory_space<vmem>>, vector<8x256xf32>
    %c18 = arith.constant 18 : index
    %c0_17 = arith.constant 0 : index
    %22 = vector.load %arg5[%c18, %c0_17] : memref<94x256xf32, #tpu.memory_space<vmem>>, vector<1x256xf32>
    %23 = vector.broadcast %22 : vector<1x256xf32> to vector<8x256xf32>
    %24 = arith.mulf %21, %23 : vector<8x256xf32>
    %25 = arith.addf %20, %24 : vector<8x256xf32>
    %c2 = arith.constant 2 : index
    %c0_18 = arith.constant 0 : index
    %26 = vector.load %arg7[%c2, %c0_18] : memref<18x256xf32, #tpu.memory_space<vmem>>, vector<8x256xf32>
    %c19 = arith.constant 19 : index
    %c0_19 = arith.constant 0 : index
    %27 = vector.load %arg5[%c19, %c0_19] : memref<94x256xf32, #tpu.memory_space<vmem>>, vector<1x256xf32>
    %28 = vector.broadcast %27 : vector<1x256xf32> to vector<8x256xf32>
    %29 = arith.mulf %26, %28 : vector<8x256xf32>
    %30 = arith.addf %25, %29 : vector<8x256xf32>
    %c3 = arith.constant 3 : index
    %c0_20 = arith.constant 0 : index
    %31 = vector.load %arg7[%c3, %c0_20] : memref<18x256xf32, #tpu.memory_space<vmem>>, vector<8x256xf32>
    %c9 = arith.constant 9 : index
    %c0_21 = arith.constant 0 : index
    %32 = vector.load %arg5[%c9, %c0_21] : memref<94x256xf32, #tpu.memory_space<vmem>>, vector<1x256xf32>
    %33 = vector.broadcast %32 : vector<1x256xf32> to vector<8x256xf32>
    %34 = arith.mulf %31, %33 : vector<8x256xf32>
    %c20 = arith.constant 20 : index
    %c0_22 = arith.constant 0 : index
    %35 = vector.load %arg5[%c20, %c0_22] : memref<94x256xf32, #tpu.memory_space<vmem>>, vector<1x256xf32>
    %36 = vector.broadcast %35 : vector<1x256xf32> to vector<8x256xf32>
    %37 = arith.mulf %31, %36 : vector<8x256xf32>
    %38 = arith.addf %30, %37 : vector<8x256xf32>
    %c4 = arith.constant 4 : index
    %c0_23 = arith.constant 0 : index
    %39 = vector.load %arg7[%c4, %c0_23] : memref<18x256xf32, #tpu.memory_space<vmem>>, vector<8x256xf32>
    %c10 = arith.constant 10 : index
    %c0_24 = arith.constant 0 : index
    %40 = vector.load %arg5[%c10, %c0_24] : memref<94x256xf32, #tpu.memory_space<vmem>>, vector<1x256xf32>
    %41 = vector.broadcast %40 : vector<1x256xf32> to vector<8x256xf32>
    %42 = arith.mulf %39, %41 : vector<8x256xf32>
    %43 = arith.addf %34, %42 : vector<8x256xf32>
    %c14 = arith.constant 14 : index
    %c0_25 = arith.constant 0 : index
    %44 = vector.load %arg5[%c14, %c0_25] : memref<94x256xf32, #tpu.memory_space<vmem>>, vector<1x256xf32>
    %45 = vector.broadcast %44 : vector<1x256xf32> to vector<8x256xf32>
    %46 = arith.mulf %39, %45 : vector<8x256xf32>
    %c21 = arith.constant 21 : index
    %c0_26 = arith.constant 0 : index
    %47 = vector.load %arg5[%c21, %c0_26] : memref<94x256xf32, #tpu.memory_space<vmem>>, vector<1x256xf32>
    %48 = vector.broadcast %47 : vector<1x256xf32> to vector<8x256xf32>
    %49 = arith.mulf %39, %48 : vector<8x256xf32>
    %50 = arith.addf %38, %49 : vector<8x256xf32>
    %c5_27 = arith.constant 5 : index
    %c0_28 = arith.constant 0 : index
    %51 = vector.load %arg7[%c5_27, %c0_28] : memref<18x256xf32, #tpu.memory_space<vmem>>, vector<8x256xf32>
    %c11 = arith.constant 11 : index
    %c0_29 = arith.constant 0 : index
    %52 = vector.load %arg5[%c11, %c0_29] : memref<94x256xf32, #tpu.memory_space<vmem>>, vector<1x256xf32>
    %53 = vector.broadcast %52 : vector<1x256xf32> to vector<8x256xf32>
    %54 = arith.mulf %51, %53 : vector<8x256xf32>
    %55 = arith.addf %43, %54 : vector<8x256xf32>
    %c15 = arith.constant 15 : index
    %c0_30 = arith.constant 0 : index
    %56 = vector.load %arg5[%c15, %c0_30] : memref<94x256xf32, #tpu.memory_space<vmem>>, vector<1x256xf32>
    %57 = vector.broadcast %56 : vector<1x256xf32> to vector<8x256xf32>
    %58 = arith.mulf %51, %57 : vector<8x256xf32>
    %59 = arith.addf %46, %58 : vector<8x256xf32>
    %c22 = arith.constant 22 : index
    %c0_31 = arith.constant 0 : index
    %60 = vector.load %arg5[%c22, %c0_31] : memref<94x256xf32, #tpu.memory_space<vmem>>, vector<1x256xf32>
    %61 = vector.broadcast %60 : vector<1x256xf32> to vector<8x256xf32>
    %62 = arith.mulf %51, %61 : vector<8x256xf32>
    %63 = arith.addf %50, %62 : vector<8x256xf32>
    %c6 = arith.constant 6 : index
    %c0_32 = arith.constant 0 : index
    %64 = vector.load %arg7[%c6, %c0_32] : memref<18x256xf32, #tpu.memory_space<vmem>>, vector<8x256xf32>
    %c12 = arith.constant 12 : index
    %c0_33 = arith.constant 0 : index
    %65 = vector.load %arg5[%c12, %c0_33] : memref<94x256xf32, #tpu.memory_space<vmem>>, vector<1x256xf32>
    %66 = vector.broadcast %65 : vector<1x256xf32> to vector<8x256xf32>
    %67 = arith.mulf %64, %66 : vector<8x256xf32>
    %68 = arith.addf %55, %67 : vector<8x256xf32>
    %c16 = arith.constant 16 : index
    %c0_34 = arith.constant 0 : index
    %69 = vector.load %arg5[%c16, %c0_34] : memref<94x256xf32, #tpu.memory_space<vmem>>, vector<1x256xf32>
    %70 = vector.broadcast %69 : vector<1x256xf32> to vector<8x256xf32>
    %71 = arith.mulf %64, %70 : vector<8x256xf32>
    %72 = arith.addf %59, %71 : vector<8x256xf32>
    %c23 = arith.constant 23 : index
    %c0_35 = arith.constant 0 : index
    %73 = vector.load %arg5[%c23, %c0_35] : memref<94x256xf32, #tpu.memory_space<vmem>>, vector<1x256xf32>
    %74 = vector.broadcast %73 : vector<1x256xf32> to vector<8x256xf32>
    %75 = arith.mulf %64, %74 : vector<8x256xf32>
    %76 = arith.addf %63, %75 : vector<8x256xf32>
    %c7 = arith.constant 7 : index
    %c0_36 = arith.constant 0 : index
    %77 = vector.load %arg7[%c7, %c0_36] : memref<18x256xf32, #tpu.memory_space<vmem>>, vector<8x256xf32>
    %c13_37 = arith.constant 13 : index
    %c0_38 = arith.constant 0 : index
    %78 = vector.load %arg5[%c13_37, %c0_38] : memref<94x256xf32, #tpu.memory_space<vmem>>, vector<1x256xf32>
    %79 = vector.broadcast %78 : vector<1x256xf32> to vector<8x256xf32>
    %80 = arith.mulf %77, %79 : vector<8x256xf32>
    %81 = arith.addf %68, %80 : vector<8x256xf32>
    %c24 = arith.constant 24 : index
    %c0_39 = arith.constant 0 : index
    %82 = vector.load %arg5[%c24, %c0_39] : memref<94x256xf32, #tpu.memory_space<vmem>>, vector<1x256xf32>
    %83 = vector.broadcast %82 : vector<1x256xf32> to vector<8x256xf32>
    %84 = arith.mulf %77, %83 : vector<8x256xf32>
    %85 = arith.addf %76, %84 : vector<8x256xf32>
    %c8 = arith.constant 8 : index
    %c0_40 = arith.constant 0 : index
    %86 = vector.load %arg7[%c8, %c0_40] : memref<18x256xf32, #tpu.memory_space<vmem>>, vector<8x256xf32>
    %c25 = arith.constant 25 : index
    %c0_41 = arith.constant 0 : index
    %87 = vector.load %arg5[%c25, %c0_41] : memref<94x256xf32, #tpu.memory_space<vmem>>, vector<1x256xf32>
    %88 = vector.broadcast %87 : vector<1x256xf32> to vector<8x256xf32>
    %89 = arith.mulf %86, %88 : vector<8x256xf32>
    %90 = arith.addf %85, %89 : vector<8x256xf32>
    %c9_42 = arith.constant 9 : index
    %c0_43 = arith.constant 0 : index
    %91 = vector.load %arg7[%c9_42, %c0_43] : memref<18x256xf32, #tpu.memory_space<vmem>>, vector<8x256xf32>
    %c26 = arith.constant 26 : index
    %c0_44 = arith.constant 0 : index
    %92 = vector.load %arg5[%c26, %c0_44] : memref<94x256xf32, #tpu.memory_space<vmem>>, vector<1x256xf32>
    %93 = vector.broadcast %92 : vector<1x256xf32> to vector<8x256xf32>
    %94 = arith.mulf %91, %93 : vector<8x256xf32>
    %95 = arith.addf %90, %94 : vector<8x256xf32>
    %c10_45 = arith.constant 10 : index
    %c0_46 = arith.constant 0 : index
    %96 = vector.load %arg7[%c10_45, %c0_46] : memref<18x256xf32, #tpu.memory_space<vmem>>, vector<8x256xf32>
    %c27 = arith.constant 27 : index
    %c0_47 = arith.constant 0 : index
    %97 = vector.load %arg5[%c27, %c0_47] : memref<94x256xf32, #tpu.memory_space<vmem>>, vector<1x256xf32>
    %98 = vector.broadcast %97 : vector<1x256xf32> to vector<8x256xf32>
    %99 = arith.mulf %96, %98 : vector<8x256xf32>
    %100 = arith.addf %95, %99 : vector<8x256xf32>
    %c2_48 = arith.constant 2 : index
    %c0_49 = arith.constant 0 : index
    %101 = vector.load %arg5[%c2_48, %c0_49] : memref<94x256xf32, #tpu.memory_space<vmem>>, vector<1x256xf32>
    %102 = vector.broadcast %101 : vector<1x256xf32> to vector<8x256xf32>
    %103 = arith.addf %81, %102 : vector<8x256xf32>
    %cst_50 = arith.constant 0.000000e+00 : f32
    %104 = vector.broadcast %cst_50 : f32 to vector<8x256xf32>
    %105 = arith.maximumf %103, %104 : vector<8x256xf32>
    %c28 = arith.constant 28 : index
    %c0_51 = arith.constant 0 : index
    %106 = vector.load %arg5[%c28, %c0_51] : memref<94x256xf32, #tpu.memory_space<vmem>>, vector<1x256xf32>
    %c64_i32 = arith.constant 64 : i32
    %107 = tpu.dynamic_rotate %105 by %c64_i32 dim 1 : vector<8x256xf32>, i32 -> vector<8x256xf32>
    %108 = vector.broadcast %106 : vector<1x256xf32> to vector<8x256xf32>
    %109 = arith.mulf %107, %108 : vector<8x256xf32>
    %c29 = arith.constant 29 : index
    %c0_52 = arith.constant 0 : index
    %110 = vector.load %arg5[%c29, %c0_52] : memref<94x256xf32, #tpu.memory_space<vmem>>, vector<1x256xf32>
    %c32_i32 = arith.constant 32 : i32
    %111 = tpu.dynamic_rotate %105 by %c32_i32 dim 1 : vector<8x256xf32>, i32 -> vector<8x256xf32>
    %112 = vector.broadcast %110 : vector<1x256xf32> to vector<8x256xf32>
    %113 = arith.mulf %111, %112 : vector<8x256xf32>
    %114 = arith.addf %109, %113 : vector<8x256xf32>
    %c30 = arith.constant 30 : index
    %c0_53 = arith.constant 0 : index
    %115 = vector.load %arg5[%c30, %c0_53] : memref<94x256xf32, #tpu.memory_space<vmem>>, vector<1x256xf32>
    %116 = vector.broadcast %115 : vector<1x256xf32> to vector<8x256xf32>
    %117 = arith.mulf %105, %116 : vector<8x256xf32>
    %118 = arith.addf %114, %117 : vector<8x256xf32>
    %c31 = arith.constant 31 : index
    %c0_54 = arith.constant 0 : index
    %119 = vector.load %arg5[%c31, %c0_54] : memref<94x256xf32, #tpu.memory_space<vmem>>, vector<1x256xf32>
    %c224_i32 = arith.constant 224 : i32
    %120 = tpu.dynamic_rotate %105 by %c224_i32 dim 1 : vector<8x256xf32>, i32 -> vector<8x256xf32>
    %121 = vector.broadcast %119 : vector<1x256xf32> to vector<8x256xf32>
    %122 = arith.mulf %120, %121 : vector<8x256xf32>
    %123 = arith.addf %118, %122 : vector<8x256xf32>
    %c32 = arith.constant 32 : index
    %c0_55 = arith.constant 0 : index
    %124 = vector.load %arg5[%c32, %c0_55] : memref<94x256xf32, #tpu.memory_space<vmem>>, vector<1x256xf32>
    %c192_i32 = arith.constant 192 : i32
    %125 = tpu.dynamic_rotate %105 by %c192_i32 dim 1 : vector<8x256xf32>, i32 -> vector<8x256xf32>
    %126 = vector.broadcast %124 : vector<1x256xf32> to vector<8x256xf32>
    %127 = arith.mulf %125, %126 : vector<8x256xf32>
    %128 = arith.addf %123, %127 : vector<8x256xf32>
    %c5_56 = arith.constant 5 : index
    %c0_57 = arith.constant 0 : index
    %129 = vector.load %arg5[%c5_56, %c0_57] : memref<94x256xf32, #tpu.memory_space<vmem>>, vector<1x256xf32>
    %130 = vector.broadcast %129 : vector<1x256xf32> to vector<8x256xf32>
    %131 = arith.addf %128, %130 : vector<8x256xf32>
    %cst_58 = arith.constant 0.000000e+00 : f32
    %132 = vector.broadcast %cst_58 : f32 to vector<8x256xf32>
    %133 = arith.maximumf %131, %132 : vector<8x256xf32>
    %c3_59 = arith.constant 3 : index
    %c0_60 = arith.constant 0 : index
    %134 = vector.load %arg5[%c3_59, %c0_60] : memref<94x256xf32, #tpu.memory_space<vmem>>, vector<1x256xf32>
    %135 = vector.broadcast %134 : vector<1x256xf32> to vector<8x256xf32>
    %136 = arith.addf %72, %135 : vector<8x256xf32>
    %cst_61 = arith.constant 0.000000e+00 : f32
    %137 = vector.broadcast %cst_61 : f32 to vector<8x256xf32>
    %138 = arith.maximumf %136, %137 : vector<8x256xf32>
    %c33 = arith.constant 33 : index
    %c0_62 = arith.constant 0 : index
    %139 = vector.load %arg5[%c33, %c0_62] : memref<94x256xf32, #tpu.memory_space<vmem>>, vector<1x256xf32>
    %c32_i32_63 = arith.constant 32 : i32
    %140 = tpu.dynamic_rotate %138 by %c32_i32_63 dim 1 : vector<8x256xf32>, i32 -> vector<8x256xf32>
    %141 = vector.broadcast %139 : vector<1x256xf32> to vector<8x256xf32>
    %142 = arith.mulf %140, %141 : vector<8x256xf32>
    %c34 = arith.constant 34 : index
    %c0_64 = arith.constant 0 : index
    %143 = vector.load %arg5[%c34, %c0_64] : memref<94x256xf32, #tpu.memory_space<vmem>>, vector<1x256xf32>
    %144 = vector.broadcast %143 : vector<1x256xf32> to vector<8x256xf32>
    %145 = arith.mulf %138, %144 : vector<8x256xf32>
    %146 = arith.addf %142, %145 : vector<8x256xf32>
    %c35 = arith.constant 35 : index
    %c0_65 = arith.constant 0 : index
    %147 = vector.load %arg5[%c35, %c0_65] : memref<94x256xf32, #tpu.memory_space<vmem>>, vector<1x256xf32>
    %c224_i32_66 = arith.constant 224 : i32
    %148 = tpu.dynamic_rotate %138 by %c224_i32_66 dim 1 : vector<8x256xf32>, i32 -> vector<8x256xf32>
    %149 = vector.broadcast %147 : vector<1x256xf32> to vector<8x256xf32>
    %150 = arith.mulf %148, %149 : vector<8x256xf32>
    %151 = arith.addf %146, %150 : vector<8x256xf32>
    %c6_67 = arith.constant 6 : index
    %c0_68 = arith.constant 0 : index
    %152 = vector.load %arg5[%c6_67, %c0_68] : memref<94x256xf32, #tpu.memory_space<vmem>>, vector<1x256xf32>
    %153 = vector.broadcast %152 : vector<1x256xf32> to vector<8x256xf32>
    %154 = arith.addf %151, %153 : vector<8x256xf32>
    %cst_69 = arith.constant 0.000000e+00 : f32
    %155 = vector.broadcast %cst_69 : f32 to vector<8x256xf32>
    %156 = arith.maximumf %154, %155 : vector<8x256xf32>
    %157 = arith.addf %133, %156 : vector<8x256xf32>
    %c4_70 = arith.constant 4 : index
    %c0_71 = arith.constant 0 : index
    %158 = vector.load %arg5[%c4_70, %c0_71] : memref<94x256xf32, #tpu.memory_space<vmem>>, vector<1x256xf32>
    %159 = vector.broadcast %158 : vector<1x256xf32> to vector<8x256xf32>
    %160 = arith.addf %100, %159 : vector<8x256xf32>
    %cst_72 = arith.constant 0.000000e+00 : f32
    %161 = vector.broadcast %cst_72 : f32 to vector<8x256xf32>
    %162 = arith.maximumf %160, %161 : vector<8x256xf32>
    %c36 = arith.constant 36 : index
    %c0_73 = arith.constant 0 : index
    %163 = vector.load %arg5[%c36, %c0_73] : memref<94x256xf32, #tpu.memory_space<vmem>>, vector<1x256xf32>
    %c160_i32 = arith.constant 160 : i32
    %164 = tpu.dynamic_rotate %162 by %c160_i32 dim 1 : vector<8x256xf32>, i32 -> vector<8x256xf32>
    %165 = vector.broadcast %163 : vector<1x256xf32> to vector<8x256xf32>
    %166 = arith.mulf %164, %165 : vector<8x256xf32>
    %c37 = arith.constant 37 : index
    %c0_74 = arith.constant 0 : index
    %167 = vector.load %arg5[%c37, %c0_74] : memref<94x256xf32, #tpu.memory_space<vmem>>, vector<1x256xf32>
    %c128_i32 = arith.constant 128 : i32
    %168 = tpu.dynamic_rotate %162 by %c128_i32 dim 1 : vector<8x256xf32>, i32 -> vector<8x256xf32>
    %169 = vector.broadcast %167 : vector<1x256xf32> to vector<8x256xf32>
    %170 = arith.mulf %168, %169 : vector<8x256xf32>
    %171 = arith.addf %166, %170 : vector<8x256xf32>
    %c38 = arith.constant 38 : index
    %c0_75 = arith.constant 0 : index
    %172 = vector.load %arg5[%c38, %c0_75] : memref<94x256xf32, #tpu.memory_space<vmem>>, vector<1x256xf32>
    %c96_i32 = arith.constant 96 : i32
    %173 = tpu.dynamic_rotate %162 by %c96_i32 dim 1 : vector<8x256xf32>, i32 -> vector<8x256xf32>
    %174 = vector.broadcast %172 : vector<1x256xf32> to vector<8x256xf32>
    %175 = arith.mulf %173, %174 : vector<8x256xf32>
    %176 = arith.addf %171, %175 : vector<8x256xf32>
    %c39 = arith.constant 39 : index
    %c0_76 = arith.constant 0 : index
    %177 = vector.load %arg5[%c39, %c0_76] : memref<94x256xf32, #tpu.memory_space<vmem>>, vector<1x256xf32>
    %c64_i32_77 = arith.constant 64 : i32
    %178 = tpu.dynamic_rotate %162 by %c64_i32_77 dim 1 : vector<8x256xf32>, i32 -> vector<8x256xf32>
    %179 = vector.broadcast %177 : vector<1x256xf32> to vector<8x256xf32>
    %180 = arith.mulf %178, %179 : vector<8x256xf32>
    %181 = arith.addf %176, %180 : vector<8x256xf32>
    %c40 = arith.constant 40 : index
    %c0_78 = arith.constant 0 : index
    %182 = vector.load %arg5[%c40, %c0_78] : memref<94x256xf32, #tpu.memory_space<vmem>>, vector<1x256xf32>
    %c32_i32_79 = arith.constant 32 : i32
    %183 = tpu.dynamic_rotate %162 by %c32_i32_79 dim 1 : vector<8x256xf32>, i32 -> vector<8x256xf32>
    %184 = vector.broadcast %182 : vector<1x256xf32> to vector<8x256xf32>
    %185 = arith.mulf %183, %184 : vector<8x256xf32>
    %186 = arith.addf %181, %185 : vector<8x256xf32>
    %c41 = arith.constant 41 : index
    %c0_80 = arith.constant 0 : index
    %187 = vector.load %arg5[%c41, %c0_80] : memref<94x256xf32, #tpu.memory_space<vmem>>, vector<1x256xf32>
    %188 = vector.broadcast %187 : vector<1x256xf32> to vector<8x256xf32>
    %189 = arith.mulf %162, %188 : vector<8x256xf32>
    %190 = arith.addf %186, %189 : vector<8x256xf32>
    %c42 = arith.constant 42 : index
    %c0_81 = arith.constant 0 : index
    %191 = vector.load %arg5[%c42, %c0_81] : memref<94x256xf32, #tpu.memory_space<vmem>>, vector<1x256xf32>
    %c224_i32_82 = arith.constant 224 : i32
    %192 = tpu.dynamic_rotate %162 by %c224_i32_82 dim 1 : vector<8x256xf32>, i32 -> vector<8x256xf32>
    %193 = vector.broadcast %191 : vector<1x256xf32> to vector<8x256xf32>
    %194 = arith.mulf %192, %193 : vector<8x256xf32>
    %195 = arith.addf %190, %194 : vector<8x256xf32>
    %c43 = arith.constant 43 : index
    %c0_83 = arith.constant 0 : index
    %196 = vector.load %arg5[%c43, %c0_83] : memref<94x256xf32, #tpu.memory_space<vmem>>, vector<1x256xf32>
    %c192_i32_84 = arith.constant 192 : i32
    %197 = tpu.dynamic_rotate %162 by %c192_i32_84 dim 1 : vector<8x256xf32>, i32 -> vector<8x256xf32>
    %198 = vector.broadcast %196 : vector<1x256xf32> to vector<8x256xf32>
    %199 = arith.mulf %197, %198 : vector<8x256xf32>
    %200 = arith.addf %195, %199 : vector<8x256xf32>
    %c44 = arith.constant 44 : index
    %c0_85 = arith.constant 0 : index
    %201 = vector.load %arg5[%c44, %c0_85] : memref<94x256xf32, #tpu.memory_space<vmem>>, vector<1x256xf32>
    %c160_i32_86 = arith.constant 160 : i32
    %202 = tpu.dynamic_rotate %162 by %c160_i32_86 dim 1 : vector<8x256xf32>, i32 -> vector<8x256xf32>
    %203 = vector.broadcast %201 : vector<1x256xf32> to vector<8x256xf32>
    %204 = arith.mulf %202, %203 : vector<8x256xf32>
    %205 = arith.addf %200, %204 : vector<8x256xf32>
    %c45 = arith.constant 45 : index
    %c0_87 = arith.constant 0 : index
    %206 = vector.load %arg5[%c45, %c0_87] : memref<94x256xf32, #tpu.memory_space<vmem>>, vector<1x256xf32>
    %c128_i32_88 = arith.constant 128 : i32
    %207 = tpu.dynamic_rotate %162 by %c128_i32_88 dim 1 : vector<8x256xf32>, i32 -> vector<8x256xf32>
    %208 = vector.broadcast %206 : vector<1x256xf32> to vector<8x256xf32>
    %209 = arith.mulf %207, %208 : vector<8x256xf32>
    %210 = arith.addf %205, %209 : vector<8x256xf32>
    %c46 = arith.constant 46 : index
    %c0_89 = arith.constant 0 : index
    %211 = vector.load %arg5[%c46, %c0_89] : memref<94x256xf32, #tpu.memory_space<vmem>>, vector<1x256xf32>
    %c96_i32_90 = arith.constant 96 : i32
    %212 = tpu.dynamic_rotate %162 by %c96_i32_90 dim 1 : vector<8x256xf32>, i32 -> vector<8x256xf32>
    %213 = vector.broadcast %211 : vector<1x256xf32> to vector<8x256xf32>
    %214 = arith.mulf %212, %213 : vector<8x256xf32>
    %215 = arith.addf %210, %214 : vector<8x256xf32>
    %c7_91 = arith.constant 7 : index
    %c0_92 = arith.constant 0 : index
    %216 = vector.load %arg5[%c7_91, %c0_92] : memref<94x256xf32, #tpu.memory_space<vmem>>, vector<1x256xf32>
    %217 = vector.broadcast %216 : vector<1x256xf32> to vector<8x256xf32>
    %218 = arith.addf %215, %217 : vector<8x256xf32>
    %cst_93 = arith.constant 0.000000e+00 : f32
    %219 = vector.broadcast %cst_93 : f32 to vector<8x256xf32>
    %220 = arith.maximumf %218, %219 : vector<8x256xf32>
    %221 = arith.addf %157, %220 : vector<8x256xf32>
    %222 = arith.truncf %221 : vector<8x256xf32> to vector<8x256xbf16>
    %c0_94 = arith.constant 0 : index
    %c0_95 = arith.constant 0 : index
    %223 = vector.load %arg4[%c0_94, %c0_95] : memref<512x256xbf16, #tpu.memory_space<vmem>>, vector<256x256xbf16>
    %cst_96 = arith.constant dense<0.000000e+00> : vector<8x256xf32>
    %224 = tpu.matmul %222, %223, %cst_96 {dimension_numbers = #tpu.dot_dimension_numbers<[1], [0], [0], [1], [0, 0, 1, 1], [], []>} : vector<8x256xbf16>, vector<256x256xbf16>, vector<8x256xf32> -> vector<8x256xf32>
    %c8_97 = arith.constant 8 : index
    %c0_98 = arith.constant 0 : index
    %225 = vector.load %arg5[%c8_97, %c0_98] : memref<94x256xf32, #tpu.memory_space<vmem>>, vector<1x256xf32>
    %226 = vector.broadcast %225 : vector<1x256xf32> to vector<8x256xf32>
    %227 = arith.addf %224, %226 : vector<8x256xf32>
    %228 = arith.addf %11, %227 : vector<8x256xf32>
    %cst_99 = arith.constant 0.000000e+00 : f32
    %229 = vector.broadcast %cst_99 : f32 to vector<8x256xf32>
    %230 = arith.maximumf %228, %229 : vector<8x256xf32>
    %231 = arith.truncf %230 : vector<8x256xf32> to vector<8x256xbf16>
    %c0_100 = arith.constant 0 : index
    %c0_101 = arith.constant 0 : index
    %232 = vector.load %arg3[%c0_100, %c0_101] : memref<256x256xbf16, #tpu.memory_space<vmem>>, vector<256x256xbf16>
    %cst_102 = arith.constant dense<0.000000e+00> : vector<8x256xf32>
    %233 = tpu.matmul %231, %232, %cst_102 {dimension_numbers = #tpu.dot_dimension_numbers<[1], [0], [0], [1], [0, 0, 1, 1], [], []>} : vector<8x256xbf16>, vector<256x256xbf16>, vector<8x256xf32> -> vector<8x256xf32>
    %c48 = arith.constant 48 : index
    %c0_103 = arith.constant 0 : index
    %234 = vector.load %arg5[%c48, %c0_103] : memref<94x256xf32, #tpu.memory_space<vmem>>, vector<1x256xf32>
    %235 = vector.broadcast %234 : vector<1x256xf32> to vector<8x256xf32>
    %236 = arith.addf %233, %235 : vector<8x256xf32>
    %c5_104 = arith.constant 5 : index
    %c0_105 = arith.constant 0 : index
    %237 = vector.load %arg7[%c5_104, %c0_105] : memref<18x256xf32, #tpu.memory_space<vmem>>, vector<8x256xf32>
    tpu.vector_store %arg7[%c5_104, %c0_105], %236 {strides = array<i32>} : memref<18x256xf32, #tpu.memory_space<vmem>>, vector<8x256xf32>,
    %c0_106 = arith.constant 0 : index
    %c0_107 = arith.constant 0 : index
    %238 = vector.load %arg7[%c0_106, %c0_107] : memref<18x256xf32, #tpu.memory_space<vmem>>, vector<8x256xf32>
    %c64 = arith.constant 64 : index
    %c0_108 = arith.constant 0 : index
    %239 = vector.load %arg5[%c64, %c0_108] : memref<94x256xf32, #tpu.memory_space<vmem>>, vector<1x256xf32>
    %240 = vector.broadcast %239 : vector<1x256xf32> to vector<8x256xf32>
    %241 = arith.mulf %238, %240 : vector<8x256xf32>
    %c1_109 = arith.constant 1 : index
    %c0_110 = arith.constant 0 : index
    %242 = vector.load %arg7[%c1_109, %c0_110] : memref<18x256xf32, #tpu.memory_space<vmem>>, vector<8x256xf32>
    %c65 = arith.constant 65 : index
    %c0_111 = arith.constant 0 : index
    %243 = vector.load %arg5[%c65, %c0_111] : memref<94x256xf32, #tpu.memory_space<vmem>>, vector<1x256xf32>
    %244 = vector.broadcast %243 : vector<1x256xf32> to vector<8x256xf32>
    %245 = arith.mulf %242, %244 : vector<8x256xf32>
    %246 = arith.addf %241, %245 : vector<8x256xf32>
    %c2_112 = arith.constant 2 : index
    %c0_113 = arith.constant 0 : index
    %247 = vector.load %arg7[%c2_112, %c0_113] : memref<18x256xf32, #tpu.memory_space<vmem>>, vector<8x256xf32>
    %c66 = arith.constant 66 : index
    %c0_114 = arith.constant 0 : index
    %248 = vector.load %arg5[%c66, %c0_114] : memref<94x256xf32, #tpu.memory_space<vmem>>, vector<1x256xf32>
    %249 = vector.broadcast %248 : vector<1x256xf32> to vector<8x256xf32>
    %250 = arith.mulf %247, %249 : vector<8x256xf32>
    %251 = arith.addf %246, %250 : vector<8x256xf32>
    %c3_115 = arith.constant 3 : index
    %c0_116 = arith.constant 0 : index
    %252 = vector.load %arg7[%c3_115, %c0_116] : memref<18x256xf32, #tpu.memory_space<vmem>>, vector<8x256xf32>
    %c56 = arith.constant 56 : index
    %c0_117 = arith.constant 0 : index
    %253 = vector.load %arg5[%c56, %c0_117] : memref<94x256xf32, #tpu.memory_space<vmem>>, vector<1x256xf32>
    %254 = vector.broadcast %253 : vector<1x256xf32> to vector<8x256xf32>
    %255 = arith.mulf %252, %254 : vector<8x256xf32>
    %c67 = arith.constant 67 : index
    %c0_118 = arith.constant 0 : index
    %256 = vector.load %arg5[%c67, %c0_118] : memref<94x256xf32, #tpu.memory_space<vmem>>, vector<1x256xf32>
    %257 = vector.broadcast %256 : vector<1x256xf32> to vector<8x256xf32>
    %258 = arith.mulf %252, %257 : vector<8x256xf32>
    %259 = arith.addf %251, %258 : vector<8x256xf32>
    %c4_119 = arith.constant 4 : index
    %c0_120 = arith.constant 0 : index
    %260 = vector.load %arg7[%c4_119, %c0_120] : memref<18x256xf32, #tpu.memory_space<vmem>>, vector<8x256xf32>
    %c57 = arith.constant 57 : index
    %c0_121 = arith.constant 0 : index
    %261 = vector.load %arg5[%c57, %c0_121] : memref<94x256xf32, #tpu.memory_space<vmem>>, vector<1x256xf32>
    %262 = vector.broadcast %261 : vector<1x256xf32> to vector<8x256xf32>
    %263 = arith.mulf %260, %262 : vector<8x256xf32>
    %264 = arith.addf %255, %263 : vector<8x256xf32>
    %c61 = arith.constant 61 : index
    %c0_122 = arith.constant 0 : index
    %265 = vector.load %arg5[%c61, %c0_122] : memref<94x256xf32, #tpu.memory_space<vmem>>, vector<1x256xf32>
    %266 = vector.broadcast %265 : vector<1x256xf32> to vector<8x256xf32>
    %267 = arith.mulf %260, %266 : vector<8x256xf32>
    %c68 = arith.constant 68 : index
    %c0_123 = arith.constant 0 : index
    %268 = vector.load %arg5[%c68, %c0_123] : memref<94x256xf32, #tpu.memory_space<vmem>>, vector<1x256xf32>
    %269 = vector.broadcast %268 : vector<1x256xf32> to vector<8x256xf32>
    %270 = arith.mulf %260, %269 : vector<8x256xf32>
    %271 = arith.addf %259, %270 : vector<8x256xf32>
    %c5_124 = arith.constant 5 : index
    %c0_125 = arith.constant 0 : index
    %272 = vector.load %arg7[%c5_124, %c0_125] : memref<18x256xf32, #tpu.memory_space<vmem>>, vector<8x256xf32>
    %c58 = arith.constant 58 : index
    %c0_126 = arith.constant 0 : index
    %273 = vector.load %arg5[%c58, %c0_126] : memref<94x256xf32, #tpu.memory_space<vmem>>, vector<1x256xf32>
    %274 = vector.broadcast %273 : vector<1x256xf32> to vector<8x256xf32>
    %275 = arith.mulf %272, %274 : vector<8x256xf32>
    %276 = arith.addf %264, %275 : vector<8x256xf32>
    %c62 = arith.constant 62 : index
    %c0_127 = arith.constant 0 : index
    %277 = vector.load %arg5[%c62, %c0_127] : memref<94x256xf32, #tpu.memory_space<vmem>>, vector<1x256xf32>
    %278 = vector.broadcast %277 : vector<1x256xf32> to vector<8x256xf32>
    %279 = arith.mulf %272, %278 : vector<8x256xf32>
    %280 = arith.addf %267, %279 : vector<8x256xf32>
    %c69 = arith.constant 69 : index
    %c0_128 = arith.constant 0 : index
    %281 = vector.load %arg5[%c69, %c0_128] : memref<94x256xf32, #tpu.memory_space<vmem>>, vector<1x256xf32>
    %282 = vector.broadcast %281 : vector<1x256xf32> to vector<8x256xf32>
    %283 = arith.mulf %272, %282 : vector<8x256xf32>
    %284 = arith.addf %271, %283 : vector<8x256xf32>
    %c6_129 = arith.constant 6 : index
    %c0_130 = arith.constant 0 : index
    %285 = vector.load %arg7[%c6_129, %c0_130] : memref<18x256xf32, #tpu.memory_space<vmem>>, vector<8x256xf32>
    %c59 = arith.constant 59 : index
    %c0_131 = arith.constant 0 : index
    %286 = vector.load %arg5[%c59, %c0_131] : memref<94x256xf32, #tpu.memory_space<vmem>>, vector<1x256xf32>
    %287 = vector.broadcast %286 : vector<1x256xf32> to vector<8x256xf32>
    %288 = arith.mulf %285, %287 : vector<8x256xf32>
    %289 = arith.addf %276, %288 : vector<8x256xf32>
    %c63 = arith.constant 63 : index
    %c0_132 = arith.constant 0 : index
    %290 = vector.load %arg5[%c63, %c0_132] : memref<94x256xf32, #tpu.memory_space<vmem>>, vector<1x256xf32>
    %291 = vector.broadcast %290 : vector<1x256xf32> to vector<8x256xf32>
    %292 = arith.mulf %285, %291 : vector<8x256xf32>
    %293 = arith.addf %280, %292 : vector<8x256xf32>
    %c70 = arith.constant 70 : index
    %c0_133 = arith.constant 0 : index
    %294 = vector.load %arg5[%c70, %c0_133] : memref<94x256xf32, #tpu.memory_space<vmem>>, vector<1x256xf32>
    %295 = vector.broadcast %294 : vector<1x256xf32> to vector<8x256xf32>
    %296 = arith.mulf %285, %295 : vector<8x256xf32>
    %297 = arith.addf %284, %296 : vector<8x256xf32>
    %c7_134 = arith.constant 7 : index
    %c0_135 = arith.constant 0 : index
    %298 = vector.load %arg7[%c7_134, %c0_135] : memref<18x256xf32, #tpu.memory_space<vmem>>, vector<8x256xf32>
    %c60 = arith.constant 60 : index
    %c0_136 = arith.constant 0 : index
    %299 = vector.load %arg5[%c60, %c0_136] : memref<94x256xf32, #tpu.memory_space<vmem>>, vector<1x256xf32>
    %300 = vector.broadcast %299 : vector<1x256xf32> to vector<8x256xf32>
    %301 = arith.mulf %298, %300 : vector<8x256xf32>
    %302 = arith.addf %289, %301 : vector<8x256xf32>
    %c71 = arith.constant 71 : index
    %c0_137 = arith.constant 0 : index
    %303 = vector.load %arg5[%c71, %c0_137] : memref<94x256xf32, #tpu.memory_space<vmem>>, vector<1x256xf32>
    %304 = vector.broadcast %303 : vector<1x256xf32> to vector<8x256xf32>
    %305 = arith.mulf %298, %304 : vector<8x256xf32>
    %306 = arith.addf %297, %305 : vector<8x256xf32>
    %c8_138 = arith.constant 8 : index
    %c0_139 = arith.constant 0 : index
    %307 = vector.load %arg7[%c8_138, %c0_139] : memref<18x256xf32, #tpu.memory_space<vmem>>, vector<8x256xf32>
    %c72 = arith.constant 72 : index
    %c0_140 = arith.constant 0 : index
    %308 = vector.load %arg5[%c72, %c0_140] : memref<94x256xf32, #tpu.memory_space<vmem>>, vector<1x256xf32>
    %309 = vector.broadcast %308 : vector<1x256xf32> to vector<8x256xf32>
    %310 = arith.mulf %307, %309 : vector<8x256xf32>
    %311 = arith.addf %306, %310 : vector<8x256xf32>
    %c9_141 = arith.constant 9 : index
    %c0_142 = arith.constant 0 : index
    %312 = vector.load %arg7[%c9_141, %c0_142] : memref<18x256xf32, #tpu.memory_space<vmem>>, vector<8x256xf32>
    %c73 = arith.constant 73 : index
    %c0_143 = arith.constant 0 : index
    %313 = vector.load %arg5[%c73, %c0_143] : memref<94x256xf32, #tpu.memory_space<vmem>>, vector<1x256xf32>
    %314 = vector.broadcast %313 : vector<1x256xf32> to vector<8x256xf32>
    %315 = arith.mulf %312, %314 : vector<8x256xf32>
    %316 = arith.addf %311, %315 : vector<8x256xf32>
    %c10_144 = arith.constant 10 : index
    %c0_145 = arith.constant 0 : index
    %317 = vector.load %arg7[%c10_144, %c0_145] : memref<18x256xf32, #tpu.memory_space<vmem>>, vector<8x256xf32>
    %c74 = arith.constant 74 : index
    %c0_146 = arith.constant 0 : index
    %318 = vector.load %arg5[%c74, %c0_146] : memref<94x256xf32, #tpu.memory_space<vmem>>, vector<1x256xf32>
    %319 = vector.broadcast %318 : vector<1x256xf32> to vector<8x256xf32>
    %320 = arith.mulf %317, %319 : vector<8x256xf32>
    %321 = arith.addf %316, %320 : vector<8x256xf32>
    %c49 = arith.constant 49 : index
    %c0_147 = arith.constant 0 : index
    %322 = vector.load %arg5[%c49, %c0_147] : memref<94x256xf32, #tpu.memory_space<vmem>>, vector<1x256xf32>
    %323 = vector.broadcast %322 : vector<1x256xf32> to vector<8x256xf32>
    %324 = arith.addf %302, %323 : vector<8x256xf32>
    %cst_148 = arith.constant 0.000000e+00 : f32
    %325 = vector.broadcast %cst_148 : f32 to vector<8x256xf32>
    %326 = arith.maximumf %324, %325 : vector<8x256xf32>
    %c75 = arith.constant 75 : index
    %c0_149 = arith.constant 0 : index
    %327 = vector.load %arg5[%c75, %c0_149] : memref<94x256xf32, #tpu.memory_space<vmem>>, vector<1x256xf32>
    %c64_i32_150 = arith.constant 64 : i32
    %328 = tpu.dynamic_rotate %326 by %c64_i32_150 dim 1 : vector<8x256xf32>, i32 -> vector<8x256xf32>
    %329 = vector.broadcast %327 : vector<1x256xf32> to vector<8x256xf32>
    %330 = arith.mulf %328, %329 : vector<8x256xf32>
    %c76 = arith.constant 76 : index
    %c0_151 = arith.constant 0 : index
    %331 = vector.load %arg5[%c76, %c0_151] : memref<94x256xf32, #tpu.memory_space<vmem>>, vector<1x256xf32>
    %c32_i32_152 = arith.constant 32 : i32
    %332 = tpu.dynamic_rotate %326 by %c32_i32_152 dim 1 : vector<8x256xf32>, i32 -> vector<8x256xf32>
    %333 = vector.broadcast %331 : vector<1x256xf32> to vector<8x256xf32>
    %334 = arith.mulf %332, %333 : vector<8x256xf32>
    %335 = arith.addf %330, %334 : vector<8x256xf32>
    %c77 = arith.constant 77 : index
    %c0_153 = arith.constant 0 : index
    %336 = vector.load %arg5[%c77, %c0_153] : memref<94x256xf32, #tpu.memory_space<vmem>>, vector<1x256xf32>
    %337 = vector.broadcast %336 : vector<1x256xf32> to vector<8x256xf32>
    %338 = arith.mulf %326, %337 : vector<8x256xf32>
    %339 = arith.addf %335, %338 : vector<8x256xf32>
    %c78 = arith.constant 78 : index
    %c0_154 = arith.constant 0 : index
    %340 = vector.load %arg5[%c78, %c0_154] : memref<94x256xf32, #tpu.memory_space<vmem>>, vector<1x256xf32>
    %c224_i32_155 = arith.constant 224 : i32
    %341 = tpu.dynamic_rotate %326 by %c224_i32_155 dim 1 : vector<8x256xf32>, i32 -> vector<8x256xf32>
    %342 = vector.broadcast %340 : vector<1x256xf32> to vector<8x256xf32>
    %343 = arith.mulf %341, %342 : vector<8x256xf32>
    %344 = arith.addf %339, %343 : vector<8x256xf32>
    %c79 = arith.constant 79 : index
    %c0_156 = arith.constant 0 : index
    %345 = vector.load %arg5[%c79, %c0_156] : memref<94x256xf32, #tpu.memory_space<vmem>>, vector<1x256xf32>
    %c192_i32_157 = arith.constant 192 : i32
    %346 = tpu.dynamic_rotate %326 by %c192_i32_157 dim 1 : vector<8x256xf32>, i32 -> vector<8x256xf32>
    %347 = vector.broadcast %345 : vector<1x256xf32> to vector<8x256xf32>
    %348 = arith.mulf %346, %347 : vector<8x256xf32>
    %349 = arith.addf %344, %348 : vector<8x256xf32>
    %c52 = arith.constant 52 : index
    %c0_158 = arith.constant 0 : index
    %350 = vector.load %arg5[%c52, %c0_158] : memref<94x256xf32, #tpu.memory_space<vmem>>, vector<1x256xf32>
    %351 = vector.broadcast %350 : vector<1x256xf32> to vector<8x256xf32>
    %352 = arith.addf %349, %351 : vector<8x256xf32>
    %cst_159 = arith.constant 0.000000e+00 : f32
    %353 = vector.broadcast %cst_159 : f32 to vector<8x256xf32>
    %354 = arith.maximumf %352, %353 : vector<8x256xf32>
    %c50 = arith.constant 50 : index
    %c0_160 = arith.constant 0 : index
    %355 = vector.load %arg5[%c50, %c0_160] : memref<94x256xf32, #tpu.memory_space<vmem>>, vector<1x256xf32>
    %356 = vector.broadcast %355 : vector<1x256xf32> to vector<8x256xf32>
    %357 = arith.addf %293, %356 : vector<8x256xf32>
    %cst_161 = arith.constant 0.000000e+00 : f32
    %358 = vector.broadcast %cst_161 : f32 to vector<8x256xf32>
    %359 = arith.maximumf %357, %358 : vector<8x256xf32>
    %c80 = arith.constant 80 : index
    %c0_162 = arith.constant 0 : index
    %360 = vector.load %arg5[%c80, %c0_162] : memref<94x256xf32, #tpu.memory_space<vmem>>, vector<1x256xf32>
    %c32_i32_163 = arith.constant 32 : i32
    %361 = tpu.dynamic_rotate %359 by %c32_i32_163 dim 1 : vector<8x256xf32>, i32 -> vector<8x256xf32>
    %362 = vector.broadcast %360 : vector<1x256xf32> to vector<8x256xf32>
    %363 = arith.mulf %361, %362 : vector<8x256xf32>
    %c81 = arith.constant 81 : index
    %c0_164 = arith.constant 0 : index
    %364 = vector.load %arg5[%c81, %c0_164] : memref<94x256xf32, #tpu.memory_space<vmem>>, vector<1x256xf32>
    %365 = vector.broadcast %364 : vector<1x256xf32> to vector<8x256xf32>
    %366 = arith.mulf %359, %365 : vector<8x256xf32>
    %367 = arith.addf %363, %366 : vector<8x256xf32>
    %c82 = arith.constant 82 : index
    %c0_165 = arith.constant 0 : index
    %368 = vector.load %arg5[%c82, %c0_165] : memref<94x256xf32, #tpu.memory_space<vmem>>, vector<1x256xf32>
    %c224_i32_166 = arith.constant 224 : i32
    %369 = tpu.dynamic_rotate %359 by %c224_i32_166 dim 1 : vector<8x256xf32>, i32 -> vector<8x256xf32>
    %370 = vector.broadcast %368 : vector<1x256xf32> to vector<8x256xf32>
    %371 = arith.mulf %369, %370 : vector<8x256xf32>
    %372 = arith.addf %367, %371 : vector<8x256xf32>
    %c53 = arith.constant 53 : index
    %c0_167 = arith.constant 0 : index
    %373 = vector.load %arg5[%c53, %c0_167] : memref<94x256xf32, #tpu.memory_space<vmem>>, vector<1x256xf32>
    %374 = vector.broadcast %373 : vector<1x256xf32> to vector<8x256xf32>
    %375 = arith.addf %372, %374 : vector<8x256xf32>
    %cst_168 = arith.constant 0.000000e+00 : f32
    %376 = vector.broadcast %cst_168 : f32 to vector<8x256xf32>
    %377 = arith.maximumf %375, %376 : vector<8x256xf32>
    %378 = arith.addf %354, %377 : vector<8x256xf32>
    %c51 = arith.constant 51 : index
    %c0_169 = arith.constant 0 : index
    %379 = vector.load %arg5[%c51, %c0_169] : memref<94x256xf32, #tpu.memory_space<vmem>>, vector<1x256xf32>
    %380 = vector.broadcast %379 : vector<1x256xf32> to vector<8x256xf32>
    %381 = arith.addf %321, %380 : vector<8x256xf32>
    %cst_170 = arith.constant 0.000000e+00 : f32
    %382 = vector.broadcast %cst_170 : f32 to vector<8x256xf32>
    %383 = arith.maximumf %381, %382 : vector<8x256xf32>
    %c83 = arith.constant 83 : index
    %c0_171 = arith.constant 0 : index
    %384 = vector.load %arg5[%c83, %c0_171] : memref<94x256xf32, #tpu.memory_space<vmem>>, vector<1x256xf32>
    %c160_i32_172 = arith.constant 160 : i32
    %385 = tpu.dynamic_rotate %383 by %c160_i32_172 dim 1 : vector<8x256xf32>, i32 -> vector<8x256xf32>
    %386 = vector.broadcast %384 : vector<1x256xf32> to vector<8x256xf32>
    %387 = arith.mulf %385, %386 : vector<8x256xf32>
    %c84 = arith.constant 84 : index
    %c0_173 = arith.constant 0 : index
    %388 = vector.load %arg5[%c84, %c0_173] : memref<94x256xf32, #tpu.memory_space<vmem>>, vector<1x256xf32>
    %c128_i32_174 = arith.constant 128 : i32
    %389 = tpu.dynamic_rotate %383 by %c128_i32_174 dim 1 : vector<8x256xf32>, i32 -> vector<8x256xf32>
    %390 = vector.broadcast %388 : vector<1x256xf32> to vector<8x256xf32>
    %391 = arith.mulf %389, %390 : vector<8x256xf32>
    %392 = arith.addf %387, %391 : vector<8x256xf32>
    %c85 = arith.constant 85 : index
    %c0_175 = arith.constant 0 : index
    %393 = vector.load %arg5[%c85, %c0_175] : memref<94x256xf32, #tpu.memory_space<vmem>>, vector<1x256xf32>
    %c96_i32_176 = arith.constant 96 : i32
    %394 = tpu.dynamic_rotate %383 by %c96_i32_176 dim 1 : vector<8x256xf32>, i32 -> vector<8x256xf32>
    %395 = vector.broadcast %393 : vector<1x256xf32> to vector<8x256xf32>
    %396 = arith.mulf %394, %395 : vector<8x256xf32>
    %397 = arith.addf %392, %396 : vector<8x256xf32>
    %c86 = arith.constant 86 : index
    %c0_177 = arith.constant 0 : index
    %398 = vector.load %arg5[%c86, %c0_177] : memref<94x256xf32, #tpu.memory_space<vmem>>, vector<1x256xf32>
    %c64_i32_178 = arith.constant 64 : i32
    %399 = tpu.dynamic_rotate %383 by %c64_i32_178 dim 1 : vector<8x256xf32>, i32 -> vector<8x256xf32>
    %400 = vector.broadcast %398 : vector<1x256xf32> to vector<8x256xf32>
    %401 = arith.mulf %399, %400 : vector<8x256xf32>
    %402 = arith.addf %397, %401 : vector<8x256xf32>
    %c87 = arith.constant 87 : index
    %c0_179 = arith.constant 0 : index
    %403 = vector.load %arg5[%c87, %c0_179] : memref<94x256xf32, #tpu.memory_space<vmem>>, vector<1x256xf32>
    %c32_i32_180 = arith.constant 32 : i32
    %404 = tpu.dynamic_rotate %383 by %c32_i32_180 dim 1 : vector<8x256xf32>, i32 -> vector<8x256xf32>
    %405 = vector.broadcast %403 : vector<1x256xf32> to vector<8x256xf32>
    %406 = arith.mulf %404, %405 : vector<8x256xf32>
    %407 = arith.addf %402, %406 : vector<8x256xf32>
    %c88 = arith.constant 88 : index
    %c0_181 = arith.constant 0 : index
    %408 = vector.load %arg5[%c88, %c0_181] : memref<94x256xf32, #tpu.memory_space<vmem>>, vector<1x256xf32>
    %409 = vector.broadcast %408 : vector<1x256xf32> to vector<8x256xf32>
    %410 = arith.mulf %383, %409 : vector<8x256xf32>
    %411 = arith.addf %407, %410 : vector<8x256xf32>
    %c89 = arith.constant 89 : index
    %c0_182 = arith.constant 0 : index
    %412 = vector.load %arg5[%c89, %c0_182] : memref<94x256xf32, #tpu.memory_space<vmem>>, vector<1x256xf32>
    %c224_i32_183 = arith.constant 224 : i32
    %413 = tpu.dynamic_rotate %383 by %c224_i32_183 dim 1 : vector<8x256xf32>, i32 -> vector<8x256xf32>
    %414 = vector.broadcast %412 : vector<1x256xf32> to vector<8x256xf32>
    %415 = arith.mulf %413, %414 : vector<8x256xf32>
    %416 = arith.addf %411, %415 : vector<8x256xf32>
    %c90 = arith.constant 90 : index
    %c0_184 = arith.constant 0 : index
    %417 = vector.load %arg5[%c90, %c0_184] : memref<94x256xf32, #tpu.memory_space<vmem>>, vector<1x256xf32>
    %c192_i32_185 = arith.constant 192 : i32
    %418 = tpu.dynamic_rotate %383 by %c192_i32_185 dim 1 : vector<8x256xf32>, i32 -> vector<8x256xf32>
    %419 = vector.broadcast %417 : vector<1x256xf32> to vector<8x256xf32>
    %420 = arith.mulf %418, %419 : vector<8x256xf32>
    %421 = arith.addf %416, %420 : vector<8x256xf32>
    %c91 = arith.constant 91 : index
    %c0_186 = arith.constant 0 : index
    %422 = vector.load %arg5[%c91, %c0_186] : memref<94x256xf32, #tpu.memory_space<vmem>>, vector<1x256xf32>
    %c160_i32_187 = arith.constant 160 : i32
    %423 = tpu.dynamic_rotate %383 by %c160_i32_187 dim 1 : vector<8x256xf32>, i32 -> vector<8x256xf32>
    %424 = vector.broadcast %422 : vector<1x256xf32> to vector<8x256xf32>
    %425 = arith.mulf %423, %424 : vector<8x256xf32>
    %426 = arith.addf %421, %425 : vector<8x256xf32>
    %c92 = arith.constant 92 : index
    %c0_188 = arith.constant 0 : index
    %427 = vector.load %arg5[%c92, %c0_188] : memref<94x256xf32, #tpu.memory_space<vmem>>, vector<1x256xf32>
    %c128_i32_189 = arith.constant 128 : i32
    %428 = tpu.dynamic_rotate %383 by %c128_i32_189 dim 1 : vector<8x256xf32>, i32 -> vector<8x256xf32>
    %429 = vector.broadcast %427 : vector<1x256xf32> to vector<8x256xf32>
    %430 = arith.mulf %428, %429 : vector<8x256xf32>
    %431 = arith.addf %426, %430 : vector<8x256xf32>
    %c93 = arith.constant 93 : index
    %c0_190 = arith.constant 0 : index
    %432 = vector.load %arg5[%c93, %c0_190] : memref<94x256xf32, #tpu.memory_space<vmem>>, vector<1x256xf32>
    %c96_i32_191 = arith.constant 96 : i32
    %433 = tpu.dynamic_rotate %383 by %c96_i32_191 dim 1 : vector<8x256xf32>, i32 -> vector<8x256xf32>
    %434 = vector.broadcast %432 : vector<1x256xf32> to vector<8x256xf32>
    %435 = arith.mulf %433, %434 : vector<8x256xf32>
    %436 = arith.addf %431, %435 : vector<8x256xf32>
    %c54 = arith.constant 54 : index
    %c0_192 = arith.constant 0 : index
    %437 = vector.load %arg5[%c54, %c0_192] : memref<94x256xf32, #tpu.memory_space<vmem>>, vector<1x256xf32>
    %438 = vector.broadcast %437 : vector<1x256xf32> to vector<8x256xf32>
    %439 = arith.addf %436, %438 : vector<8x256xf32>
    %cst_193 = arith.constant 0.000000e+00 : f32
    %440 = vector.broadcast %cst_193 : f32 to vector<8x256xf32>
    %441 = arith.maximumf %439, %440 : vector<8x256xf32>
    %442 = arith.addf %378, %441 : vector<8x256xf32>
    %443 = arith.truncf %442 : vector<8x256xf32> to vector<8x256xbf16>
    %c256 = arith.constant 256 : index
    %c0_194 = arith.constant 0 : index
    %444 = vector.load %arg4[%c256, %c0_194] : memref<512x256xbf16, #tpu.memory_space<vmem>>, vector<256x256xbf16>
    %cst_195 = arith.constant dense<0.000000e+00> : vector<8x256xf32>
    %445 = tpu.matmul %443, %444, %cst_195 {dimension_numbers = #tpu.dot_dimension_numbers<[1], [0], [0], [1], [0, 0, 1, 1], [], []>} : vector<8x256xbf16>, vector<256x256xbf16>, vector<8x256xf32> -> vector<8x256xf32>
    %c55 = arith.constant 55 : index
    %c0_196 = arith.constant 0 : index
    %446 = vector.load %arg5[%c55, %c0_196] : memref<94x256xf32, #tpu.memory_space<vmem>>, vector<1x256xf32>
    %447 = vector.broadcast %446 : vector<1x256xf32> to vector<8x256xf32>
    %448 = arith.addf %445, %447 : vector<8x256xf32>
    %449 = arith.addf %230, %448 : vector<8x256xf32>
    %cst_197 = arith.constant 0.000000e+00 : f32
    %450 = vector.broadcast %cst_197 : f32 to vector<8x256xf32>
    %451 = arith.maximumf %449, %450 : vector<8x256xf32>
    %452 = vector.shape_cast %451 : vector<8x256xf32> to vector<1x8x256xf32>
    %c0_198 = arith.constant 0 : index
    %c0_199 = arith.constant 0 : index
    %c0_200 = arith.constant 0 : index
    %453 = vector.load %arg6[%c0_198, %c0_199, %c0_200] : memref<1x8x256xf32, #tpu.memory_space<vmem>>, vector<1x8x256xf32>
    tpu.vector_store %arg6[%c0_198, %c0_199, %c0_200], %452 {strides = array<i32>} : memref<1x8x256xf32, #tpu.memory_space<vmem>>, vector<1x8x256xf32>,
    return
  }
  func.func @transform_0(%arg0: i32) -> (i32, i32, i32) {
    %c0_i32 = arith.constant 0 : i32
    %c0_i32_0 = arith.constant 0 : i32
    %c0_i32_1 = arith.constant 0 : i32
    return %arg0, %c0_i32, %c0_i32_0 : i32, i32, i32
  }
  func.func @transform_1(%arg0: i32) -> (i32, i32) {
    %c0_i32 = arith.constant 0 : i32
    %c0_i32_0 = arith.constant 0 : i32
    %c0_i32_1 = arith.constant 0 : i32
    return %c0_i32, %c0_i32_0 : i32, i32
  }
  func.func @transform_2(%arg0: i32) -> (i32, i32) {
    %c0_i32 = arith.constant 0 : i32
    %c0_i32_0 = arith.constant 0 : i32
    %c0_i32_1 = arith.constant 0 : i32
    return %c0_i32, %c0_i32_0 : i32, i32
  }
  func.func @transform_3(%arg0: i32) -> (i32, i32) {
    %c0_i32 = arith.constant 0 : i32
    %c0_i32_0 = arith.constant 0 : i32
    %c0_i32_1 = arith.constant 0 : i32
    return %c0_i32, %c0_i32_0 : i32, i32
  }
  func.func @transform_4(%arg0: i32) -> (i32, i32) {
    %c0_i32 = arith.constant 0 : i32
    %c0_i32_0 = arith.constant 0 : i32
    %c0_i32_1 = arith.constant 0 : i32
    return %c0_i32, %c0_i32_0 : i32, i32
  }
  func.func @transform_5(%arg0: i32) -> (i32, i32, i32) {
    %c0_i32 = arith.constant 0 : i32
    %c0_i32_0 = arith.constant 0 : i32
    %c0_i32_1 = arith.constant 0 : i32
    return %arg0, %c0_i32, %c0_i32_0 : i32, i32, i32
  }
}

</mosaic_0001>

<llo_original>
// kernel: tpu_custom_call.1
$region0: #{tpu_custom_call.1}
  #allocation0 [shape = 'u32[]', space=smem, size = 0x4, offset = 0x4, fixed_abs, tag = 'smem constant byte address 0x4 - core index']
  #allocation1 [shape = 'u32[144,128]{1,0:T(1,128)}', space=vmem, size = 0x12000, scoped, tag = 'internal scratch']
  #allocation2 [shape = 'f32[18,256]{1,0:T(8,128)}', space=vmem, size = 0x6000, scoped, tag = 'scratch operand']
  %s0 = inlined_call_operand.hbm [shape: f32[2,8,128], index: 0, kind: input, shape index: {}]
  %s1 = inlined_call_operand.hbm [shape: bf16[128,512], index: 1, kind: input, shape index: {}]
  %s2 = inlined_call_operand.hbm [shape: bf16[256,256], index: 2, kind: input, shape index: {}]
  %s3 = inlined_call_operand.hbm [shape: bf16[512,256], index: 3, kind: input, shape index: {}]
  %s4 = inlined_call_operand.hbm [shape: f32[94,256], index: 4, kind: input, shape index: {}]
  %s5 = inlined_call_operand.hbm [shape: f32[2,8,256], index: 5, kind: output, shape index: {}]
  %s6 = sld [smem:[#allocation0]]
  $region73: #{tpu_custom_call.1} parent=0
    _
  %s8 = ssub.s32 1, %s6
  %s9 = scalar_select 0, %s8, %s6
  $region1: #{tpu_custom_call.1} parent=0
    #allocation3 [shape = 'u8[8192]{0}', space=vmem, size = 0x2000, scoped, tag = 'input window, operand 0']
    #allocation4 [shape = 's32[2]{0}', space=sflag, size = 0x8, scoped, tag = 'scoped memory for tpu_custom_call.1']
    #allocation5 [shape = 's32[2]{0}', space=sflag, size = 0x8, scoped, tag = 'scoped memory for tpu_custom_call.1']
    #allocation6 [shape = 'u8[131072]{0}', space=vmem, size = 0x20000, scoped, tag = 'input window, operand 1, single buffered']
    #allocation7 [shape = 's32[1]{0}', space=sflag, size = 0x4, scoped, tag = 'scoped memory for tpu_custom_call.1']
    #allocation8 [shape = 'u8[131072]{0}', space=vmem, size = 0x20000, scoped, tag = 'input window, operand 2, single buffered']
    #allocation9 [shape = 'u8[262144]{0}', space=vmem, size = 0x40000, scoped, tag = 'input window, operand 3, single buffered']
    #allocation10 [shape = 's32[1]{0}', space=sflag, size = 0x4, scoped, tag = 'scoped memory for tpu_custom_call.1']
    #allocation11 [shape = 'u8[98304]{0}', space=vmem, size = 0x18000, scoped, tag = 'input window, operand 4, single buffered']
    #allocation12 [shape = 'u8[16384]{0}', space=vmem, size = 0x4000, scoped, tag = 'output window, operand 0']
    %10 = vsyncpa [#allocation4], 0
    %s11 = scalar_lea.sflag [#allocation4], 1
    %12 = vsyncpa %s11, 0
    %13 = vsyncpa [#allocation7], 0
    %14 = vsyncpa [#allocation10], 0
    %15 = vsyncpa [#allocation5], 0
    %s16 = scalar_lea.sflag [#allocation5], 1
    %17 = vsyncpa %s16, 0
    loop: start=0, step=1, limit=4
    $region2: #{tpu_custom_call.1} parent=1 // loop_pre_header
      _
    $region3: #{tpu_custom_call.1} parent=1 // loop_header
      %s19 = sphi 0, %s23
      %p20 = scmp.ge.s32.totalorder %s19, 4
      %s29 = sphi 0, %s31
      %s32 = sphi 0, %s29
      %s33 = sphi 0, %s32
      %s49 = sphi 0, %s33
      %s53 = sphi 0, %s53
      %s55 = sphi 0, %s53
      %s56 = sphi 0, %s55
      %s70 = sphi 0, %s56
      %s74 = sphi 0, %s74
      %s76 = sphi 0, %s74
      %s77 = sphi 0, %s76
      %s91 = sphi 0, %s77
      %s95 = sphi 0, %s95
      %s97 = sphi 0, %s95
      %s98 = sphi 0, %s97
      %s112 = sphi 0, %s98
      %s116 = sphi 0, %s116
      %s118 = sphi 0, %s116
      %s119 = sphi 0, %s118
      %s133 = sphi 0, %s119
      %s139 = sphi 0, %s141
      %s142 = sphi 0, %s139
      %s143 = sphi 0, %s142
      %s159 = sphi 0, %s143
    $region4: #{tpu_custom_call.1} parent=1 // loop_header_branch
      %22 = sbr.rel (%p20) target = $region8
    $region5: #{tpu_custom_call.1} parent=1 // loop_body
      %s24 = ssub.s32 %s19, 1
      %s25 = ssub.s32 %s19, 2
      %s26 = sadd.s32 %s19, 1
      %s27 = ssub.s32 %s19, %s26
      %p28 = scmp.eq.s32.totalorder %s27, 0
      %s30 = sadd.s32 %s29, 1
      %s31 = scalar_select %p28, %s29, %s30
      %p34 = pneg %p28
      %p35 = scmp.eq.s32.totalorder %s19, 1
      %p36 = por %p34, %p35
      %p37 = scmp.ne.s32.totalorder %s29, %s32
      %p38 = scmp.eq.s32.totalorder %s19, 0
      %p39 = por %p37, %p38
      %p40 = scmp.ne.s32.totalorder %s29, %s32
      %p41 = scmp.eq.s32.totalorder %s24, 1
      %p42 = por %p40, %p41
      %p43 = scmp.ne.s32.totalorder %s32, %s33
      %p44 = scmp.eq.s32.totalorder %s24, 0
      %p45 = por %p43, %p44
      %p46 = scmp.ne.s32.totalorder %s32, %s33
      %p47 = scmp.eq.s32.totalorder %s25, 1
      %p48 = por %p46, %p47
      %p50 = scmp.ne.s32.totalorder %s33, %s49
      %p51 = scmp.eq.s32.totalorder %s25, 0
      %p52 = por %p50, %p51
      %s54 = sadd.s32 %s53, 1
      %p57 = scmp.eq.s32.totalorder %s19, 1
      %p58 = scmp.ne.s32.totalorder %s53, %s55
      %p59 = scmp.eq.s32.totalorder %s19, 0
      %p60 = por %p58, %p59
      %p61 = scmp.ne.s32.totalorder %s53, %s55
      %p62 = scmp.eq.s32.totalorder %s24, 1
      %p63 = por %p61, %p62
      %p64 = scmp.ne.s32.totalorder %s55, %s56
      %p65 = scmp.eq.s32.totalorder %s24, 0
      %p66 = por %p64, %p65
      %p67 = scmp.ne.s32.totalorder %s55, %s56
      %p68 = scmp.eq.s32.totalorder %s25, 1
      %p69 = por %p67, %p68
      %p71 = scmp.ne.s32.totalorder %s56, %s70
      %p72 = scmp.eq.s32.totalorder %s25, 0
      %p73 = por %p71, %p72
      %s75 = sadd.s32 %s74, 1
      %p78 = scmp.eq.s32.totalorder %s19, 1
      %p79 = scmp.ne.s32.totalorder %s74, %s76
      %p80 = scmp.eq.s32.totalorder %s19, 0
      %p81 = por %p79, %p80
      %p82 = scmp.ne.s32.totalorder %s74, %s76
      %p83 = scmp.eq.s32.totalorder %s24, 1
      %p84 = por %p82, %p83
      %p85 = scmp.ne.s32.totalorder %s76, %s77
      %p86 = scmp.eq.s32.totalorder %s24, 0
      %p87 = por %p85, %p86
      %p88 = scmp.ne.s32.totalorder %s76, %s77
      %p89 = scmp.eq.s32.totalorder %s25, 1
      %p90 = por %p88, %p89
      %p92 = scmp.ne.s32.totalorder %s77, %s91
      %p93 = scmp.eq.s32.totalorder %s25, 0
      %p94 = por %p92, %p93
      %s96 = sadd.s32 %s95, 1
      %p99 = scmp.eq.s32.totalorder %s19, 1
      %p100 = scmp.ne.s32.totalorder %s95, %s97
      %p101 = scmp.eq.s32.totalorder %s19, 0
      %p102 = por %p100, %p101
      %p103 = scmp.ne.s32.totalorder %s95, %s97
      %p104 = scmp.eq.s32.totalorder %s24, 1
      %p105 = por %p103, %p104
      %p106 = scmp.ne.s32.totalorder %s97, %s98
      %p107 = scmp.eq.s32.totalorder %s24, 0
      %p108 = por %p106, %p107
      %p109 = scmp.ne.s32.totalorder %s97, %s98
      %p110 = scmp.eq.s32.totalorder %s25, 1
      %p111 = por %p109, %p110
      %p113 = scmp.ne.s32.totalorder %s98, %s112
      %p114 = scmp.eq.s32.totalorder %s25, 0
      %p115 = por %p113, %p114
      %s117 = sadd.s32 %s116, 1
      %p120 = scmp.eq.s32.totalorder %s19, 1
      %p121 = scmp.ne.s32.totalorder %s116, %s118
      %p122 = scmp.eq.s32.totalorder %s19, 0
      %p123 = por %p121, %p122
      %p124 = scmp.ne.s32.totalorder %s116, %s118
      %p125 = scmp.eq.s32.totalorder %s24, 1
      %p126 = por %p124, %p125
      %p127 = scmp.ne.s32.totalorder %s118, %s119
      %p128 = scmp.eq.s32.totalorder %s24, 0
      %p129 = por %p127, %p128
      %p130 = scmp.ne.s32.totalorder %s118, %s119
      %p131 = scmp.eq.s32.totalorder %s25, 1
      %p132 = por %p130, %p131
      %p134 = scmp.ne.s32.totalorder %s119, %s133
      %p135 = scmp.eq.s32.totalorder %s25, 0
      %p136 = por %p134, %p135
      %s137 = ssub.s32 %s19, %s26
      %p138 = scmp.eq.s32.totalorder %s137, 0
      %s140 = sadd.s32 %s139, 1
      %s141 = scalar_select %p138, %s139, %s140
      %p144 = pneg %p138
      %p145 = scmp.eq.s32.totalorder %s19, 1
      %p146 = por %p144, %p145
      %p147 = scmp.ne.s32.totalorder %s139, %s142
      %p148 = scmp.eq.s32.totalorder %s19, 0
      %p149 = por %p147, %p148
      %p150 = scmp.ne.s32.totalorder %s139, %s142
      %p151 = scmp.eq.s32.totalorder %s24, 1
      %p152 = por %p150, %p151
      %p153 = scmp.ne.s32.totalorder %s142, %s143
      %p154 = scmp.eq.s32.totalorder %s24, 0
      %p155 = por %p153, %p154
      %p156 = scmp.ne.s32.totalorder %s142, %s143
      %p157 = scmp.eq.s32.totalorder %s25, 1
      %p158 = por %p156, %p157
      %p160 = scmp.ne.s32.totalorder %s143, %s159
      %p161 = scmp.eq.s32.totalorder %s25, 0
      %p162 = por %p160, %p161
      %p163 = scmp.le.s32.totalorder 1, %s19
      %p164 = scmp.lt.s32.totalorder %s19, 3
      %p165 = pnand %p163, %p164
      %p166 = pneg %p165
      // Predicated region
      $region9: #{tpu_custom_call.1} parent=5 // pred_check
        _
      $region10: #{tpu_custom_call.1} parent=5 // pred_check_branch
        %168 = sbr.rel (%p165) target = $region12
      $region11: #{tpu_custom_call.1} parent=5 // pred_region
        %s169 = ssub.s32 %s19, 1
        // Predicated region
        $region13: #{tpu_custom_call.1} parent=11 // pred_check
          %p170 = pneg %p66
        $region14: #{tpu_custom_call.1} parent=11 // pred_check_branch
          %172 = sbr.rel (%p170) target = $region16
        $region15: #{tpu_custom_call.1} parent=11 // pred_region
          %s174 = ssub.s32 4096, 4096
          %175 = vsyncadd [#allocation7], %s174
          %s176 = sshll.u32 [#allocation6], 4
          %s177 = int_to_ptr.vmem [resolvable:$true] %s176
          %182 = dma.hbm_to_vmem [thread:$0]  %s1, 4096, %s177, [#allocation7], 256, 256, 16
        $region16: #{tpu_custom_call.1} parent=11 // pred_fallthru
          _
        // Predicated region
        $region17: #{tpu_custom_call.1} parent=11 // pred_check
          %p183 = pneg %p87
        $region18: #{tpu_custom_call.1} parent=11 // pred_check_branch
          %185 = sbr.rel (%p183) target = $region20
        $region19: #{tpu_custom_call.1} parent=11 // pred_region
          %s187 = ssub.s32 4096, 4096
          %188 = vsyncadd [#allocation7], %s187
          %s189 = sshll.u32 [#allocation8], 4
          %s190 = int_to_ptr.vmem [resolvable:$true] %s189
          %195 = dma.hbm_to_vmem [thread:$0]  %s2, 4096, %s190, [#allocation7], 128, 128, 8
        $region20: #{tpu_custom_call.1} parent=11 // pred_fallthru
          _
        // Predicated region
        $region21: #{tpu_custom_call.1} parent=11 // pred_check
          %p196 = pneg %p108
        $region22: #{tpu_custom_call.1} parent=11 // pred_check_branch
          %198 = sbr.rel (%p196) target = $region24
        $region23: #{tpu_custom_call.1} parent=11 // pred_region
          %s200 = ssub.s32 8192, 8192
          %201 = vsyncadd [#allocation10], %s200
          %s202 = sshll.u32 [#allocation9], 4
          %s203 = int_to_ptr.vmem [resolvable:$true] %s202
          %208 = dma.hbm_to_vmem [thread:$0]  %s3, 8192, %s203, [#allocation10], 128, 128, 8
        $region24: #{tpu_custom_call.1} parent=11 // pred_fallthru
          _
        // Predicated region
        $region25: #{tpu_custom_call.1} parent=11 // pred_check
          %p209 = pneg %p129
        $region26: #{tpu_custom_call.1} parent=11 // pred_check_branch
          %211 = sbr.rel (%p209) target = $region28
        $region27: #{tpu_custom_call.1} parent=11 // pred_region
          %s213 = ssub.s32 3072, 3072
          %214 = vsyncadd [#allocation10], %s213
          %s215 = sshll.u32 [#allocation11], 4
          %s216 = int_to_ptr.vmem [resolvable:$true] %s215
          %221 = dma.hbm_to_vmem [thread:$0]  %s4, 3072, %s216, [#allocation10], 256, 256, 16
        $region28: #{tpu_custom_call.1} parent=11 // pred_fallthru
          _
      $region12: #{tpu_custom_call.1} parent=5 // pred_fallthru
        _
      %p222 = scmp.lt.s32.totalorder %s19, 2
      // Predicated region
      $region29: #{tpu_custom_call.1} parent=5 // pred_check
        %p223 = pneg %p222
      $region30: #{tpu_custom_call.1} parent=5 // pred_check_branch
        %225 = sbr.rel (%p223) target = $region32
      $region31: #{tpu_custom_call.1} parent=5 // pred_region
        // Predicated region
        $region33: #{tpu_custom_call.1} parent=31 // pred_check
          %p226 = pneg %p39
        $region34: #{tpu_custom_call.1} parent=31 // pred_check_branch
          %228 = sbr.rel (%p226) target = $region36
        $region35: #{tpu_custom_call.1} parent=31 // pred_region
          %s229 = sand.u32 %s29, 1
          %s230 = scalar_lea.sflag [#allocation4], %s229
          %s231 = sand.u32 %s29, 1
          %s232 = smul.addr %s231, 8
          %s233 = scalar_lea.vmem [#allocation3], %s232
          %s235 = ssub.s32 128, 128
          %236 = vsyncadd %s230, %s235
          %s237 = smul.addr %s19, 128
          %s238 = scalar_lea.hbm %s0, %s237
          %s240 = sshll.u32 %s233, 4
          %s241 = int_to_ptr.vmem [resolvable:$true] %s240
          %243 = dma.hbm_to_vmem [thread:$0]  %s238, 128, %s241, %s230
        $region36: #{tpu_custom_call.1} parent=31 // pred_fallthru
          _
      $region32: #{tpu_custom_call.1} parent=5 // pred_fallthru
        _
      %p244 = scmp.le.s32.totalorder 1, %s19
      %p245 = scmp.lt.s32.totalorder %s19, 3
      %p246 = pnand %p244, %p245
      %p247 = pneg %p246
      // Predicated region
      $region37: #{tpu_custom_call.1} parent=5 // pred_check
        _
      $region38: #{tpu_custom_call.1} parent=5 // pred_check_branch
        %249 = sbr.rel (%p246) target = $region40
      $region39: #{tpu_custom_call.1} parent=5 // pred_region
        %s250 = ssub.s32 %s19, 1
        %s251 = sand.u32 %s32, 1
        %s252 = scalar_lea.sflag [#allocation4], %s251
        %s253 = sand.u32 %s32, 1
        %s254 = smul.addr %s253, 8
        %s255 = scalar_lea.vmem [#allocation3], %s254
        // Predicated region
        $region41: #{tpu_custom_call.1} parent=39 // pred_check
          %p256 = pneg %p45
        $region42: #{tpu_custom_call.1} parent=39 // pred_check_branch
          %258 = sbr.rel (%p256) target = $region44
        $region43: #{tpu_custom_call.1} parent=39 // pred_region
          %259 = dma.done %s252, 128
        $region44: #{tpu_custom_call.1} parent=39 // pred_fallthru
          _
        // Predicated region
        $region45: #{tpu_custom_call.1} parent=39 // pred_check
          %p260 = pneg %p66
        $region46: #{tpu_custom_call.1} parent=39 // pred_check_branch
          %262 = sbr.rel (%p260) target = $region48
        $region47: #{tpu_custom_call.1} parent=39 // pred_region
          %263 = dma.done [#allocation7], 4096
        $region48: #{tpu_custom_call.1} parent=39 // pred_fallthru
          _
        // Predicated region
        $region49: #{tpu_custom_call.1} parent=39 // pred_check
          %p264 = pneg %p87
        $region50: #{tpu_custom_call.1} parent=39 // pred_check_branch
          %266 = sbr.rel (%p264) target = $region52
        $region51: #{tpu_custom_call.1} parent=39 // pred_region
          %267 = dma.done [#allocation7], 4096
        $region52: #{tpu_custom_call.1} parent=39 // pred_fallthru
          _
        // Predicated region
        $region53: #{tpu_custom_call.1} parent=39 // pred_check
          %p268 = pneg %p108
        $region54: #{tpu_custom_call.1} parent=39 // pred_check_branch
          %270 = sbr.rel (%p268) target = $region56
        $region55: #{tpu_custom_call.1} parent=39 // pred_region
          %271 = dma.done [#allocation10], 8192
        $region56: #{tpu_custom_call.1} parent=39 // pred_fallthru
          _
        // Predicated region
        $region57: #{tpu_custom_call.1} parent=39 // pred_check
          %p272 = pneg %p129
        $region58: #{tpu_custom_call.1} parent=39 // pred_check_branch
          %274 = sbr.rel (%p272) target = $region60
        $region59: #{tpu_custom_call.1} parent=39 // pred_region
          %275 = dma.done [#allocation10], 3072
        $region60: #{tpu_custom_call.1} parent=39 // pred_fallthru
          _
        %s276 = sand.u32 %s32, 1
        %s277 = scalar_lea.sflag [#allocation4], %s276
        %s278 = sand.u32 %s32, 1
        %s279 = smul.addr %s278, 8
        %s280 = scalar_lea.vmem [#allocation3], %s279
        %p281 = pneg %p45
        %p282 = pneg %p42
        %p283 = pneg %p66
        %p284 = pneg %p63
        %p285 = pneg %p87
        %p286 = pneg %p84
        %p287 = pneg %p108
        %p288 = pneg %p105
        %p289 = pneg %p129
        %p290 = pneg %p126
        %p291 = pneg %p155
        %p292 = pneg %p152
        %s293 = sand.u32 %s142, 1
        %s294 = scalar_lea.sflag [#allocation5], %s293
        %s295 = sand.u32 %s142, 1
        %s296 = smul.addr %s295, 16
        %s297 = scalar_lea.vmem [#allocation12], %s296
        %299 = vst [vmem:[#allocation2] sm:$0x1f] 0.0
        %300 = vst [vmem:[#allocation2 + $0x8] sm:$0x1f] 0.0
        %301 = vst [vmem:[#allocation2 + $0x10] sm:$0xe0] 0.0
        %302 = vst [vmem:[#allocation2 + $0x18] sm:$0xe0] 0.0
        %303 = vst [vmem:[#allocation2 + $0x20] sm:$0x3] 0.0
        %304 = vst [vmem:[#allocation2 + $0x28] sm:$0x3] 0.0
        %v305 = vld [vmem:[%s255] sm:$0xff]
        %v306 = vpack.c.bf16 %v305, %v305
        %v307 = vld [vmem:[#allocation6] sm:$0xff]
        %v308 = vld [vmem:[#allocation6 + $0x8] sm:$0xff]
        %v309 = vld [vmem:[#allocation6 + $0x10] sm:$0xff]
        %v310 = vld [vmem:[#allocation6 + $0x18] sm:$0xff]
        %v311 = vld [vmem:[#allocation6 + $0x20] sm:$0xff]
        %v312 = vld [vmem:[#allocation6 + $0x28] sm:$0xff]
        %v313 = vld [vmem:[#allocation6 + $0x30] sm:$0xff]
        %v314 = vld [vmem:[#allocation6 + $0x38] sm:$0xff]
        %v315 = vld [vmem:[#allocation6 + $0x40] sm:$0xff]
        %v316 = vld [vmem:[#allocation6 + $0x48] sm:$0xff]
        %v317 = vld [vmem:[#allocation6 + $0x50] sm:$0xff]
        %v318 = vld [vmem:[#allocation6 + $0x58] sm:$0xff]
        %v319 = vld [vmem:[#allocation6 + $0x60] sm:$0xff]
        %v320 = vld [vmem:[#allocation6 + $0x68] sm:$0xff]
        %v321 = vld [vmem:[#allocation6 + $0x70] sm:$0xff]
        %v322 = vld [vmem:[#allocation6 + $0x78] sm:$0xff]
        %v323 = vld [vmem:[#allocation6 + $0x80] sm:$0xff]
        %v324 = vld [vmem:[#allocation6 + $0x88] sm:$0xff]
        %v325 = vld [vmem:[#allocation6 + $0x90] sm:$0xff]
        %v326 = vld [vmem:[#allocation6 + $0x98] sm:$0xff]
        %v327 = vld [vmem:[#allocation6 + $0xa0] sm:$0xff]
        %v328 = vld [vmem:[#allocation6 + $0xa8] sm:$0xff]
        %v329 = vld [vmem:[#allocation6 + $0xb0] sm:$0xff]
        %v330 = vld [vmem:[#allocation6 + $0xb8] sm:$0xff]
        %v331 = vld [vmem:[#allocation6 + $0xc0] sm:$0xff]
        %v332 = vld [vmem:[#allocation6 + $0xc8] sm:$0xff]
        %v333 = vld [vmem:[#allocation6 + $0xd0] sm:$0xff]
        %v334 = vld [vmem:[#allocation6 + $0xd8] sm:$0xff]
        %v335 = vld [vmem:[#allocation6 + $0xe0] sm:$0xff]
        %v336 = vld [vmem:[#allocation6 + $0xe8] sm:$0xff]
        %v337 = vld [vmem:[#allocation6 + $0xf0] sm:$0xff]
        %v338 = vld [vmem:[#allocation6 + $0xf8] sm:$0xff]
        %v371 = vunpack.c.l.b16 %v307
        %v372 = vunpack.c.h.b16 %v307
        %v373 = vunpack.c.l.b16 %v308
        %v374 = vunpack.c.h.b16 %v308
        %v375 = vunpack.c.l.b16 %v309
        %v376 = vunpack.c.h.b16 %v309
        %v377 = vunpack.c.l.b16 %v310
        %v378 = vunpack.c.h.b16 %v310
        %v379 = vunpack.c.l.b16 %v311
        %v380 = vunpack.c.h.b16 %v311
        %v381 = vunpack.c.l.b16 %v312
        %v382 = vunpack.c.h.b16 %v312
        %v383 = vunpack.c.l.b16 %v313
        %v384 = vunpack.c.h.b16 %v313
        %v385 = vunpack.c.l.b16 %v314
        %v386 = vunpack.c.h.b16 %v314
        %v387 = vunpack.c.l.b16 %v315
        %v388 = vunpack.c.h.b16 %v315
        %v389 = vunpack.c.l.b16 %v316
        %v390 = vunpack.c.h.b16 %v316
        %v391 = vunpack.c.l.b16 %v317
        %v392 = vunpack.c.h.b16 %v317
        %v393 = vunpack.c.l.b16 %v318
        %v394 = vunpack.c.h.b16 %v318
        %v395 = vunpack.c.l.b16 %v319
        %v396 = vunpack.c.h.b16 %v319
        %v397 = vunpack.c.l.b16 %v320
        %v398 = vunpack.c.h.b16 %v320
        %v399 = vunpack.c.l.b16 %v321
        %v400 = vunpack.c.h.b16 %v321
        %v401 = vunpack.c.l.b16 %v322
        %v402 = vunpack.c.h.b16 %v322
        %v403 = vunpack.c.l.b16 %v323
        %v404 = vunpack.c.h.b16 %v323
        %v405 = vunpack.c.l.b16 %v324
        %v406 = vunpack.c.h.b16 %v324
        %v407 = vunpack.c.l.b16 %v325
        %v408 = vunpack.c.h.b16 %v325
        %v409 = vunpack.c.l.b16 %v326
        %v410 = vunpack.c.h.b16 %v326
        %v411 = vunpack.c.l.b16 %v327
        %v412 = vunpack.c.h.b16 %v327
        %v413 = vunpack.c.l.b16 %v328
        %v414 = vunpack.c.h.b16 %v328
        %v415 = vunpack.c.l.b16 %v329
        %v416 = vunpack.c.h.b16 %v329
        %v417 = vunpack.c.l.b16 %v330
        %v418 = vunpack.c.h.b16 %v330
        %v419 = vunpack.c.l.b16 %v331
        %v420 = vunpack.c.h.b16 %v331
        %v421 = vunpack.c.l.b16 %v332
        %v422 = vunpack.c.h.b16 %v332
        %v423 = vunpack.c.l.b16 %v333
        %v424 = vunpack.c.h.b16 %v333
        %v425 = vunpack.c.l.b16 %v334
        %v426 = vunpack.c.h.b16 %v334
        %v427 = vunpack.c.l.b16 %v335
        %v428 = vunpack.c.h.b16 %v335
        %v429 = vunpack.c.l.b16 %v336
        %v430 = vunpack.c.h.b16 %v336
        %v431 = vunpack.c.l.b16 %v337
        %v432 = vunpack.c.h.b16 %v337
        %v433 = vunpack.c.l.b16 %v338
        %v434 = vunpack.c.h.b16 %v338
        %v435 = vpack.c.b16 %v375, %v371
        %v436 = vpack.c.b16 %v376, %v372
        %v437 = vpack.c.b16 %v377, %v373
        %v438 = vpack.c.b16 %v378, %v374
        %v439 = vpack.c.b16 %v383, %v379
        %v440 = vpack.c.b16 %v384, %v380
        %v441 = vpack.c.b16 %v385, %v381
        %v442 = vpack.c.b16 %v386, %v382
        %v443 = vpack.c.b16 %v391, %v387
        %v444 = vpack.c.b16 %v392, %v388
        %v445 = vpack.c.b16 %v393, %v389
        %v446 = vpack.c.b16 %v394, %v390
        %v447 = vpack.c.b16 %v399, %v395
        %v448 = vpack.c.b16 %v400, %v396
        %v449 = vpack.c.b16 %v401, %v397
        %v450 = vpack.c.b16 %v402, %v398
        %v451 = vpack.c.b16 %v407, %v403
        %v452 = vpack.c.b16 %v408, %v404
        %v453 = vpack.c.b16 %v409, %v405
        %v454 = vpack.c.b16 %v410, %v406
        %v455 = vpack.c.b16 %v415, %v411
        %v456 = vpack.c.b16 %v416, %v412
        %v457 = vpack.c.b16 %v417, %v413
        %v458 = vpack.c.b16 %v418, %v414
        %v459 = vpack.c.b16 %v423, %v419
        %v460 = vpack.c.b16 %v424, %v420
        %v461 = vpack.c.b16 %v425, %v421
        %v462 = vpack.c.b16 %v426, %v422
        %v463 = vpack.c.b16 %v431, %v427
        %v464 = vpack.c.b16 %v432, %v428
        %v465 = vpack.c.b16 %v433, %v429
        %v466 = vpack.c.b16 %v434, %v430
        %499 = vmatprep.subr.bf16.mxu0 %v436
        %500 = vmatpush1.bf16.msra.mxu0 %v435
        %501 = vmatprep.subr.bf16.mxu0 %v440
        %502 = vmatpush1.bf16.msra.mxu0 %v439
        %503 = vmatprep.subr.bf16.mxu0 %v444
        %504 = vmatpush1.bf16.msra.mxu0 %v443
        %505 = vmatprep.subr.bf16.mxu0 %v448
        %506 = vmatpush1.bf16.msra.mxu0 %v447
        %507 = vmatprep.subr.bf16.mxu0 %v452
        %508 = vmatpush1.bf16.msra.mxu0 %v451
        %509 = vmatprep.subr.bf16.mxu0 %v456
        %510 = vmatpush1.bf16.msra.mxu0 %v455
        %511 = vmatprep.subr.bf16.mxu0 %v460
        %512 = vmatpush1.bf16.msra.mxu0 %v459
        %513 = vmatprep.subr.bf16.mxu0 %v464
        %514 = vmatpush1.bf16.msra.mxu0 %v463
        %515 = vmatprep.subr.bf16.mxu0 0
        %516 = vmatpush1.bf16.msra.mxu0 0
        %517 = vmatprep.subr.bf16.mxu0 0
        %518 = vmatpush1.bf16.msra.mxu0 0
        %519 = vmatprep.subr.bf16.mxu0 0
        %520 = vmatpush1.bf16.msra.mxu0 0
        %521 = vmatprep.subr.bf16.mxu0 0
        %522 = vmatpush1.bf16.msra.mxu0 0
        %523 = vmatprep.subr.bf16.mxu0 0
        %524 = vmatpush1.bf16.msra.mxu0 0
        %525 = vmatprep.subr.bf16.mxu0 0
        %526 = vmatpush1.bf16.msra.mxu0 0
        %527 = vmatprep.subr.bf16.mxu0 0
        %528 = vmatpush1.bf16.msra.mxu0 0
        %529 = vmatprep.subr.bf16.mxu0 0
        %530 = vmatpush1.bf16.msra.mxu0 0
        %531 = vmatprep.mubr.bf16.mxu0 0
        %532 = vmatmul.mubr.bf16.gmra.mrb[0].mxu0 %v306
        %v533 = vpop.f32.mrb[0].mxu0
        %v534 = vadd.f32 0.0, %v533
        %v535 = vpop.f32.mrb[0].mxu0
        %v536 = vadd.f32 0.0, %v535
        %v537 = vpop.f32.mrb[0].mxu0
        %v538 = vpop.f32.mrb[0].mxu0
        %539 = vdwg.mxu0
        %540 = vmatprep.subr.bf16.mxu0 %v438
        %541 = vmatpush1.bf16.msra.mxu0 %v437
        %542 = vmatprep.subr.bf16.mxu0 %v442
        %543 = vmatpush1.bf16.msra.mxu0 %v441
        %544 = vmatprep.subr.bf16.mxu0 %v446
        %545 = vmatpush1.bf16.msra.mxu0 %v445
        %546 = vmatprep.subr.bf16.mxu0 %v450
        %547 = vmatpush1.bf16.msra.mxu0 %v449
        %548 = vmatprep.subr.bf16.mxu0 %v454
        %549 = vmatpush1.bf16.msra.mxu0 %v453
        %550 = vmatprep.subr.bf16.mxu0 %v458
        %551 = vmatpush1.bf16.msra.mxu0 %v457
        %552 = vmatprep.subr.bf16.mxu0 %v462
        %553 = vmatpush1.bf16.msra.mxu0 %v461
        %554 = vmatprep.subr.bf16.mxu0 %v466
        %555 = vmatpush1.bf16.msra.mxu0 %v465
        %556 = vmatprep.subr.bf16.mxu0 0
        %557 = vmatpush1.bf16.msra.mxu0 0
        %558 = vmatprep.subr.bf16.mxu0 0
        %559 = vmatpush1.bf16.msra.mxu0 0
        %560 = vmatprep.subr.bf16.mxu0 0
        %561 = vmatpush1.bf16.msra.mxu0 0
        %562 = vmatprep.subr.bf16.mxu0 0
        %563 = vmatpush1.bf16.msra.mxu0 0
        %564 = vmatprep.subr.bf16.mxu0 0
        %565 = vmatpush1.bf16.msra.mxu0 0
        %566 = vmatprep.subr.bf16.mxu0 0
        %567 = vmatpush1.bf16.msra.mxu0 0
        %568 = vmatprep.subr.bf16.mxu0 0
        %569 = vmatpush1.bf16.msra.mxu0 0
        %570 = vmatprep.subr.bf16.mxu0 0
        %571 = vmatpush1.bf16.msra.mxu0 0
        %572 = vmatprep.mubr.bf16.mxu0 0
        %573 = vmatmul.mubr.bf16.gmra.mrb[0].mxu0 %v306
        %v574 = vpop.f32.mrb[0].mxu0
        %v575 = vadd.f32 0.0, %v574
        %v576 = vpop.f32.mrb[0].mxu0
        %v577 = vadd.f32 0.0, %v576
        %v578 = vpop.f32.mrb[0].mxu0
        %v579 = vpop.f32.mrb[0].mxu0
        %580 = vdwg.mxu0
        %v581 = vld [vmem:[#allocation11] ss:$8 sm:$0x3]
        %v583 = vlaneseq
        %v584 = vshrl.u32 %v583, 7
        %v585 = vsub.s32 0, %v584
        %v586 = vrot.slane %v581, %v585
        %v587 = vlaneseq
        %v588 = vshrl.u32 %v587, 7
        %v589 = vsub.s32 1, %v588
        %v590 = vrot.slane %v581, %v589
        %v593 = vadd.f32 %v534, %v586
        %v594 = vadd.f32 %v536, %v590
        %s595 = scalar_lea.vmem [#allocation11], 1
        %v596 = vld [vmem:[%s595] ss:$8 sm:$0x3]
        %v598 = vlaneseq
        %v599 = vshrl.u32 %v598, 7
        %v600 = vsub.s32 0, %v599
        %v601 = vrot.slane %v596, %v600
        %v602 = vlaneseq
        %v603 = vshrl.u32 %v602, 7
        %v604 = vsub.s32 1, %v603
        %v605 = vrot.slane %v596, %v604
        %v608 = vadd.f32 %v575, %v601
        %v609 = vadd.f32 %v577, %v605
        %v612 = vrot.slane %v608, 3
        %v613 = vrot.slane %v609, 3
        %616 = vst [vmem:[#allocation2] sm:$0xe0] %v612
        %617 = vst [vmem:[#allocation2 + $0x8] sm:$0xe0] %v613
        %618 = vst [vmem:[#allocation2 + $0x10] sm:$0x1f] %v612
        %619 = vst [vmem:[#allocation2 + $0x18] sm:$0x1f] %v613
        %v620 = vld [vmem:[#allocation2] sm:$0xff]
        %v621 = vld [vmem:[#allocation2 + $0x8] sm:$0xff]
        %s622 = scalar_lea.vmem [#allocation11], 33
        %v623 = vld [vmem:[%s622] ss:$8 sm:$0x3]
        %v625 = vlaneseq
        %v626 = vshrl.u32 %v625, 7
        %v627 = vsub.s32 0, %v626
        %v628 = vrot.slane %v623, %v627
        %v629 = vlaneseq
        %v630 = vshrl.u32 %v629, 7
        %v631 = vsub.s32 1, %v630
        %v632 = vrot.slane %v623, %v631
        %v635 = vmul.f32 %v620, %v628
        %v636 = vmul.f32 %v621, %v632
        %v637 = vld [vmem:[#allocation2] sm:$0xfe]
        %v638 = vld [vmem:[#allocation2 + $0x8] sm:$0xfe]
        %v639 = vld [vmem:[#allocation2 + $0x10] sm:$0x1]
        %v640 = vld [vmem:[#allocation2 + $0x18] sm:$0x1]
        %s641 = scalar_lea.vmem [#allocation11], 34
        %v642 = vld [vmem:[%s641] ss:$8 sm:$0x3]
        %v644 = vlaneseq
        %v645 = vshrl.u32 %v644, 7
        %v646 = vsub.s32 0, %v645
        %v647 = vrot.slane %v642, %v646
        %v648 = vlaneseq
        %v649 = vshrl.u32 %v648, 7
        %v650 = vsub.s32 1, %v649
        %v651 = vrot.slane %v642, %v650
        %v654 = vmul.f32 %v637, %v647
        %v655 = vmul.f32 %v638, %v651
        %v656 = vmul.f32 %v639, %v647
        %v657 = vmul.f32 %v640, %v651
        %vm662 = vcmask 1046528
        %v663 = vrot.slane %v654, 1
        %v664 = vrot.slane %v656, 1
        %v665 = vsel %vm662, %v663, %v664
        %v666 = vrot.slane %v655, 1
        %v667 = vrot.slane %v657, 1
        %v668 = vsel %vm662, %v666, %v667
        %v671 = vadd.f32 %v635, %v665
        %v672 = vadd.f32 %v636, %v668
        %v673 = vld [vmem:[#allocation2] sm:$0xfc]
        %v674 = vld [vmem:[#allocation2 + $0x8] sm:$0xfc]
        %v675 = vld [vmem:[#allocation2 + $0x10] sm:$0x3]
        %v676 = vld [vmem:[#allocation2 + $0x18] sm:$0x3]
        %s677 = scalar_lea.vmem [#allocation11], 35
        %v678 = vld [vmem:[%s677] ss:$8 sm:$0x3]
        %v680 = vlaneseq
        %v681 = vshrl.u32 %v680, 7
        %v682 = vsub.s32 0, %v681
        %v683 = vrot.slane %v678, %v682
        %v684 = vlaneseq
        %v685 = vshrl.u32 %v684, 7
        %v686 = vsub.s32 1, %v685
        %v687 = vrot.slane %v678, %v686
        %v690 = vmul.f32 %v673, %v683
        %v691 = vmul.f32 %v674, %v687
        %v692 = vmul.f32 %v675, %v683
        %v693 = vmul.f32 %v676, %v687
        %vm698 = vcmask 1045504
        %v699 = vrot.slane %v690, 2
        %v700 = vrot.slane %v692, 2
        %v701 = vsel %vm698, %v699, %v700
        %v702 = vrot.slane %v691, 2
        %v703 = vrot.slane %v693, 2
        %v704 = vsel %vm698, %v702, %v703
        %v707 = vadd.f32 %v671, %v701
        %v708 = vadd.f32 %v672, %v704
        %v709 = vld [vmem:[#allocation2] sm:$0xf8]
        %v710 = vld [vmem:[#allocation2 + $0x8] sm:$0xf8]
        %v711 = vld [vmem:[#allocation2 + $0x10] sm:$0x7]
        %v712 = vld [vmem:[#allocation2 + $0x18] sm:$0x7]
        %s713 = scalar_lea.vmem [#allocation11], 17
        %v714 = vld [vmem:[%s713] ss:$8 sm:$0x3]
        %v716 = vlaneseq
        %v717 = vshrl.u32 %v716, 7
        %v718 = vsub.s32 0, %v717
        %v719 = vrot.slane %v714, %v718
        %v720 = vlaneseq
        %v721 = vshrl.u32 %v720, 7
        %v722 = vsub.s32 1, %v721
        %v723 = vrot.slane %v714, %v722
        %v726 = vmul.f32 %v709, %v719
        %v727 = vmul.f32 %v710, %v723
        %v728 = vmul.f32 %v711, %v719
        %v729 = vmul.f32 %v712, %v723
        %s730 = scalar_lea.vmem [#allocation11], 36
        %v731 = vld [vmem:[%s730] ss:$8 sm:$0x3]
        %v733 = vlaneseq
        %v734 = vshrl.u32 %v733, 7
        %v735 = vsub.s32 0, %v734
        %v736 = vrot.slane %v731, %v735
        %v737 = vlaneseq
        %v738 = vshrl.u32 %v737, 7
        %v739 = vsub.s32 1, %v738
        %v740 = vrot.slane %v731, %v739
        %v743 = vmul.f32 %v709, %v736
        %v744 = vmul.f32 %v710, %v740
        %v745 = vmul.f32 %v711, %v736
        %v746 = vmul.f32 %v712, %v740
        %vm751 = vcmask 1044480
        %v752 = vrot.slane %v743, 3
        %v753 = vrot.slane %v745, 3
        %v754 = vsel %vm751, %v752, %v753
        %v755 = vrot.slane %v744, 3
        %v756 = vrot.slane %v746, 3
        %v757 = vsel %vm751, %v755, %v756
        %v760 = vadd.f32 %v707, %v754
        %v761 = vadd.f32 %v708, %v757
        %v762 = vld [vmem:[#allocation2] sm:$0xf0]
        %v763 = vld [vmem:[#allocation2 + $0x8] sm:$0xf0]
        %v764 = vld [vmem:[#allocation2 + $0x10] sm:$0xf]
        %v765 = vld [vmem:[#allocation2 + $0x18] sm:$0xf]
        %s766 = scalar_lea.vmem [#allocation11], 18
        %v767 = vld [vmem:[%s766] ss:$8 sm:$0x3]
        %v769 = vlaneseq
        %v770 = vshrl.u32 %v769, 7
        %v771 = vsub.s32 0, %v770
        %v772 = vrot.slane %v767, %v771
        %v773 = vlaneseq
        %v774 = vshrl.u32 %v773, 7
        %v775 = vsub.s32 1, %v774
        %v776 = vrot.slane %v767, %v775
        %v779 = vmul.f32 %v762, %v772
        %v780 = vmul.f32 %v763, %v776
        %v781 = vmul.f32 %v764, %v772
        %v782 = vmul.f32 %v765, %v776
        %v787 = vrot.slane %v779, 1
        %v788 = vrot.slane %v781, 1
        %v789 = vsel %vm662, %v787, %v788
        %v790 = vrot.slane %v780, 1
        %v791 = vrot.slane %v782, 1
        %v792 = vsel %vm662, %v790, %v791
        %v797 = vadd.f32 %v726, %v789
        %v798 = vadd.f32 %v727, %v792
        %v799 = vadd.f32 %v728, %v788
        %v800 = vadd.f32 %v729, %v791
        %s801 = scalar_lea.vmem [#allocation11], 22
        %v802 = vld [vmem:[%s801] ss:$8 sm:$0x3]
        %v804 = vlaneseq
        %v805 = vshrl.u32 %v804, 7
        %v806 = vsub.s32 0, %v805
        %v807 = vrot.slane %v802, %v806
        %v808 = vlaneseq
        %v809 = vshrl.u32 %v808, 7
        %v810 = vsub.s32 1, %v809
        %v811 = vrot.slane %v802, %v810
        %v814 = vmul.f32 %v762, %v807
        %v815 = vmul.f32 %v763, %v811
        %v816 = vmul.f32 %v764, %v807
        %v817 = vmul.f32 %v765, %v811
        %s818 = scalar_lea.vmem [#allocation11], 37
        %v819 = vld [vmem:[%s818] ss:$8 sm:$0x3]
        %v821 = vlaneseq
        %v822 = vshrl.u32 %v821, 7
        %v823 = vsub.s32 0, %v822
        %v824 = vrot.slane %v819, %v823
        %v825 = vlaneseq
        %v826 = vshrl.u32 %v825, 7
        %v827 = vsub.s32 1, %v826
        %v828 = vrot.slane %v819, %v827
        %v831 = vmul.f32 %v762, %v824
        %v832 = vmul.f32 %v763, %v828
        %v833 = vmul.f32 %v764, %v824
        %v834 = vmul.f32 %v765, %v828
        %vm839 = vcmask 1043456
        %v840 = vrot.slane %v831, 4
        %v841 = vrot.slane %v833, 4
        %v842 = vsel %vm839, %v840, %v841
        %v843 = vrot.slane %v832, 4
        %v844 = vrot.slane %v834, 4
        %v845 = vsel %vm839, %v843, %v844
        %v848 = vadd.f32 %v760, %v842
        %v849 = vadd.f32 %v761, %v845
        %v850 = vld [vmem:[#allocation2] sm:$0xe0]
        %v851 = vld [vmem:[#allocation2 + $0x8] sm:$0xe0]
        %v852 = vld [vmem:[#allocation2 + $0x10] sm:$0x1f]
        %v853 = vld [vmem:[#allocation2 + $0x18] sm:$0x1f]
        %s854 = scalar_lea.vmem [#allocation11], 19
        %v855 = vld [vmem:[%s854] ss:$8 sm:$0x3]
        %v857 = vlaneseq
        %v858 = vshrl.u32 %v857, 7
        %v859 = vsub.s32 0, %v858
        %v860 = vrot.slane %v855, %v859
        %v861 = vlaneseq
        %v862 = vshrl.u32 %v861, 7
        %v863 = vsub.s32 1, %v862
        %v864 = vrot.slane %v855, %v863
        %v867 = vmul.f32 %v850, %v860
        %v868 = vmul.f32 %v851, %v864
        %v869 = vmul.f32 %v852, %v860
        %v870 = vmul.f32 %v853, %v864
        %v875 = vrot.slane %v867, 2
        %v876 = vrot.slane %v869, 2
        %v877 = vsel %vm698, %v875, %v876
        %v878 = vrot.slane %v868, 2
        %v879 = vrot.slane %v870, 2
        %v880 = vsel %vm698, %v878, %v879
        %v885 = vadd.f32 %v797, %v877
        %v886 = vadd.f32 %v798, %v880
        %v887 = vadd.f32 %v799, %v876
        %v888 = vadd.f32 %v800, %v879
        %s889 = scalar_lea.vmem [#allocation11], 23
        %v890 = vld [vmem:[%s889] ss:$8 sm:$0x3]
        %v892 = vlaneseq
        %v893 = vshrl.u32 %v892, 7
        %v894 = vsub.s32 0, %v893
        %v895 = vrot.slane %v890, %v894
        %v896 = vlaneseq
        %v897 = vshrl.u32 %v896, 7
        %v898 = vsub.s32 1, %v897
        %v899 = vrot.slane %v890, %v898
        %v902 = vmul.f32 %v850, %v895
        %v903 = vmul.f32 %v851, %v899
        %v904 = vmul.f32 %v852, %v895
        %v905 = vmul.f32 %v853, %v899
        %v910 = vrot.slane %v902, 1
        %v911 = vrot.slane %v904, 1
        %v912 = vsel %vm662, %v910, %v911
        %v913 = vrot.slane %v903, 1
        %v914 = vrot.slane %v905, 1
        %v915 = vsel %vm662, %v913, %v914
        %v920 = vadd.f32 %v814, %v912
        %v921 = vadd.f32 %v815, %v915
        %v922 = vadd.f32 %v816, %v911
        %v923 = vadd.f32 %v817, %v914
        %s924 = scalar_lea.vmem [#allocation11], 38
        %v925 = vld [vmem:[%s924] ss:$8 sm:$0x3]
        %v927 = vlaneseq
        %v928 = vshrl.u32 %v927, 7
        %v929 = vsub.s32 0, %v928
        %v930 = vrot.slane %v925, %v929
        %v931 = vlaneseq
        %v932 = vshrl.u32 %v931, 7
        %v933 = vsub.s32 1, %v932
        %v934 = vrot.slane %v925, %v933
        %v937 = vmul.f32 %v850, %v930
        %v938 = vmul.f32 %v851, %v934
        %v939 = vmul.f32 %v852, %v930
        %v940 = vmul.f32 %v853, %v934
        %vm945 = vcmask 1042432
        %v946 = vrot.slane %v937, 5
        %v947 = vrot.slane %v939, 5
        %v948 = vsel %vm945, %v946, %v947
        %v949 = vrot.slane %v938, 5
        %v950 = vrot.slane %v940, 5
        %v951 = vsel %vm945, %v949, %v950
        %v954 = vadd.f32 %v848, %v948
        %v955 = vadd.f32 %v849, %v951
        %v956 = vld [vmem:[#allocation2] sm:$0xc0]
        %v957 = vld [vmem:[#allocation2 + $0x8] sm:$0xc0]
        %v958 = vld [vmem:[#allocation2 + $0x10] sm:$0x3f]
        %v959 = vld [vmem:[#allocation2 + $0x18] sm:$0x3f]
        %s960 = scalar_lea.vmem [#allocation11], 20
        %v961 = vld [vmem:[%s960] ss:$8 sm:$0x3]
        %v963 = vlaneseq
        %v964 = vshrl.u32 %v963, 7
        %v965 = vsub.s32 0, %v964
        %v966 = vrot.slane %v961, %v965
        %v967 = vlaneseq
        %v968 = vshrl.u32 %v967, 7
        %v969 = vsub.s32 1, %v968
        %v970 = vrot.slane %v961, %v969
        %v973 = vmul.f32 %v956, %v966
        %v974 = vmul.f32 %v957, %v970
        %v975 = vmul.f32 %v958, %v966
        %v976 = vmul.f32 %v959, %v970
        %v981 = vrot.slane %v973, 3
        %v982 = vrot.slane %v975, 3
        %v983 = vsel %vm751, %v981, %v982
        %v984 = vrot.slane %v974, 3
        %v985 = vrot.slane %v976, 3
        %v986 = vsel %vm751, %v984, %v985
        %v991 = vadd.f32 %v885, %v983
        %v992 = vadd.f32 %v886, %v986
        %v993 = vadd.f32 %v887, %v982
        %v994 = vadd.f32 %v888, %v985
        %s995 = scalar_lea.vmem [#allocation11], 32
        %v996 = vld [vmem:[%s995] ss:$8 sm:$0x3]
        %v998 = vlaneseq
        %v999 = vshrl.u32 %v998, 7
        %v1000 = vsub.s32 0, %v999
        %v1001 = vrot.slane %v996, %v1000
        %v1002 = vlaneseq
        %v1003 = vshrl.u32 %v1002, 7
        %v1004 = vsub.s32 1, %v1003
        %v1005 = vrot.slane %v996, %v1004
        %v1008 = vmul.f32 %v956, %v1001
        %v1009 = vmul.f32 %v957, %v1005
        %v1010 = vmul.f32 %v958, %v1001
        %v1011 = vmul.f32 %v959, %v1005
        %v1016 = vrot.slane %v1008, 2
        %v1017 = vrot.slane %v1010, 2
        %v1018 = vsel %vm698, %v1016, %v1017
        %v1019 = vrot.slane %v1009, 2
        %v1020 = vrot.slane %v1011, 2
        %v1021 = vsel %vm698, %v1019, %v1020
        %v1026 = vadd.f32 %v920, %v1018
        %v1027 = vadd.f32 %v921, %v1021
        %v1028 = vadd.f32 %v922, %v1017
        %v1029 = vadd.f32 %v923, %v1020
        %s1030 = scalar_lea.vmem [#allocation11], 39
        %v1031 = vld [vmem:[%s1030] ss:$8 sm:$0x3]
        %v1033 = vlaneseq
        %v1034 = vshrl.u32 %v1033, 7
        %v1035 = vsub.s32 0, %v1034
        %v1036 = vrot.slane %v1031, %v1035
        %v1037 = vlaneseq
        %v1038 = vshrl.u32 %v1037, 7
        %v1039 = vsub.s32 1, %v1038
        %v1040 = vrot.slane %v1031, %v1039
        %v1043 = vmul.f32 %v956, %v1036
        %v1044 = vmul.f32 %v957, %v1040
        %v1045 = vmul.f32 %v958, %v1036
        %v1046 = vmul.f32 %v959, %v1040
        %vm1051 = vcmask 1041408
        %v1052 = vrot.slane %v1043, 6
        %v1053 = vrot.slane %v1045, 6
        %v1054 = vsel %vm1051, %v1052, %v1053
        %v1055 = vrot.slane %v1044, 6
        %v1056 = vrot.slane %v1046, 6
        %v1057 = vsel %vm1051, %v1055, %v1056
        %v1060 = vadd.f32 %v954, %v1054
        %v1061 = vadd.f32 %v955, %v1057
        %v1062 = vld [vmem:[#allocation2] sm:$0x80]
        %v1063 = vld [vmem:[#allocation2 + $0x8] sm:$0x80]
        %v1064 = vld [vmem:[#allocation2 + $0x10] sm:$0x7f]
        %v1065 = vld [vmem:[#allocation2 + $0x18] sm:$0x7f]
        %s1066 = scalar_lea.vmem [#allocation11], 21
        %v1067 = vld [vmem:[%s1066] ss:$8 sm:$0x3]
        %v1069 = vlaneseq
        %v1070 = vshrl.u32 %v1069, 7
        %v1071 = vsub.s32 0, %v1070
        %v1072 = vrot.slane %v1067, %v1071
        %v1073 = vlaneseq
        %v1074 = vshrl.u32 %v1073, 7
        %v1075 = vsub.s32 1, %v1074
        %v1076 = vrot.slane %v1067, %v1075
        %v1079 = vmul.f32 %v1062, %v1072
        %v1080 = vmul.f32 %v1063, %v1076
        %v1081 = vmul.f32 %v1064, %v1072
        %v1082 = vmul.f32 %v1065, %v1076
        %v1087 = vrot.slane %v1079, 4
        %v1088 = vrot.slane %v1081, 4
        %v1089 = vsel %vm839, %v1087, %v1088
        %v1090 = vrot.slane %v1080, 4
        %v1091 = vrot.slane %v1082, 4
        %v1092 = vsel %vm839, %v1090, %v1091
        %v1097 = vadd.f32 %v991, %v1089
        %v1098 = vadd.f32 %v992, %v1092
        %v1099 = vadd.f32 %v993, %v1088
        %v1100 = vadd.f32 %v994, %v1091
        %s1101 = scalar_lea.vmem [#allocation11], 48
        %v1102 = vld [vmem:[%s1101] ss:$8 sm:$0x3]
        %v1104 = vlaneseq
        %v1105 = vshrl.u32 %v1104, 7
        %v1106 = vsub.s32 0, %v1105
        %v1107 = vrot.slane %v1102, %v1106
        %v1108 = vlaneseq
        %v1109 = vshrl.u32 %v1108, 7
        %v1110 = vsub.s32 1, %v1109
        %v1111 = vrot.slane %v1102, %v1110
        %v1114 = vmul.f32 %v1062, %v1107
        %v1115 = vmul.f32 %v1063, %v1111
        %v1116 = vmul.f32 %v1064, %v1107
        %v1117 = vmul.f32 %v1065, %v1111
        %vm1122 = vcmask 1040384
        %v1123 = vrot.slane %v1114, 7
        %v1124 = vrot.slane %v1116, 7
        %v1125 = vsel %vm1122, %v1123, %v1124
        %v1126 = vrot.slane %v1115, 7
        %v1127 = vrot.slane %v1117, 7
        %v1128 = vsel %vm1122, %v1126, %v1127
        %v1131 = vadd.f32 %v1060, %v1125
        %v1132 = vadd.f32 %v1061, %v1128
        %v1133 = vld [vmem:[#allocation2 + $0x10] sm:$0xff]
        %v1134 = vld [vmem:[#allocation2 + $0x18] sm:$0xff]
        %s1135 = scalar_lea.vmem [#allocation11], 49
        %v1136 = vld [vmem:[%s1135] ss:$8 sm:$0x3]
        %v1138 = vlaneseq
        %v1139 = vshrl.u32 %v1138, 7
        %v1140 = vsub.s32 0, %v1139
        %v1141 = vrot.slane %v1136, %v1140
        %v1142 = vlaneseq
        %v1143 = vshrl.u32 %v1142, 7
        %v1144 = vsub.s32 1, %v1143
        %v1145 = vrot.slane %v1136, %v1144
        %v1148 = vmul.f32 %v1133, %v1141
        %v1149 = vmul.f32 %v1134, %v1145
        %v1150 = vadd.f32 %v1131, %v1148
        %v1151 = vadd.f32 %v1132, %v1149
        %v1152 = vld [vmem:[#allocation2 + $0x10] sm:$0xfe]
        %v1153 = vld [vmem:[#allocation2 + $0x18] sm:$0xfe]
        %v1154 = vld [vmem:[#allocation2 + $0x20] sm:$0x1]
        %v1155 = vld [vmem:[#allocation2 + $0x28] sm:$0x1]
        %s1156 = scalar_lea.vmem [#allocation11], 50
        %v1157 = vld [vmem:[%s1156] ss:$8 sm:$0x3]
        %v1159 = vlaneseq
        %v1160 = vshrl.u32 %v1159, 7
        %v1161 = vsub.s32 0, %v1160
        %v1162 = vrot.slane %v1157, %v1161
        %v1163 = vlaneseq
        %v1164 = vshrl.u32 %v1163, 7
        %v1165 = vsub.s32 1, %v1164
        %v1166 = vrot.slane %v1157, %v1165
        %v1169 = vmul.f32 %v1152, %v1162
        %v1170 = vmul.f32 %v1153, %v1166
        %v1171 = vmul.f32 %v1154, %v1162
        %v1172 = vmul.f32 %v1155, %v1166
        %v1177 = vrot.slane %v1169, 1
        %v1178 = vrot.slane %v1171, 1
        %v1179 = vsel %vm662, %v1177, %v1178
        %v1180 = vrot.slane %v1170, 1
        %v1181 = vrot.slane %v1172, 1
        %v1182 = vsel %vm662, %v1180, %v1181
        %v1185 = vadd.f32 %v1150, %v1179
        %v1186 = vadd.f32 %v1151, %v1182
        %v1187 = vld [vmem:[#allocation2 + $0x10] sm:$0xfc]
        %v1188 = vld [vmem:[#allocation2 + $0x18] sm:$0xfc]
        %v1189 = vld [vmem:[#allocation2 + $0x20] sm:$0x3]
        %v1190 = vld [vmem:[#allocation2 + $0x28] sm:$0x3]
        %s1191 = scalar_lea.vmem [#allocation11], 51
        %v1192 = vld [vmem:[%s1191] ss:$8 sm:$0x3]
        %v1194 = vlaneseq
        %v1195 = vshrl.u32 %v1194, 7
        %v1196 = vsub.s32 0, %v1195
        %v1197 = vrot.slane %v1192, %v1196
        %v1198 = vlaneseq
        %v1199 = vshrl.u32 %v1198, 7
        %v1200 = vsub.s32 1, %v1199
        %v1201 = vrot.slane %v1192, %v1200
        %v1204 = vmul.f32 %v1187, %v1197
        %v1205 = vmul.f32 %v1188, %v1201
        %v1206 = vmul.f32 %v1189, %v1197
        %v1207 = vmul.f32 %v1190, %v1201
        %v1212 = vrot.slane %v1204, 2
        %v1213 = vrot.slane %v1206, 2
        %v1214 = vsel %vm698, %v1212, %v1213
        %v1215 = vrot.slane %v1205, 2
        %v1216 = vrot.slane %v1207, 2
        %v1217 = vsel %vm698, %v1215, %v1216
        %v1220 = vadd.f32 %v1185, %v1214
        %v1221 = vadd.f32 %v1186, %v1217
        %s1222 = scalar_lea.vmem [#allocation11], 2
        %v1223 = vld [vmem:[%s1222] ss:$8 sm:$0x3]
        %v1225 = vlaneseq
        %v1226 = vshrl.u32 %v1225, 7
        %v1227 = vsub.s32 0, %v1226
        %v1228 = vrot.slane %v1223, %v1227
        %v1229 = vlaneseq
        %v1230 = vshrl.u32 %v1229, 7
        %v1231 = vsub.s32 1, %v1230
        %v1232 = vrot.slane %v1223, %v1231
        %v1235 = vadd.f32 %v1097, %v1228
        %v1236 = vadd.f32 %v1098, %v1232
        %v1237 = vadd.f32 %v1099, %v1228
        %v1238 = vadd.f32 %v1100, %v1232
        %v1239 = vmax.f32 %v1235, 0.0
        %v1240 = vmax.f32 %v1236, 0.0
        %v1241 = vmax.f32 %v1237, 0.0
        %v1242 = vmax.f32 %v1238, 0.0
        %s1243 = scalar_lea.vmem [#allocation11], 52
        %v1244 = vld [vmem:[%s1243] ss:$8 sm:$0x3]
        %v1249 = vrot.slane %v1239, 3
        %v1250 = vrot.slane %v1241, 3
        %v1251 = vsel %vm751, %v1249, %v1250
        %v1252 = vrot.slane %v1240, 3
        %v1253 = vrot.slane %v1242, 3
        %v1254 = vsel %vm751, %v1252, %v1253
        %1257 = vrot.lane.b32.xlu0 %v1251, 64
        %v1258 = vpop.permute.xlu0 %1257
        %1259 = vrot.lane.b32.xlu0 %v1254, 64
        %v1260 = vpop.permute.xlu0 %1259
        %v1261 = vlaneseq
        %v1262 = vand.u32 %v1261, 127
        %vm1263 = vcmp.lt.s32.totalorder %v1262, 64
        %v1264 = vsel %vm1263, %v1258, %v1260
        %v1265 = vsel %vm1263, %v1260, %v1258
        %v1267 = vlaneseq
        %v1268 = vshrl.u32 %v1267, 7
        %v1269 = vsub.s32 0, %v1268
        %v1270 = vrot.slane %v1244, %v1269
        %v1271 = vlaneseq
        %v1272 = vshrl.u32 %v1271, 7
        %v1273 = vsub.s32 1, %v1272
        %v1274 = vrot.slane %v1244, %v1273
        %v1277 = vmul.f32 %v1265, %v1270
        %v1278 = vmul.f32 %v1264, %v1274
        %s1279 = scalar_lea.vmem [#allocation11], 53
        %v1280 = vld [vmem:[%s1279] ss:$8 sm:$0x3]
        %1281 = vrot.lane.b32.xlu0 %v1251, 32
        %v1282 = vpop.permute.xlu0 %1281
        %1283 = vrot.lane.b32.xlu0 %v1254, 32
        %v1284 = vpop.permute.xlu0 %1283
        %vm1285 = vcmp.lt.s32.totalorder %v1262, 32
        %v1286 = vsel %vm1285, %v1282, %v1284
        %v1287 = vsel %vm1285, %v1284, %v1282
        %v1289 = vlaneseq
        %v1290 = vshrl.u32 %v1289, 7
        %v1291 = vsub.s32 0, %v1290
        %v1292 = vrot.slane %v1280, %v1291
        %v1293 = vlaneseq
        %v1294 = vshrl.u32 %v1293, 7
        %v1295 = vsub.s32 1, %v1294
        %v1296 = vrot.slane %v1280, %v1295
        %v1299 = vmul.f32 %v1287, %v1292
        %v1300 = vmul.f32 %v1286, %v1296
        %v1301 = vadd.f32 %v1277, %v1299
        %v1302 = vadd.f32 %v1278, %v1300
        %s1303 = scalar_lea.vmem [#allocation11], 54
        %v1304 = vld [vmem:[%s1303] ss:$8 sm:$0x3]
        %v1306 = vlaneseq
        %v1307 = vshrl.u32 %v1306, 7
        %v1308 = vsub.s32 0, %v1307
        %v1309 = vrot.slane %v1304, %v1308
        %v1310 = vlaneseq
        %v1311 = vshrl.u32 %v1310, 7
        %v1312 = vsub.s32 1, %v1311
        %v1313 = vrot.slane %v1304, %v1312
        %v1316 = vmul.f32 %v1239, %v1309
        %v1317 = vmul.f32 %v1240, %v1313
        %v1318 = vmul.f32 %v1241, %v1309
        %v1319 = vmul.f32 %v1242, %v1313
        %v1324 = vrot.slane %v1316, 3
        %v1325 = vrot.slane %v1318, 3
        %v1326 = vsel %vm751, %v1324, %v1325
        %v1327 = vrot.slane %v1317, 3
        %v1328 = vrot.slane %v1319, 3
        %v1329 = vsel %vm751, %v1327, %v1328
        %v1332 = vadd.f32 %v1301, %v1326
        %v1333 = vadd.f32 %v1302, %v1329
        %s1334 = scalar_lea.vmem [#allocation11], 55
        %v1335 = vld [vmem:[%s1334] ss:$8 sm:$0x3]
        %1336 = vrot.lane.b32.xlu0 %v1251, 96
        %v1337 = vpop.permute.xlu0 %1336
        %1338 = vrot.lane.b32.xlu0 %v1254, 96
        %v1339 = vpop.permute.xlu0 %1338
        %vm1340 = vcmp.lt.s32.totalorder %v1262, 96
        %v1341 = vsel %vm1340, %v1337, %v1339
        %v1342 = vsel %vm1340, %v1339, %v1337
        %v1344 = vlaneseq
        %v1345 = vshrl.u32 %v1344, 7
        %v1346 = vsub.s32 0, %v1345
        %v1347 = vrot.slane %v1335, %v1346
        %v1348 = vlaneseq
        %v1349 = vshrl.u32 %v1348, 7
        %v1350 = vsub.s32 1, %v1349
        %v1351 = vrot.slane %v1335, %v1350
        %v1354 = vmul.f32 %v1341, %v1347
        %v1355 = vmul.f32 %v1342, %v1351
        %v1356 = vadd.f32 %v1332, %v1354
        %v1357 = vadd.f32 %v1333, %v1355
        %s1358 = scalar_lea.vmem [#allocation11], 64
        %v1359 = vld [vmem:[%s1358] ss:$8 sm:$0x3]
        %v1361 = vlaneseq
        %v1362 = vshrl.u32 %v1361, 7
        %v1363 = vsub.s32 0, %v1362
        %v1364 = vrot.slane %v1359, %v1363
        %v1365 = vlaneseq
        %v1366 = vshrl.u32 %v1365, 7
        %v1367 = vsub.s32 1, %v1366
        %v1368 = vrot.slane %v1359, %v1367
        %v1371 = vmul.f32 %v1264, %v1364
        %v1372 = vmul.f32 %v1265, %v1368
        %v1373 = vadd.f32 %v1356, %v1371
        %v1374 = vadd.f32 %v1357, %v1372
        %s1375 = scalar_lea.vmem [#allocation11], 5
        %v1376 = vld [vmem:[%s1375] ss:$8 sm:$0x3]
        %v1378 = vlaneseq
        %v1379 = vshrl.u32 %v1378, 7
        %v1380 = vsub.s32 0, %v1379
        %v1381 = vrot.slane %v1376, %v1380
        %v1382 = vlaneseq
        %v1383 = vshrl.u32 %v1382, 7
        %v1384 = vsub.s32 1, %v1383
        %v1385 = vrot.slane %v1376, %v1384
        %v1388 = vadd.f32 %v1373, %v1381
        %v1389 = vadd.f32 %v1374, %v1385
        %v1390 = vmax.f32 %v1388, 0.0
        %v1391 = vmax.f32 %v1389, 0.0
        %s1392 = scalar_lea.vmem [#allocation11], 3
        %v1393 = vld [vmem:[%s1392] ss:$8 sm:$0x3]
        %v1395 = vlaneseq
        %v1396 = vshrl.u32 %v1395, 7
        %v1397 = vsub.s32 0, %v1396
        %v1398 = vrot.slane %v1393, %v1397
        %v1399 = vlaneseq
        %v1400 = vshrl.u32 %v1399, 7
        %v1401 = vsub.s32 1, %v1400
        %v1402 = vrot.slane %v1393, %v1401
        %v1405 = vadd.f32 %v1026, %v1398
        %v1406 = vadd.f32 %v1027, %v1402
        %v1407 = vadd.f32 %v1028, %v1398
        %v1408 = vadd.f32 %v1029, %v1402
        %v1409 = vmax.f32 %v1405, 0.0
        %v1410 = vmax.f32 %v1406, 0.0
        %v1411 = vmax.f32 %v1407, 0.0
        %v1412 = vmax.f32 %v1408, 0.0
        %s1413 = scalar_lea.vmem [#allocation11], 65
        %v1414 = vld [vmem:[%s1413] ss:$8 sm:$0x3]
        %v1419 = vrot.slane %v1409, 4
        %v1420 = vrot.slane %v1411, 4
        %v1421 = vsel %vm839, %v1419, %v1420
        %v1422 = vrot.slane %v1410, 4
        %v1423 = vrot.slane %v1412, 4
        %v1424 = vsel %vm839, %v1422, %v1423
        %1427 = vrot.lane.b32.xlu0 %v1421, 32
        %v1428 = vpop.permute.xlu0 %1427
        %1429 = vrot.lane.b32.xlu0 %v1424, 32
        %v1430 = vpop.permute.xlu0 %1429
        %v1431 = vsel %vm1285, %v1428, %v1430
        %v1432 = vsel %vm1285, %v1430, %v1428
        %v1434 = vlaneseq
        %v1435 = vshrl.u32 %v1434, 7
        %v1436 = vsub.s32 0, %v1435
        %v1437 = vrot.slane %v1414, %v1436
        %v1438 = vlaneseq
        %v1439 = vshrl.u32 %v1438, 7
        %v1440 = vsub.s32 1, %v1439
        %v1441 = vrot.slane %v1414, %v1440
        %v1444 = vmul.f32 %v1432, %v1437
        %v1445 = vmul.f32 %v1431, %v1441
        %s1446 = scalar_lea.vmem [#allocation11], 66
        %v1447 = vld [vmem:[%s1446] ss:$8 sm:$0x3]
        %v1449 = vlaneseq
        %v1450 = vshrl.u32 %v1449, 7
        %v1451 = vsub.s32 0, %v1450
        %v1452 = vrot.slane %v1447, %v1451
        %v1453 = vlaneseq
        %v1454 = vshrl.u32 %v1453, 7
        %v1455 = vsub.s32 1, %v1454
        %v1456 = vrot.slane %v1447, %v1455
        %v1459 = vmul.f32 %v1409, %v1452
        %v1460 = vmul.f32 %v1410, %v1456
        %v1461 = vmul.f32 %v1411, %v1452
        %v1462 = vmul.f32 %v1412, %v1456
        %v1467 = vrot.slane %v1459, 4
        %v1468 = vrot.slane %v1461, 4
        %v1469 = vsel %vm839, %v1467, %v1468
        %v1470 = vrot.slane %v1460, 4
        %v1471 = vrot.slane %v1462, 4
        %v1472 = vsel %vm839, %v1470, %v1471
        %v1475 = vadd.f32 %v1444, %v1469
        %v1476 = vadd.f32 %v1445, %v1472
        %s1477 = scalar_lea.vmem [#allocation11], 67
        %v1478 = vld [vmem:[%s1477] ss:$8 sm:$0x3]
        %1479 = vrot.lane.b32.xlu0 %v1421, 96
        %v1480 = vpop.permute.xlu0 %1479
        %1481 = vrot.lane.b32.xlu0 %v1424, 96
        %v1482 = vpop.permute.xlu0 %1481
        %v1483 = vsel %vm1340, %v1480, %v1482
        %v1484 = vsel %vm1340, %v1482, %v1480
        %v1486 = vlaneseq
        %v1487 = vshrl.u32 %v1486, 7
        %v1488 = vsub.s32 0, %v1487
        %v1489 = vrot.slane %v1478, %v1488
        %v1490 = vlaneseq
        %v1491 = vshrl.u32 %v1490, 7
        %v1492 = vsub.s32 1, %v1491
        %v1493 = vrot.slane %v1478, %v1492
        %v1496 = vmul.f32 %v1483, %v1489
        %v1497 = vmul.f32 %v1484, %v1493
        %v1498 = vadd.f32 %v1475, %v1496
        %v1499 = vadd.f32 %v1476, %v1497
        %s1500 = scalar_lea.vmem [#allocation11], 6
        %v1501 = vld [vmem:[%s1500] ss:$8 sm:$0x3]
        %v1503 = vlaneseq
        %v1504 = vshrl.u32 %v1503, 7
        %v1505 = vsub.s32 0, %v1504
        %v1506 = vrot.slane %v1501, %v1505
        %v1507 = vlaneseq
        %v1508 = vshrl.u32 %v1507, 7
        %v1509 = vsub.s32 1, %v1508
        %v1510 = vrot.slane %v1501, %v1509
        %v1513 = vadd.f32 %v1498, %v1506
        %v1514 = vadd.f32 %v1499, %v1510
        %v1515 = vmax.f32 %v1513, 0.0
        %v1516 = vmax.f32 %v1514, 0.0
        %v1517 = vadd.f32 %v1390, %v1515
        %v1518 = vadd.f32 %v1391, %v1516
        %s1519 = scalar_lea.vmem [#allocation11], 4
        %v1520 = vld [vmem:[%s1519] ss:$8 sm:$0x3]
        %v1522 = vlaneseq
        %v1523 = vshrl.u32 %v1522, 7
        %v1524 = vsub.s32 0, %v1523
        %v1525 = vrot.slane %v1520, %v1524
        %v1526 = vlaneseq
        %v1527 = vshrl.u32 %v1526, 7
        %v1528 = vsub.s32 1, %v1527
        %v1529 = vrot.slane %v1520, %v1528
        %v1532 = vadd.f32 %v1220, %v1525
        %v1533 = vadd.f32 %v1221, %v1529
        %v1534 = vmax.f32 %v1532, 0.0
        %v1535 = vmax.f32 %v1533, 0.0
        %s1536 = scalar_lea.vmem [#allocation11], 68
        %v1537 = vld [vmem:[%s1536] ss:$8 sm:$0x3]
        %1538 = vrot.lane.b32.xlu0 %v1534, 32
        %v1539 = vpop.permute.xlu0 %1538
        %1540 = vrot.lane.b32.xlu0 %v1535, 32
        %v1541 = vpop.permute.xlu0 %1540
        %v1542 = vsel %vm1285, %v1539, %v1541
        %v1543 = vsel %vm1285, %v1541, %v1539
        %v1545 = vlaneseq
        %v1546 = vshrl.u32 %v1545, 7
        %v1547 = vsub.s32 0, %v1546
        %v1548 = vrot.slane %v1537, %v1547
        %v1549 = vlaneseq
        %v1550 = vshrl.u32 %v1549, 7
        %v1551 = vsub.s32 1, %v1550
        %v1552 = vrot.slane %v1537, %v1551
        %v1555 = vmul.f32 %v1542, %v1548
        %v1556 = vmul.f32 %v1543, %v1552
        %s1557 = scalar_lea.vmem [#allocation11], 69
        %v1558 = vld [vmem:[%s1557] ss:$8 sm:$0x3]
        %v1560 = vlaneseq
        %v1561 = vshrl.u32 %v1560, 7
        %v1562 = vsub.s32 0, %v1561
        %v1563 = vrot.slane %v1558, %v1562
        %v1564 = vlaneseq
        %v1565 = vshrl.u32 %v1564, 7
        %v1566 = vsub.s32 1, %v1565
        %v1567 = vrot.slane %v1558, %v1566
        %v1570 = vmul.f32 %v1535, %v1563
        %v1571 = vmul.f32 %v1534, %v1567
        %v1572 = vadd.f32 %v1555, %v1570
        %v1573 = vadd.f32 %v1556, %v1571
        %s1574 = scalar_lea.vmem [#allocation11], 70
        %v1575 = vld [vmem:[%s1574] ss:$8 sm:$0x3]
        %1576 = vrot.lane.b32.xlu0 %v1534, 96
        %v1577 = vpop.permute.xlu0 %1576
        %1578 = vrot.lane.b32.xlu0 %v1535, 96
        %v1579 = vpop.permute.xlu0 %1578
        %v1580 = vsel %vm1340, %v1577, %v1579
        %v1581 = vsel %vm1340, %v1579, %v1577
        %v1583 = vlaneseq
        %v1584 = vshrl.u32 %v1583, 7
        %v1585 = vsub.s32 0, %v1584
        %v1586 = vrot.slane %v1575, %v1585
        %v1587 = vlaneseq
        %v1588 = vshrl.u32 %v1587, 7
        %v1589 = vsub.s32 1, %v1588
        %v1590 = vrot.slane %v1575, %v1589
        %v1593 = vmul.f32 %v1581, %v1586
        %v1594 = vmul.f32 %v1580, %v1590
        %v1595 = vadd.f32 %v1572, %v1593
        %v1596 = vadd.f32 %v1573, %v1594
        %s1597 = scalar_lea.vmem [#allocation11], 71
        %v1598 = vld [vmem:[%s1597] ss:$8 sm:$0x3]
        %1599 = vrot.lane.b32.xlu0 %v1534, 64
        %v1600 = vpop.permute.xlu0 %1599
        %1601 = vrot.lane.b32.xlu0 %v1535, 64
        %v1602 = vpop.permute.xlu0 %1601
        %v1603 = vsel %vm1263, %v1600, %v1602
        %v1604 = vsel %vm1263, %v1602, %v1600
        %v1606 = vlaneseq
        %v1607 = vshrl.u32 %v1606, 7
        %v1608 = vsub.s32 0, %v1607
        %v1609 = vrot.slane %v1598, %v1608
        %v1610 = vlaneseq
        %v1611 = vshrl.u32 %v1610, 7
        %v1612 = vsub.s32 1, %v1611
        %v1613 = vrot.slane %v1598, %v1612
        %v1616 = vmul.f32 %v1604, %v1609
        %v1617 = vmul.f32 %v1603, %v1613
        %v1618 = vadd.f32 %v1595, %v1616
        %v1619 = vadd.f32 %v1596, %v1617
        %s1620 = scalar_lea.vmem [#allocation11], 80
        %v1621 = vld [vmem:[%s1620] ss:$8 sm:$0x3]
        %v1623 = vlaneseq
        %v1624 = vshrl.u32 %v1623, 7
        %v1625 = vsub.s32 0, %v1624
        %v1626 = vrot.slane %v1621, %v1625
        %v1627 = vlaneseq
        %v1628 = vshrl.u32 %v1627, 7
        %v1629 = vsub.s32 1, %v1628
        %v1630 = vrot.slane %v1621, %v1629
        %v1633 = vmul.f32 %v1543, %v1626
        %v1634 = vmul.f32 %v1542, %v1630
        %v1635 = vadd.f32 %v1618, %v1633
        %v1636 = vadd.f32 %v1619, %v1634
        %s1637 = scalar_lea.vmem [#allocation11], 81
        %v1638 = vld [vmem:[%s1637] ss:$8 sm:$0x3]
        %v1640 = vlaneseq
        %v1641 = vshrl.u32 %v1640, 7
        %v1642 = vsub.s32 0, %v1641
        %v1643 = vrot.slane %v1638, %v1642
        %v1644 = vlaneseq
        %v1645 = vshrl.u32 %v1644, 7
        %v1646 = vsub.s32 1, %v1645
        %v1647 = vrot.slane %v1638, %v1646
        %v1650 = vmul.f32 %v1534, %v1643
        %v1651 = vmul.f32 %v1535, %v1647
        %v1652 = vadd.f32 %v1635, %v1650
        %v1653 = vadd.f32 %v1636, %v1651
        %s1654 = scalar_lea.vmem [#allocation11], 82
        %v1655 = vld [vmem:[%s1654] ss:$8 sm:$0x3]
        %v1657 = vlaneseq
        %v1658 = vshrl.u32 %v1657, 7
        %v1659 = vsub.s32 0, %v1658
        %v1660 = vrot.slane %v1655, %v1659
        %v1661 = vlaneseq
        %v1662 = vshrl.u32 %v1661, 7
        %v1663 = vsub.s32 1, %v1662
        %v1664 = vrot.slane %v1655, %v1663
        %v1667 = vmul.f32 %v1580, %v1660
        %v1668 = vmul.f32 %v1581, %v1664
        %v1669 = vadd.f32 %v1652, %v1667
        %v1670 = vadd.f32 %v1653, %v1668
        %s1671 = scalar_lea.vmem [#allocation11], 83
        %v1672 = vld [vmem:[%s1671] ss:$8 sm:$0x3]
        %v1674 = vlaneseq
        %v1675 = vshrl.u32 %v1674, 7
        %v1676 = vsub.s32 0, %v1675
        %v1677 = vrot.slane %v1672, %v1676
        %v1678 = vlaneseq
        %v1679 = vshrl.u32 %v1678, 7
        %v1680 = vsub.s32 1, %v1679
        %v1681 = vrot.slane %v1672, %v1680
        %v1684 = vmul.f32 %v1603, %v1677
        %v1685 = vmul.f32 %v1604, %v1681
        %v1686 = vadd.f32 %v1669, %v1684
        %v1687 = vadd.f32 %v1670, %v1685
        %s1688 = scalar_lea.vmem [#allocation11], 84
        %v1689 = vld [vmem:[%s1688] ss:$8 sm:$0x3]
        %v1691 = vlaneseq
        %v1692 = vshrl.u32 %v1691, 7
        %v1693 = vsub.s32 0, %v1692
        %v1694 = vrot.slane %v1689, %v1693
        %v1695 = vlaneseq
        %v1696 = vshrl.u32 %v1695, 7
        %v1697 = vsub.s32 1, %v1696
        %v1698 = vrot.slane %v1689, %v1697
        %v1701 = vmul.f32 %v1542, %v1694
        %v1702 = vmul.f32 %v1543, %v1698
        %v1703 = vadd.f32 %v1686, %v1701
        %v1704 = vadd.f32 %v1687, %v1702
        %s1705 = scalar_lea.vmem [#allocation11], 85
        %v1706 = vld [vmem:[%s1705] ss:$8 sm:$0x3]
        %v1708 = vlaneseq
        %v1709 = vshrl.u32 %v1708, 7
        %v1710 = vsub.s32 0, %v1709
        %v1711 = vrot.slane %v1706, %v1710
        %v1712 = vlaneseq
        %v1713 = vshrl.u32 %v1712, 7
        %v1714 = vsub.s32 1, %v1713
        %v1715 = vrot.slane %v1706, %v1714
        %v1718 = vmul.f32 %v1535, %v1711
        %v1719 = vmul.f32 %v1534, %v1715
        %v1720 = vadd.f32 %v1703, %v1718
        %v1721 = vadd.f32 %v1704, %v1719
        %s1722 = scalar_lea.vmem [#allocation11], 86
        %v1723 = vld [vmem:[%s1722] ss:$8 sm:$0x3]
        %v1725 = vlaneseq
        %v1726 = vshrl.u32 %v1725, 7
        %v1727 = vsub.s32 0, %v1726
        %v1728 = vrot.slane %v1723, %v1727
        %v1729 = vlaneseq
        %v1730 = vshrl.u32 %v1729, 7
        %v1731 = vsub.s32 1, %v1730
        %v1732 = vrot.slane %v1723, %v1731
        %v1735 = vmul.f32 %v1581, %v1728
        %v1736 = vmul.f32 %v1580, %v1732
        %v1737 = vadd.f32 %v1720, %v1735
        %v1738 = vadd.f32 %v1721, %v1736
        %s1739 = scalar_lea.vmem [#allocation11], 7
        %v1740 = vld [vmem:[%s1739] ss:$8 sm:$0x3]
        %v1742 = vlaneseq
        %v1743 = vshrl.u32 %v1742, 7
        %v1744 = vsub.s32 0, %v1743
        %v1745 = vrot.slane %v1740, %v1744
        %v1746 = vlaneseq
        %v1747 = vshrl.u32 %v1746, 7
        %v1748 = vsub.s32 1, %v1747
        %v1749 = vrot.slane %v1740, %v1748
        %v1752 = vadd.f32 %v1737, %v1745
        %v1753 = vadd.f32 %v1738, %v1749
        %v1754 = vmax.f32 %v1752, 0.0
        %v1755 = vmax.f32 %v1753, 0.0
        %v1756 = vadd.f32 %v1517, %v1754
        %v1757 = vadd.f32 %v1518, %v1755
        %v1758 = vpack.c.bf16 %v1756, %v1756
        %v1759 = vpack.c.bf16 %v1757, %v1757
        %v1760 = vld [vmem:[#allocation9] sm:$0xff]
        %v1761 = vld [vmem:[#allocation9 + $0x8] sm:$0xff]
        %v1762 = vld [vmem:[#allocation9 + $0x10] sm:$0xff]
        %v1763 = vld [vmem:[#allocation9 + $0x18] sm:$0xff]
        %v1764 = vld [vmem:[#allocation9 + $0x20] sm:$0xff]
        %v1765 = vld [vmem:[#allocation9 + $0x28] sm:$0xff]
        %v1766 = vld [vmem:[#allocation9 + $0x30] sm:$0xff]
        %v1767 = vld [vmem:[#allocation9 + $0x38] sm:$0xff]
        %v1768 = vld [vmem:[#allocation9 + $0x40] sm:$0xff]
        %v1769 = vld [vmem:[#allocation9 + $0x48] sm:$0xff]
        %v1770 = vld [vmem:[#allocation9 + $0x50] sm:$0xff]
        %v1771 = vld [vmem:[#allocation9 + $0x58] sm:$0xff]
        %v1772 = vld [vmem:[#allocation9 + $0x60] sm:$0xff]
        %v1773 = vld [vmem:[#allocation9 + $0x68] sm:$0xff]
        %v1774 = vld [vmem:[#allocation9 + $0x70] sm:$0xff]
        %v1775 = vld [vmem:[#allocation9 + $0x78] sm:$0xff]
        %v1776 = vld [vmem:[#allocation9 + $0x80] sm:$0xff]
        %v1777 = vld [vmem:[#allocation9 + $0x88] sm:$0xff]
        %v1778 = vld [vmem:[#allocation9 + $0x90] sm:$0xff]
        %v1779 = vld [vmem:[#allocation9 + $0x98] sm:$0xff]
        %v1780 = vld [vmem:[#allocation9 + $0xa0] sm:$0xff]
        %v1781 = vld [vmem:[#allocation9 + $0xa8] sm:$0xff]
        %v1782 = vld [vmem:[#allocation9 + $0xb0] sm:$0xff]
        %v1783 = vld [vmem:[#allocation9 + $0xb8] sm:$0xff]
        %v1784 = vld [vmem:[#allocation9 + $0xc0] sm:$0xff]
        %v1785 = vld [vmem:[#allocation9 + $0xc8] sm:$0xff]
        %v1786 = vld [vmem:[#allocation9 + $0xd0] sm:$0xff]
        %v1787 = vld [vmem:[#allocation9 + $0xd8] sm:$0xff]
        %v1788 = vld [vmem:[#allocation9 + $0xe0] sm:$0xff]
        %v1789 = vld [vmem:[#allocation9 + $0xe8] sm:$0xff]
        %v1790 = vld [vmem:[#allocation9 + $0xf0] sm:$0xff]
        %v1791 = vld [vmem:[#allocation9 + $0xf8] sm:$0xff]
        %s1792 = scalar_lea.vmem [#allocation11], 16
        %v1793 = vld [vmem:[%s1792] ss:$8 sm:$0x3]
        %v1795 = vlaneseq
        %v1796 = vshrl.u32 %v1795, 7
        %v1797 = vsub.s32 0, %v1796
        %v1798 = vrot.slane %v1793, %v1797
        %v1799 = vlaneseq
        %v1800 = vshrl.u32 %v1799, 7
        %v1801 = vsub.s32 1, %v1800
        %v1802 = vrot.slane %v1793, %v1801
        %v1837 = vunpack.c.l.b16 %v1760
        %v1838 = vunpack.c.h.b16 %v1760
        %v1839 = vunpack.c.l.b16 %v1761
        %v1840 = vunpack.c.h.b16 %v1761
        %v1841 = vunpack.c.l.b16 %v1762
        %v1842 = vunpack.c.h.b16 %v1762
        %v1843 = vunpack.c.l.b16 %v1763
        %v1844 = vunpack.c.h.b16 %v1763
        %v1845 = vunpack.c.l.b16 %v1764
        %v1846 = vunpack.c.h.b16 %v1764
        %v1847 = vunpack.c.l.b16 %v1765
        %v1848 = vunpack.c.h.b16 %v1765
        %v1849 = vunpack.c.l.b16 %v1766
        %v1850 = vunpack.c.h.b16 %v1766
        %v1851 = vunpack.c.l.b16 %v1767
        %v1852 = vunpack.c.h.b16 %v1767
        %v1853 = vunpack.c.l.b16 %v1768
        %v1854 = vunpack.c.h.b16 %v1768
        %v1855 = vunpack.c.l.b16 %v1769
        %v1856 = vunpack.c.h.b16 %v1769
        %v1857 = vunpack.c.l.b16 %v1770
        %v1858 = vunpack.c.h.b16 %v1770
        %v1859 = vunpack.c.l.b16 %v1771
        %v1860 = vunpack.c.h.b16 %v1771
        %v1861 = vunpack.c.l.b16 %v1772
        %v1862 = vunpack.c.h.b16 %v1772
        %v1863 = vunpack.c.l.b16 %v1773
        %v1864 = vunpack.c.h.b16 %v1773
        %v1865 = vunpack.c.l.b16 %v1774
        %v1866 = vunpack.c.h.b16 %v1774
        %v1867 = vunpack.c.l.b16 %v1775
        %v1868 = vunpack.c.h.b16 %v1775
        %v1869 = vunpack.c.l.b16 %v1776
        %v1870 = vunpack.c.h.b16 %v1776
        %v1871 = vunpack.c.l.b16 %v1777
        %v1872 = vunpack.c.h.b16 %v1777
        %v1873 = vunpack.c.l.b16 %v1778
        %v1874 = vunpack.c.h.b16 %v1778
        %v1875 = vunpack.c.l.b16 %v1779
        %v1876 = vunpack.c.h.b16 %v1779
        %v1877 = vunpack.c.l.b16 %v1780
        %v1878 = vunpack.c.h.b16 %v1780
        %v1879 = vunpack.c.l.b16 %v1781
        %v1880 = vunpack.c.h.b16 %v1781
        %v1881 = vunpack.c.l.b16 %v1782
        %v1882 = vunpack.c.h.b16 %v1782
        %v1883 = vunpack.c.l.b16 %v1783
        %v1884 = vunpack.c.h.b16 %v1783
        %v1885 = vunpack.c.l.b16 %v1784
        %v1886 = vunpack.c.h.b16 %v1784
        %v1887 = vunpack.c.l.b16 %v1785
        %v1888 = vunpack.c.h.b16 %v1785
        %v1889 = vunpack.c.l.b16 %v1786
        %v1890 = vunpack.c.h.b16 %v1786
        %v1891 = vunpack.c.l.b16 %v1787
        %v1892 = vunpack.c.h.b16 %v1787
        %v1893 = vunpack.c.l.b16 %v1788
        %v1894 = vunpack.c.h.b16 %v1788
        %v1895 = vunpack.c.l.b16 %v1789
        %v1896 = vunpack.c.h.b16 %v1789
        %v1897 = vunpack.c.l.b16 %v1790
        %v1898 = vunpack.c.h.b16 %v1790
        %v1899 = vunpack.c.l.b16 %v1791
        %v1900 = vunpack.c.h.b16 %v1791
        %v1901 = vpack.c.b16 %v1839, %v1837
        %v1902 = vpack.c.b16 %v1840, %v1838
        %v1903 = vpack.c.b16 %v1843, %v1841
        %v1904 = vpack.c.b16 %v1844, %v1842
        %v1905 = vpack.c.b16 %v1847, %v1845
        %v1906 = vpack.c.b16 %v1848, %v1846
        %v1907 = vpack.c.b16 %v1851, %v1849
        %v1908 = vpack.c.b16 %v1852, %v1850
        %v1909 = vpack.c.b16 %v1855, %v1853
        %v1910 = vpack.c.b16 %v1856, %v1854
        %v1911 = vpack.c.b16 %v1859, %v1857
        %v1912 = vpack.c.b16 %v1860, %v1858
        %v1913 = vpack.c.b16 %v1863, %v1861
        %v1914 = vpack.c.b16 %v1864, %v1862
        %v1915 = vpack.c.b16 %v1867, %v1865
        %v1916 = vpack.c.b16 %v1868, %v1866
        %v1917 = vpack.c.b16 %v1871, %v1869
        %v1918 = vpack.c.b16 %v1872, %v1870
        %v1919 = vpack.c.b16 %v1875, %v1873
        %v1920 = vpack.c.b16 %v1876, %v1874
        %v1921 = vpack.c.b16 %v1879, %v1877
        %v1922 = vpack.c.b16 %v1880, %v1878
        %v1923 = vpack.c.b16 %v1883, %v1881
        %v1924 = vpack.c.b16 %v1884, %v1882
        %v1925 = vpack.c.b16 %v1887, %v1885
        %v1926 = vpack.c.b16 %v1888, %v1886
        %v1927 = vpack.c.b16 %v1891, %v1889
        %v1928 = vpack.c.b16 %v1892, %v1890
        %v1929 = vpack.c.b16 %v1895, %v1893
        %v1930 = vpack.c.b16 %v1896, %v1894
        %v1931 = vpack.c.b16 %v1899, %v1897
        %v1932 = vpack.c.b16 %v1900, %v1898
        %1965 = vmatprep.subr.bf16.mxu0 %v1902
        %1966 = vmatpush1.bf16.msra.mxu0 %v1901
        %1967 = vmatprep.subr.bf16.mxu0 %v1904
        %1968 = vmatpush1.bf16.msra.mxu0 %v1903
        %1969 = vmatprep.subr.bf16.mxu0 %v1906
        %1970 = vmatpush1.bf16.msra.mxu0 %v1905
        %1971 = vmatprep.subr.bf16.mxu0 %v1908
        %1972 = vmatpush1.bf16.msra.mxu0 %v1907
        %1973 = vmatprep.subr.bf16.mxu0 %v1910
        %1974 = vmatpush1.bf16.msra.mxu0 %v1909
        %1975 = vmatprep.subr.bf16.mxu0 %v1912
        %1976 = vmatpush1.bf16.msra.mxu0 %v1911
        %1977 = vmatprep.subr.bf16.mxu0 %v1914
        %1978 = vmatpush1.bf16.msra.mxu0 %v1913
        %1979 = vmatprep.subr.bf16.mxu0 %v1916
        %1980 = vmatpush1.bf16.msra.mxu0 %v1915
        %1981 = vmatprep.subr.bf16.mxu0 %v1918
        %1982 = vmatpush1.bf16.msra.mxu0 %v1917
        %1983 = vmatprep.subr.bf16.mxu0 %v1920
        %1984 = vmatpush1.bf16.msra.mxu0 %v1919
        %1985 = vmatprep.subr.bf16.mxu0 %v1922
        %1986 = vmatpush1.bf16.msra.mxu0 %v1921
        %1987 = vmatprep.subr.bf16.mxu0 %v1924
        %1988 = vmatpush1.bf16.msra.mxu0 %v1923
        %1989 = vmatprep.subr.bf16.mxu0 %v1926
        %1990 = vmatpush1.bf16.msra.mxu0 %v1925
        %1991 = vmatprep.subr.bf16.mxu0 %v1928
        %1992 = vmatpush1.bf16.msra.mxu0 %v1927
        %1993 = vmatprep.subr.bf16.mxu0 %v1930
        %1994 = vmatpush1.bf16.msra.mxu0 %v1929
        %1995 = vmatprep.subr.bf16.mxu0 %v1932
        %1996 = vmatpush1.bf16.msra.mxu0 %v1931
        %1997 = vmatprep.mubr.bf16.mxu0 %v1759
        %1998 = vmatmul.mubr.bf16.gmra.mrb[0].mxu0 %v1758
        %v1999 = vpop.f32.mrb[0].mxu0
        %v2000 = vadd.f32 %v1798, %v1999
        %v2001 = vpop.f32.mrb[0].mxu0
        %v2002 = vadd.f32 %v1802, %v2001
        %v2003 = vpop.f32.mrb[0].mxu0
        %v2004 = vpop.f32.mrb[0].mxu0
        %2005 = vdwg.mxu0
        %v2006 = vadd.f32 %v593, %v2000
        %v2007 = vadd.f32 %v594, %v2002
        %v2008 = vmax.f32 %v2006, 0.0
        %v2009 = vmax.f32 %v2007, 0.0
        %v2010 = vpack.c.bf16 %v2008, %v2008
        %v2011 = vpack.c.bf16 %v2009, %v2009
        %v2012 = vld [vmem:[#allocation8] sm:$0xff]
        %v2013 = vld [vmem:[#allocation8 + $0x8] sm:$0xff]
        %v2014 = vld [vmem:[#allocation8 + $0x10] sm:$0xff]
        %v2015 = vld [vmem:[#allocation8 + $0x18] sm:$0xff]
        %v2016 = vld [vmem:[#allocation8 + $0x20] sm:$0xff]
        %v2017 = vld [vmem:[#allocation8 + $0x28] sm:$0xff]
        %v2018 = vld [vmem:[#allocation8 + $0x30] sm:$0xff]
        %v2019 = vld [vmem:[#allocation8 + $0x38] sm:$0xff]
        %v2020 = vld [vmem:[#allocation8 + $0x40] sm:$0xff]
        %v2021 = vld [vmem:[#allocation8 + $0x48] sm:$0xff]
        %v2022 = vld [vmem:[#allocation8 + $0x50] sm:$0xff]
        %v2023 = vld [vmem:[#allocation8 + $0x58] sm:$0xff]
        %v2024 = vld [vmem:[#allocation8 + $0x60] sm:$0xff]
        %v2025 = vld [vmem:[#allocation8 + $0x68] sm:$0xff]
        %v2026 = vld [vmem:[#allocation8 + $0x70] sm:$0xff]
        %v2027 = vld [vmem:[#allocation8 + $0x78] sm:$0xff]
        %v2028 = vld [vmem:[#allocation8 + $0x80] sm:$0xff]
        %v2029 = vld [vmem:[#allocation8 + $0x88] sm:$0xff]
        %v2030 = vld [vmem:[#allocation8 + $0x90] sm:$0xff]
        %v2031 = vld [vmem:[#allocation8 + $0x98] sm:$0xff]
        %v2032 = vld [vmem:[#allocation8 + $0xa0] sm:$0xff]
        %v2033 = vld [vmem:[#allocation8 + $0xa8] sm:$0xff]
        %v2034 = vld [vmem:[#allocation8 + $0xb0] sm:$0xff]
        %v2035 = vld [vmem:[#allocation8 + $0xb8] sm:$0xff]
        %v2036 = vld [vmem:[#allocation8 + $0xc0] sm:$0xff]
        %v2037 = vld [vmem:[#allocation8 + $0xc8] sm:$0xff]
        %v2038 = vld [vmem:[#allocation8 + $0xd0] sm:$0xff]
        %v2039 = vld [vmem:[#allocation8 + $0xd8] sm:$0xff]
        %v2040 = vld [vmem:[#allocation8 + $0xe0] sm:$0xff]
        %v2041 = vld [vmem:[#allocation8 + $0xe8] sm:$0xff]
        %v2042 = vld [vmem:[#allocation8 + $0xf0] sm:$0xff]
        %v2043 = vld [vmem:[#allocation8 + $0xf8] sm:$0xff]
        %s2044 = scalar_lea.vmem [#allocation11], 96
        %v2045 = vld [vmem:[%s2044] ss:$8 sm:$0x3]
        %v2047 = vlaneseq
        %v2048 = vshrl.u32 %v2047, 7
        %v2049 = vsub.s32 0, %v2048
        %v2050 = vrot.slane %v2045, %v2049
        %v2051 = vlaneseq
        %v2052 = vshrl.u32 %v2051, 7
        %v2053 = vsub.s32 1, %v2052
        %v2054 = vrot.slane %v2045, %v2053
        %v2089 = vunpack.c.l.b16 %v2012
        %v2090 = vunpack.c.h.b16 %v2012
        %v2091 = vunpack.c.l.b16 %v2013
        %v2092 = vunpack.c.h.b16 %v2013
        %v2093 = vunpack.c.l.b16 %v2014
        %v2094 = vunpack.c.h.b16 %v2014
        %v2095 = vunpack.c.l.b16 %v2015
        %v2096 = vunpack.c.h.b16 %v2015
        %v2097 = vunpack.c.l.b16 %v2016
        %v2098 = vunpack.c.h.b16 %v2016
        %v2099 = vunpack.c.l.b16 %v2017
        %v2100 = vunpack.c.h.b16 %v2017
        %v2101 = vunpack.c.l.b16 %v2018
        %v2102 = vunpack.c.h.b16 %v2018
        %v2103 = vunpack.c.l.b16 %v2019
        %v2104 = vunpack.c.h.b16 %v2019
        %v2105 = vunpack.c.l.b16 %v2020
        %v2106 = vunpack.c.h.b16 %v2020
        %v2107 = vunpack.c.l.b16 %v2021
        %v2108 = vunpack.c.h.b16 %v2021
        %v2109 = vunpack.c.l.b16 %v2022
        %v2110 = vunpack.c.h.b16 %v2022
        %v2111 = vunpack.c.l.b16 %v2023
        %v2112 = vunpack.c.h.b16 %v2023
        %v2113 = vunpack.c.l.b16 %v2024
        %v2114 = vunpack.c.h.b16 %v2024
        %v2115 = vunpack.c.l.b16 %v2025
        %v2116 = vunpack.c.h.b16 %v2025
        %v2117 = vunpack.c.l.b16 %v2026
        %v2118 = vunpack.c.h.b16 %v2026
        %v2119 = vunpack.c.l.b16 %v2027
        %v2120 = vunpack.c.h.b16 %v2027
        %v2121 = vunpack.c.l.b16 %v2028
        %v2122 = vunpack.c.h.b16 %v2028
        %v2123 = vunpack.c.l.b16 %v2029
        %v2124 = vunpack.c.h.b16 %v2029
        %v2125 = vunpack.c.l.b16 %v2030
        %v2126 = vunpack.c.h.b16 %v2030
        %v2127 = vunpack.c.l.b16 %v2031
        %v2128 = vunpack.c.h.b16 %v2031
        %v2129 = vunpack.c.l.b16 %v2032
        %v2130 = vunpack.c.h.b16 %v2032
        %v2131 = vunpack.c.l.b16 %v2033
        %v2132 = vunpack.c.h.b16 %v2033
        %v2133 = vunpack.c.l.b16 %v2034
        %v2134 = vunpack.c.h.b16 %v2034
        %v2135 = vunpack.c.l.b16 %v2035
        %v2136 = vunpack.c.h.b16 %v2035
        %v2137 = vunpack.c.l.b16 %v2036
        %v2138 = vunpack.c.h.b16 %v2036
        %v2139 = vunpack.c.l.b16 %v2037
        %v2140 = vunpack.c.h.b16 %v2037
        %v2141 = vunpack.c.l.b16 %v2038
        %v2142 = vunpack.c.h.b16 %v2038
        %v2143 = vunpack.c.l.b16 %v2039
        %v2144 = vunpack.c.h.b16 %v2039
        %v2145 = vunpack.c.l.b16 %v2040
        %v2146 = vunpack.c.h.b16 %v2040
        %v2147 = vunpack.c.l.b16 %v2041
        %v2148 = vunpack.c.h.b16 %v2041
        %v2149 = vunpack.c.l.b16 %v2042
        %v2150 = vunpack.c.h.b16 %v2042
        %v2151 = vunpack.c.l.b16 %v2043
        %v2152 = vunpack.c.h.b16 %v2043
        %v2153 = vpack.c.b16 %v2091, %v2089
        %v2154 = vpack.c.b16 %v2092, %v2090
        %v2155 = vpack.c.b16 %v2095, %v2093
        %v2156 = vpack.c.b16 %v2096, %v2094
        %v2157 = vpack.c.b16 %v2099, %v2097
        %v2158 = vpack.c.b16 %v2100, %v2098
        %v2159 = vpack.c.b16 %v2103, %v2101
        %v2160 = vpack.c.b16 %v2104, %v2102
        %v2161 = vpack.c.b16 %v2107, %v2105
        %v2162 = vpack.c.b16 %v2108, %v2106
        %v2163 = vpack.c.b16 %v2111, %v2109
        %v2164 = vpack.c.b16 %v2112, %v2110
        %v2165 = vpack.c.b16 %v2115, %v2113
        %v2166 = vpack.c.b16 %v2116, %v2114
        %v2167 = vpack.c.b16 %v2119, %v2117
        %v2168 = vpack.c.b16 %v2120, %v2118
        %v2169 = vpack.c.b16 %v2123, %v2121
        %v2170 = vpack.c.b16 %v2124, %v2122
        %v2171 = vpack.c.b16 %v2127, %v2125
        %v2172 = vpack.c.b16 %v2128, %v2126
        %v2173 = vpack.c.b16 %v2131, %v2129
        %v2174 = vpack.c.b16 %v2132, %v2130
        %v2175 = vpack.c.b16 %v2135, %v2133
        %v2176 = vpack.c.b16 %v2136, %v2134
        %v2177 = vpack.c.b16 %v2139, %v2137
        %v2178 = vpack.c.b16 %v2140, %v2138
        %v2179 = vpack.c.b16 %v2143, %v2141
        %v2180 = vpack.c.b16 %v2144, %v2142
        %v2181 = vpack.c.b16 %v2147, %v2145
        %v2182 = vpack.c.b16 %v2148, %v2146
        %v2183 = vpack.c.b16 %v2151, %v2149
        %v2184 = vpack.c.b16 %v2152, %v2150
        %2217 = vmatprep.subr.bf16.mxu0 %v2154
        %2218 = vmatpush1.bf16.msra.mxu0 %v2153
        %2219 = vmatprep.subr.bf16.mxu0 %v2156
        %2220 = vmatpush1.bf16.msra.mxu0 %v2155
        %2221 = vmatprep.subr.bf16.mxu0 %v2158
        %2222 = vmatpush1.bf16.msra.mxu0 %v2157
        %2223 = vmatprep.subr.bf16.mxu0 %v2160
        %2224 = vmatpush1.bf16.msra.mxu0 %v2159
        %2225 = vmatprep.subr.bf16.mxu0 %v2162
        %2226 = vmatpush1.bf16.msra.mxu0 %v2161
        %2227 = vmatprep.subr.bf16.mxu0 %v2164
        %2228 = vmatpush1.bf16.msra.mxu0 %v2163
        %2229 = vmatprep.subr.bf16.mxu0 %v2166
        %2230 = vmatpush1.bf16.msra.mxu0 %v2165
        %2231 = vmatprep.subr.bf16.mxu0 %v2168
        %2232 = vmatpush1.bf16.msra.mxu0 %v2167
        %2233 = vmatprep.subr.bf16.mxu0 %v2170
        %2234 = vmatpush1.bf16.msra.mxu0 %v2169
        %2235 = vmatprep.subr.bf16.mxu0 %v2172
        %2236 = vmatpush1.bf16.msra.mxu0 %v2171
        %2237 = vmatprep.subr.bf16.mxu0 %v2174
        %2238 = vmatpush1.bf16.msra.mxu0 %v2173
        %2239 = vmatprep.subr.bf16.mxu0 %v2176
        %2240 = vmatpush1.bf16.msra.mxu0 %v2175
        %2241 = vmatprep.subr.bf16.mxu0 %v2178
        %2242 = vmatpush1.bf16.msra.mxu0 %v2177
        %2243 = vmatprep.subr.bf16.mxu0 %v2180
        %2244 = vmatpush1.bf16.msra.mxu0 %v2179
        %2245 = vmatprep.subr.bf16.mxu0 %v2182
        %2246 = vmatpush1.bf16.msra.mxu0 %v2181
        %2247 = vmatprep.subr.bf16.mxu0 %v2184
        %2248 = vmatpush1.bf16.msra.mxu0 %v2183
        %2249 = vmatprep.mubr.bf16.mxu0 %v2011
        %2250 = vmatmul.mubr.bf16.gmra.mrb[0].mxu0 %v2010
        %v2251 = vpop.f32.mrb[0].mxu0
        %v2252 = vadd.f32 %v2050, %v2251
        %v2253 = vpop.f32.mrb[0].mxu0
        %v2254 = vadd.f32 %v2054, %v2253
        %v2255 = vpop.f32.mrb[0].mxu0
        %v2256 = vpop.f32.mrb[0].mxu0
        %2257 = vdwg.mxu0
        %v2260 = vrot.slane %v2252, 3
        %v2261 = vrot.slane %v2254, 3
        %2264 = vst [vmem:[#allocation2] sm:$0xe0] %v2260
        %2265 = vst [vmem:[#allocation2 + $0x8] sm:$0xe0] %v2261
        %2266 = vst [vmem:[#allocation2 + $0x10] sm:$0x1f] %v2260
        %2267 = vst [vmem:[#allocation2 + $0x18] sm:$0x1f] %v2261
        %v2268 = vld [vmem:[#allocation2] sm:$0xff]
        %v2269 = vld [vmem:[#allocation2 + $0x8] sm:$0xff]
        %s2270 = scalar_lea.vmem [#allocation11], 128
        %v2271 = vld [vmem:[%s2270] ss:$8 sm:$0x3]
        %v2273 = vlaneseq
        %v2274 = vshrl.u32 %v2273, 7
        %v2275 = vsub.s32 0, %v2274
        %v2276 = vrot.slane %v2271, %v2275
        %v2277 = vlaneseq
        %v2278 = vshrl.u32 %v2277, 7
        %v2279 = vsub.s32 1, %v2278
        %v2280 = vrot.slane %v2271, %v2279
        %v2283 = vmul.f32 %v2268, %v2276
        %v2284 = vmul.f32 %v2269, %v2280
        %v2285 = vld [vmem:[#allocation2] sm:$0xfe]
        %v2286 = vld [vmem:[#allocation2 + $0x8] sm:$0xfe]
        %v2287 = vld [vmem:[#allocation2 + $0x10] sm:$0x1]
        %v2288 = vld [vmem:[#allocation2 + $0x18] sm:$0x1]
        %s2289 = scalar_lea.vmem [#allocation11], 129
        %v2290 = vld [vmem:[%s2289] ss:$8 sm:$0x3]
        %v2292 = vlaneseq
        %v2293 = vshrl.u32 %v2292, 7
        %v2294 = vsub.s32 0, %v2293
        %v2295 = vrot.slane %v2290, %v2294
        %v2296 = vlaneseq
        %v2297 = vshrl.u32 %v2296, 7
        %v2298 = vsub.s32 1, %v2297
        %v2299 = vrot.slane %v2290, %v2298
        %v2302 = vmul.f32 %v2285, %v2295
        %v2303 = vmul.f32 %v2286, %v2299
        %v2304 = vmul.f32 %v2287, %v2295
        %v2305 = vmul.f32 %v2288, %v2299
        %v2310 = vrot.slane %v2302, 1
        %v2311 = vrot.slane %v2304, 1
        %v2312 = vsel %vm662, %v2310, %v2311
        %v2313 = vrot.slane %v2303, 1
        %v2314 = vrot.slane %v2305, 1
        %v2315 = vsel %vm662, %v2313, %v2314
        %v2318 = vadd.f32 %v2283, %v2312
        %v2319 = vadd.f32 %v2284, %v2315
        %v2320 = vld [vmem:[#allocation2] sm:$0xfc]
        %v2321 = vld [vmem:[#allocation2 + $0x8] sm:$0xfc]
        %v2322 = vld [vmem:[#allocation2 + $0x10] sm:$0x3]
        %v2323 = vld [vmem:[#allocation2 + $0x18] sm:$0x3]
        %s2324 = scalar_lea.vmem [#allocation11], 130
        %v2325 = vld [vmem:[%s2324] ss:$8 sm:$0x3]
        %v2327 = vlaneseq
        %v2328 = vshrl.u32 %v2327, 7
        %v2329 = vsub.s32 0, %v2328
        %v2330 = vrot.slane %v2325, %v2329
        %v2331 = vlaneseq
        %v2332 = vshrl.u32 %v2331, 7
        %v2333 = vsub.s32 1, %v2332
        %v2334 = vrot.slane %v2325, %v2333
        %v2337 = vmul.f32 %v2320, %v2330
        %v2338 = vmul.f32 %v2321, %v2334
        %v2339 = vmul.f32 %v2322, %v2330
        %v2340 = vmul.f32 %v2323, %v2334
        %v2345 = vrot.slane %v2337, 2
        %v2346 = vrot.slane %v2339, 2
        %v2347 = vsel %vm698, %v2345, %v2346
        %v2348 = vrot.slane %v2338, 2
        %v2349 = vrot.slane %v2340, 2
        %v2350 = vsel %vm698, %v2348, %v2349
        %v2353 = vadd.f32 %v2318, %v2347
        %v2354 = vadd.f32 %v2319, %v2350
        %v2355 = vld [vmem:[#allocation2] sm:$0xf8]
        %v2356 = vld [vmem:[#allocation2 + $0x8] sm:$0xf8]
        %v2357 = vld [vmem:[#allocation2 + $0x10] sm:$0x7]
        %v2358 = vld [vmem:[#allocation2 + $0x18] sm:$0x7]
        %s2359 = scalar_lea.vmem [#allocation11], 112
        %v2360 = vld [vmem:[%s2359] ss:$8 sm:$0x3]
        %v2362 = vlaneseq
        %v2363 = vshrl.u32 %v2362, 7
        %v2364 = vsub.s32 0, %v2363
        %v2365 = vrot.slane %v2360, %v2364
        %v2366 = vlaneseq
        %v2367 = vshrl.u32 %v2366, 7
        %v2368 = vsub.s32 1, %v2367
        %v2369 = vrot.slane %v2360, %v2368
        %v2372 = vmul.f32 %v2355, %v2365
        %v2373 = vmul.f32 %v2356, %v2369
        %v2374 = vmul.f32 %v2357, %v2365
        %v2375 = vmul.f32 %v2358, %v2369
        %s2376 = scalar_lea.vmem [#allocation11], 131
        %v2377 = vld [vmem:[%s2376] ss:$8 sm:$0x3]
        %v2379 = vlaneseq
        %v2380 = vshrl.u32 %v2379, 7
        %v2381 = vsub.s32 0, %v2380
        %v2382 = vrot.slane %v2377, %v2381
        %v2383 = vlaneseq
        %v2384 = vshrl.u32 %v2383, 7
        %v2385 = vsub.s32 1, %v2384
        %v2386 = vrot.slane %v2377, %v2385
        %v2389 = vmul.f32 %v2355, %v2382
        %v2390 = vmul.f32 %v2356, %v2386
        %v2391 = vmul.f32 %v2357, %v2382
        %v2392 = vmul.f32 %v2358, %v2386
        %v2397 = vrot.slane %v2389, 3
        %v2398 = vrot.slane %v2391, 3
        %v2399 = vsel %vm751, %v2397, %v2398
        %v2400 = vrot.slane %v2390, 3
        %v2401 = vrot.slane %v2392, 3
        %v2402 = vsel %vm751, %v2400, %v2401
        %v2405 = vadd.f32 %v2353, %v2399
        %v2406 = vadd.f32 %v2354, %v2402
        %v2407 = vld [vmem:[#allocation2] sm:$0xf0]
        %v2408 = vld [vmem:[#allocation2 + $0x8] sm:$0xf0]
        %v2409 = vld [vmem:[#allocation2 + $0x10] sm:$0xf]
        %v2410 = vld [vmem:[#allocation2 + $0x18] sm:$0xf]
        %s2411 = scalar_lea.vmem [#allocation11], 113
        %v2412 = vld [vmem:[%s2411] ss:$8 sm:$0x3]
        %v2414 = vlaneseq
        %v2415 = vshrl.u32 %v2414, 7
        %v2416 = vsub.s32 0, %v2415
        %v2417 = vrot.slane %v2412, %v2416
        %v2418 = vlaneseq
        %v2419 = vshrl.u32 %v2418, 7
        %v2420 = vsub.s32 1, %v2419
        %v2421 = vrot.slane %v2412, %v2420
        %v2424 = vmul.f32 %v2407, %v2417
        %v2425 = vmul.f32 %v2408, %v2421
        %v2426 = vmul.f32 %v2409, %v2417
        %v2427 = vmul.f32 %v2410, %v2421
        %v2432 = vrot.slane %v2424, 1
        %v2433 = vrot.slane %v2426, 1
        %v2434 = vsel %vm662, %v2432, %v2433
        %v2435 = vrot.slane %v2425, 1
        %v2436 = vrot.slane %v2427, 1
        %v2437 = vsel %vm662, %v2435, %v2436
        %v2442 = vadd.f32 %v2372, %v2434
        %v2443 = vadd.f32 %v2373, %v2437
        %v2444 = vadd.f32 %v2374, %v2433
        %v2445 = vadd.f32 %v2375, %v2436
        %s2446 = scalar_lea.vmem [#allocation11], 117
        %v2447 = vld [vmem:[%s2446] ss:$8 sm:$0x3]
        %v2449 = vlaneseq
        %v2450 = vshrl.u32 %v2449, 7
        %v2451 = vsub.s32 0, %v2450
        %v2452 = vrot.slane %v2447, %v2451
        %v2453 = vlaneseq
        %v2454 = vshrl.u32 %v2453, 7
        %v2455 = vsub.s32 1, %v2454
        %v2456 = vrot.slane %v2447, %v2455
        %v2459 = vmul.f32 %v2407, %v2452
        %v2460 = vmul.f32 %v2408, %v2456
        %v2461 = vmul.f32 %v2409, %v2452
        %v2462 = vmul.f32 %v2410, %v2456
        %s2463 = scalar_lea.vmem [#allocation11], 132
        %v2464 = vld [vmem:[%s2463] ss:$8 sm:$0x3]
        %v2466 = vlaneseq
        %v2467 = vshrl.u32 %v2466, 7
        %v2468 = vsub.s32 0, %v2467
        %v2469 = vrot.slane %v2464, %v2468
        %v2470 = vlaneseq
        %v2471 = vshrl.u32 %v2470, 7
        %v2472 = vsub.s32 1, %v2471
        %v2473 = vrot.slane %v2464, %v2472
        %v2476 = vmul.f32 %v2407, %v2469
        %v2477 = vmul.f32 %v2408, %v2473
        %v2478 = vmul.f32 %v2409, %v2469
        %v2479 = vmul.f32 %v2410, %v2473
        %v2484 = vrot.slane %v2476, 4
        %v2485 = vrot.slane %v2478, 4
        %v2486 = vsel %vm839, %v2484, %v2485
        %v2487 = vrot.slane %v2477, 4
        %v2488 = vrot.slane %v2479, 4
        %v2489 = vsel %vm839, %v2487, %v2488
        %v2492 = vadd.f32 %v2405, %v2486
        %v2493 = vadd.f32 %v2406, %v2489
        %v2494 = vld [vmem:[#allocation2] sm:$0xe0]
        %v2495 = vld [vmem:[#allocation2 + $0x8] sm:$0xe0]
        %v2496 = vld [vmem:[#allocation2 + $0x10] sm:$0x1f]
        %v2497 = vld [vmem:[#allocation2 + $0x18] sm:$0x1f]
        %s2498 = scalar_lea.vmem [#allocation11], 114
        %v2499 = vld [vmem:[%s2498] ss:$8 sm:$0x3]
        %v2501 = vlaneseq
        %v2502 = vshrl.u32 %v2501, 7
        %v2503 = vsub.s32 0, %v2502
        %v2504 = vrot.slane %v2499, %v2503
        %v2505 = vlaneseq
        %v2506 = vshrl.u32 %v2505, 7
        %v2507 = vsub.s32 1, %v2506
        %v2508 = vrot.slane %v2499, %v2507
        %v2511 = vmul.f32 %v2494, %v2504
        %v2512 = vmul.f32 %v2495, %v2508
        %v2513 = vmul.f32 %v2496, %v2504
        %v2514 = vmul.f32 %v2497, %v2508
        %v2519 = vrot.slane %v2511, 2
        %v2520 = vrot.slane %v2513, 2
        %v2521 = vsel %vm698, %v2519, %v2520
        %v2522 = vrot.slane %v2512, 2
        %v2523 = vrot.slane %v2514, 2
        %v2524 = vsel %vm698, %v2522, %v2523
        %v2529 = vadd.f32 %v2442, %v2521
        %v2530 = vadd.f32 %v2443, %v2524
        %v2531 = vadd.f32 %v2444, %v2520
        %v2532 = vadd.f32 %v2445, %v2523
        %s2533 = scalar_lea.vmem [#allocation11], 118
        %v2534 = vld [vmem:[%s2533] ss:$8 sm:$0x3]
        %v2536 = vlaneseq
        %v2537 = vshrl.u32 %v2536, 7
        %v2538 = vsub.s32 0, %v2537
        %v2539 = vrot.slane %v2534, %v2538
        %v2540 = vlaneseq
        %v2541 = vshrl.u32 %v2540, 7
        %v2542 = vsub.s32 1, %v2541
        %v2543 = vrot.slane %v2534, %v2542
        %v2546 = vmul.f32 %v2494, %v2539
        %v2547 = vmul.f32 %v2495, %v2543
        %v2548 = vmul.f32 %v2496, %v2539
        %v2549 = vmul.f32 %v2497, %v2543
        %v2554 = vrot.slane %v2546, 1
        %v2555 = vrot.slane %v2548, 1
        %v2556 = vsel %vm662, %v2554, %v2555
        %v2557 = vrot.slane %v2547, 1
        %v2558 = vrot.slane %v2549, 1
        %v2559 = vsel %vm662, %v2557, %v2558
        %v2564 = vadd.f32 %v2459, %v2556
        %v2565 = vadd.f32 %v2460, %v2559
        %v2566 = vadd.f32 %v2461, %v2555
        %v2567 = vadd.f32 %v2462, %v2558
        %s2568 = scalar_lea.vmem [#allocation11], 133
        %v2569 = vld [vmem:[%s2568] ss:$8 sm:$0x3]
        %v2571 = vlaneseq
        %v2572 = vshrl.u32 %v2571, 7
        %v2573 = vsub.s32 0, %v2572
        %v2574 = vrot.slane %v2569, %v2573
        %v2575 = vlaneseq
        %v2576 = vshrl.u32 %v2575, 7
        %v2577 = vsub.s32 1, %v2576
        %v2578 = vrot.slane %v2569, %v2577
        %v2581 = vmul.f32 %v2494, %v2574
        %v2582 = vmul.f32 %v2495, %v2578
        %v2583 = vmul.f32 %v2496, %v2574
        %v2584 = vmul.f32 %v2497, %v2578
        %v2589 = vrot.slane %v2581, 5
        %v2590 = vrot.slane %v2583, 5
        %v2591 = vsel %vm945, %v2589, %v2590
        %v2592 = vrot.slane %v2582, 5
        %v2593 = vrot.slane %v2584, 5
        %v2594 = vsel %vm945, %v2592, %v2593
        %v2597 = vadd.f32 %v2492, %v2591
        %v2598 = vadd.f32 %v2493, %v2594
        %v2599 = vld [vmem:[#allocation2] sm:$0xc0]
        %v2600 = vld [vmem:[#allocation2 + $0x8] sm:$0xc0]
        %v2601 = vld [vmem:[#allocation2 + $0x10] sm:$0x3f]
        %v2602 = vld [vmem:[#allocation2 + $0x18] sm:$0x3f]
        %s2603 = scalar_lea.vmem [#allocation11], 115
        %v2604 = vld [vmem:[%s2603] ss:$8 sm:$0x3]
        %v2606 = vlaneseq
        %v2607 = vshrl.u32 %v2606, 7
        %v2608 = vsub.s32 0, %v2607
        %v2609 = vrot.slane %v2604, %v2608
        %v2610 = vlaneseq
        %v2611 = vshrl.u32 %v2610, 7
        %v2612 = vsub.s32 1, %v2611
        %v2613 = vrot.slane %v2604, %v2612
        %v2616 = vmul.f32 %v2599, %v2609
        %v2617 = vmul.f32 %v2600, %v2613
        %v2618 = vmul.f32 %v2601, %v2609
        %v2619 = vmul.f32 %v2602, %v2613
        %v2624 = vrot.slane %v2616, 3
        %v2625 = vrot.slane %v2618, 3
        %v2626 = vsel %vm751, %v2624, %v2625
        %v2627 = vrot.slane %v2617, 3
        %v2628 = vrot.slane %v2619, 3
        %v2629 = vsel %vm751, %v2627, %v2628
        %v2634 = vadd.f32 %v2529, %v2626
        %v2635 = vadd.f32 %v2530, %v2629
        %v2636 = vadd.f32 %v2531, %v2625
        %v2637 = vadd.f32 %v2532, %v2628
        %s2638 = scalar_lea.vmem [#allocation11], 119
        %v2639 = vld [vmem:[%s2638] ss:$8 sm:$0x3]
        %v2641 = vlaneseq
        %v2642 = vshrl.u32 %v2641, 7
        %v2643 = vsub.s32 0, %v2642
        %v2644 = vrot.slane %v2639, %v2643
        %v2645 = vlaneseq
        %v2646 = vshrl.u32 %v2645, 7
        %v2647 = vsub.s32 1, %v2646
        %v2648 = vrot.slane %v2639, %v2647
        %v2651 = vmul.f32 %v2599, %v2644
        %v2652 = vmul.f32 %v2600, %v2648
        %v2653 = vmul.f32 %v2601, %v2644
        %v2654 = vmul.f32 %v2602, %v2648
        %v2659 = vrot.slane %v2651, 2
        %v2660 = vrot.slane %v2653, 2
        %v2661 = vsel %vm698, %v2659, %v2660
        %v2662 = vrot.slane %v2652, 2
        %v2663 = vrot.slane %v2654, 2
        %v2664 = vsel %vm698, %v2662, %v2663
        %v2669 = vadd.f32 %v2564, %v2661
        %v2670 = vadd.f32 %v2565, %v2664
        %v2671 = vadd.f32 %v2566, %v2660
        %v2672 = vadd.f32 %v2567, %v2663
        %s2673 = scalar_lea.vmem [#allocation11], 134
        %v2674 = vld [vmem:[%s2673] ss:$8 sm:$0x3]
        %v2676 = vlaneseq
        %v2677 = vshrl.u32 %v2676, 7
        %v2678 = vsub.s32 0, %v2677
        %v2679 = vrot.slane %v2674, %v2678
        %v2680 = vlaneseq
        %v2681 = vshrl.u32 %v2680, 7
        %v2682 = vsub.s32 1, %v2681
        %v2683 = vrot.slane %v2674, %v2682
        %v2686 = vmul.f32 %v2599, %v2679
        %v2687 = vmul.f32 %v2600, %v2683
        %v2688 = vmul.f32 %v2601, %v2679
        %v2689 = vmul.f32 %v2602, %v2683
        %v2694 = vrot.slane %v2686, 6
        %v2695 = vrot.slane %v2688, 6
        %v2696 = vsel %vm1051, %v2694, %v2695
        %v2697 = vrot.slane %v2687, 6
        %v2698 = vrot.slane %v2689, 6
        %v2699 = vsel %vm1051, %v2697, %v2698
        %v2702 = vadd.f32 %v2597, %v2696
        %v2703 = vadd.f32 %v2598, %v2699
        %v2704 = vld [vmem:[#allocation2] sm:$0x80]
        %v2705 = vld [vmem:[#allocation2 + $0x8] sm:$0x80]
        %v2706 = vld [vmem:[#allocation2 + $0x10] sm:$0x7f]
        %v2707 = vld [vmem:[#allocation2 + $0x18] sm:$0x7f]
        %s2708 = scalar_lea.vmem [#allocation11], 116
        %v2709 = vld [vmem:[%s2708] ss:$8 sm:$0x3]
        %v2711 = vlaneseq
        %v2712 = vshrl.u32 %v2711, 7
        %v2713 = vsub.s32 0, %v2712
        %v2714 = vrot.slane %v2709, %v2713
        %v2715 = vlaneseq
        %v2716 = vshrl.u32 %v2715, 7
        %v2717 = vsub.s32 1, %v2716
        %v2718 = vrot.slane %v2709, %v2717
        %v2721 = vmul.f32 %v2704, %v2714
        %v2722 = vmul.f32 %v2705, %v2718
        %v2723 = vmul.f32 %v2706, %v2714
        %v2724 = vmul.f32 %v2707, %v2718
        %v2729 = vrot.slane %v2721, 4
        %v2730 = vrot.slane %v2723, 4
        %v2731 = vsel %vm839, %v2729, %v2730
        %v2732 = vrot.slane %v2722, 4
        %v2733 = vrot.slane %v2724, 4
        %v2734 = vsel %vm839, %v2732, %v2733
        %v2739 = vadd.f32 %v2634, %v2731
        %v2740 = vadd.f32 %v2635, %v2734
        %v2741 = vadd.f32 %v2636, %v2730
        %v2742 = vadd.f32 %v2637, %v2733
        %s2743 = scalar_lea.vmem [#allocation11], 135
        %v2744 = vld [vmem:[%s2743] ss:$8 sm:$0x3]
        %v2746 = vlaneseq
        %v2747 = vshrl.u32 %v2746, 7
        %v2748 = vsub.s32 0, %v2747
        %v2749 = vrot.slane %v2744, %v2748
        %v2750 = vlaneseq
        %v2751 = vshrl.u32 %v2750, 7
        %v2752 = vsub.s32 1, %v2751
        %v2753 = vrot.slane %v2744, %v2752
        %v2756 = vmul.f32 %v2704, %v2749
        %v2757 = vmul.f32 %v2705, %v2753
        %v2758 = vmul.f32 %v2706, %v2749
        %v2759 = vmul.f32 %v2707, %v2753
        %v2764 = vrot.slane %v2756, 7
        %v2765 = vrot.slane %v2758, 7
        %v2766 = vsel %vm1122, %v2764, %v2765
        %v2767 = vrot.slane %v2757, 7
        %v2768 = vrot.slane %v2759, 7
        %v2769 = vsel %vm1122, %v2767, %v2768
        %v2772 = vadd.f32 %v2702, %v2766
        %v2773 = vadd.f32 %v2703, %v2769
        %v2774 = vld [vmem:[#allocation2 + $0x10] sm:$0xff]
        %v2775 = vld [vmem:[#allocation2 + $0x18] sm:$0xff]
        %s2776 = scalar_lea.vmem [#allocation11], 144
        %v2777 = vld [vmem:[%s2776] ss:$8 sm:$0x3]
        %v2779 = vlaneseq
        %v2780 = vshrl.u32 %v2779, 7
        %v2781 = vsub.s32 0, %v2780
        %v2782 = vrot.slane %v2777, %v2781
        %v2783 = vlaneseq
        %v2784 = vshrl.u32 %v2783, 7
        %v2785 = vsub.s32 1, %v2784
        %v2786 = vrot.slane %v2777, %v2785
        %v2789 = vmul.f32 %v2774, %v2782
        %v2790 = vmul.f32 %v2775, %v2786
        %v2791 = vadd.f32 %v2772, %v2789
        %v2792 = vadd.f32 %v2773, %v2790
        %v2793 = vld [vmem:[#allocation2 + $0x10] sm:$0xfe]
        %v2794 = vld [vmem:[#allocation2 + $0x18] sm:$0xfe]
        %v2795 = vld [vmem:[#allocation2 + $0x20] sm:$0x1]
        %v2796 = vld [vmem:[#allocation2 + $0x28] sm:$0x1]
        %s2797 = scalar_lea.vmem [#allocation11], 145
        %v2798 = vld [vmem:[%s2797] ss:$8 sm:$0x3]
        %v2800 = vlaneseq
        %v2801 = vshrl.u32 %v2800, 7
        %v2802 = vsub.s32 0, %v2801
        %v2803 = vrot.slane %v2798, %v2802
        %v2804 = vlaneseq
        %v2805 = vshrl.u32 %v2804, 7
        %v2806 = vsub.s32 1, %v2805
        %v2807 = vrot.slane %v2798, %v2806
        %v2810 = vmul.f32 %v2793, %v2803
        %v2811 = vmul.f32 %v2794, %v2807
        %v2812 = vmul.f32 %v2795, %v2803
        %v2813 = vmul.f32 %v2796, %v2807
        %v2818 = vrot.slane %v2810, 1
        %v2819 = vrot.slane %v2812, 1
        %v2820 = vsel %vm662, %v2818, %v2819
        %v2821 = vrot.slane %v2811, 1
        %v2822 = vrot.slane %v2813, 1
        %v2823 = vsel %vm662, %v2821, %v2822
        %v2826 = vadd.f32 %v2791, %v2820
        %v2827 = vadd.f32 %v2792, %v2823
        %v2828 = vld [vmem:[#allocation2 + $0x10] sm:$0xfc]
        %v2829 = vld [vmem:[#allocation2 + $0x18] sm:$0xfc]
        %v2830 = vld [vmem:[#allocation2 + $0x20] sm:$0x3]
        %v2831 = vld [vmem:[#allocation2 + $0x28] sm:$0x3]
        %s2832 = scalar_lea.vmem [#allocation11], 146
        %v2833 = vld [vmem:[%s2832] ss:$8 sm:$0x3]
        %v2835 = vlaneseq
        %v2836 = vshrl.u32 %v2835, 7
        %v2837 = vsub.s32 0, %v2836
        %v2838 = vrot.slane %v2833, %v2837
        %v2839 = vlaneseq
        %v2840 = vshrl.u32 %v2839, 7
        %v2841 = vsub.s32 1, %v2840
        %v2842 = vrot.slane %v2833, %v2841
        %v2845 = vmul.f32 %v2828, %v2838
        %v2846 = vmul.f32 %v2829, %v2842
        %v2847 = vmul.f32 %v2830, %v2838
        %v2848 = vmul.f32 %v2831, %v2842
        %v2853 = vrot.slane %v2845, 2
        %v2854 = vrot.slane %v2847, 2
        %v2855 = vsel %vm698, %v2853, %v2854
        %v2856 = vrot.slane %v2846, 2
        %v2857 = vrot.slane %v2848, 2
        %v2858 = vsel %vm698, %v2856, %v2857
        %v2861 = vadd.f32 %v2826, %v2855
        %v2862 = vadd.f32 %v2827, %v2858
        %s2863 = scalar_lea.vmem [#allocation11], 97
        %v2864 = vld [vmem:[%s2863] ss:$8 sm:$0x3]
        %v2866 = vlaneseq
        %v2867 = vshrl.u32 %v2866, 7
        %v2868 = vsub.s32 0, %v2867
        %v2869 = vrot.slane %v2864, %v2868
        %v2870 = vlaneseq
        %v2871 = vshrl.u32 %v2870, 7
        %v2872 = vsub.s32 1, %v2871
        %v2873 = vrot.slane %v2864, %v2872
        %v2876 = vadd.f32 %v2739, %v2869
        %v2877 = vadd.f32 %v2740, %v2873
        %v2878 = vadd.f32 %v2741, %v2869
        %v2879 = vadd.f32 %v2742, %v2873
        %v2880 = vmax.f32 %v2876, 0.0
        %v2881 = vmax.f32 %v2877, 0.0
        %v2882 = vmax.f32 %v2878, 0.0
        %v2883 = vmax.f32 %v2879, 0.0
        %s2884 = scalar_lea.vmem [#allocation11], 147
        %v2885 = vld [vmem:[%s2884] ss:$8 sm:$0x3]
        %v2890 = vrot.slane %v2880, 3
        %v2891 = vrot.slane %v2882, 3
        %v2892 = vsel %vm751, %v2890, %v2891
        %v2893 = vrot.slane %v2881, 3
        %v2894 = vrot.slane %v2883, 3
        %v2895 = vsel %vm751, %v2893, %v2894
        %2898 = vrot.lane.b32.xlu0 %v2892, 64
        %v2899 = vpop.permute.xlu0 %2898
        %2900 = vrot.lane.b32.xlu0 %v2895, 64
        %v2901 = vpop.permute.xlu0 %2900
        %v2902 = vsel %vm1263, %v2899, %v2901
        %v2903 = vsel %vm1263, %v2901, %v2899
        %v2905 = vlaneseq
        %v2906 = vshrl.u32 %v2905, 7
        %v2907 = vsub.s32 0, %v2906
        %v2908 = vrot.slane %v2885, %v2907
        %v2909 = vlaneseq
        %v2910 = vshrl.u32 %v2909, 7
        %v2911 = vsub.s32 1, %v2910
        %v2912 = vrot.slane %v2885, %v2911
        %v2915 = vmul.f32 %v2903, %v2908
        %v2916 = vmul.f32 %v2902, %v2912
        %s2917 = scalar_lea.vmem [#allocation11], 148
        %v2918 = vld [vmem:[%s2917] ss:$8 sm:$0x3]
        %2919 = vrot.lane.b32.xlu0 %v2892, 32
        %v2920 = vpop.permute.xlu0 %2919
        %2921 = vrot.lane.b32.xlu0 %v2895, 32
        %v2922 = vpop.permute.xlu0 %2921
        %v2923 = vsel %vm1285, %v2920, %v2922
        %v2924 = vsel %vm1285, %v2922, %v2920
        %v2926 = vlaneseq
        %v2927 = vshrl.u32 %v2926, 7
        %v2928 = vsub.s32 0, %v2927
        %v2929 = vrot.slane %v2918, %v2928
        %v2930 = vlaneseq
        %v2931 = vshrl.u32 %v2930, 7
        %v2932 = vsub.s32 1, %v2931
        %v2933 = vrot.slane %v2918, %v2932
        %v2936 = vmul.f32 %v2924, %v2929
        %v2937 = vmul.f32 %v2923, %v2933
        %v2938 = vadd.f32 %v2915, %v2936
        %v2939 = vadd.f32 %v2916, %v2937
        %s2940 = scalar_lea.vmem [#allocation11], 149
        %v2941 = vld [vmem:[%s2940] ss:$8 sm:$0x3]
        %v2943 = vlaneseq
        %v2944 = vshrl.u32 %v2943, 7
        %v2945 = vsub.s32 0, %v2944
        %v2946 = vrot.slane %v2941, %v2945
        %v2947 = vlaneseq
        %v2948 = vshrl.u32 %v2947, 7
        %v2949 = vsub.s32 1, %v2948
        %v2950 = vrot.slane %v2941, %v2949
        %v2953 = vmul.f32 %v2880, %v2946
        %v2954 = vmul.f32 %v2881, %v2950
        %v2955 = vmul.f32 %v2882, %v2946
        %v2956 = vmul.f32 %v2883, %v2950
        %v2961 = vrot.slane %v2953, 3
        %v2962 = vrot.slane %v2955, 3
        %v2963 = vsel %vm751, %v2961, %v2962
        %v2964 = vrot.slane %v2954, 3
        %v2965 = vrot.slane %v2956, 3
        %v2966 = vsel %vm751, %v2964, %v2965
        %v2969 = vadd.f32 %v2938, %v2963
        %v2970 = vadd.f32 %v2939, %v2966
        %s2971 = scalar_lea.vmem [#allocation11], 150
        %v2972 = vld [vmem:[%s2971] ss:$8 sm:$0x3]
        %2973 = vrot.lane.b32.xlu0 %v2892, 96
        %v2974 = vpop.permute.xlu0 %2973
        %2975 = vrot.lane.b32.xlu0 %v2895, 96
        %v2976 = vpop.permute.xlu0 %2975
        %v2977 = vsel %vm1340, %v2974, %v2976
        %v2978 = vsel %vm1340, %v2976, %v2974
        %v2980 = vlaneseq
        %v2981 = vshrl.u32 %v2980, 7
        %v2982 = vsub.s32 0, %v2981
        %v2983 = vrot.slane %v2972, %v2982
        %v2984 = vlaneseq
        %v2985 = vshrl.u32 %v2984, 7
        %v2986 = vsub.s32 1, %v2985
        %v2987 = vrot.slane %v2972, %v2986
        %v2990 = vmul.f32 %v2977, %v2983
        %v2991 = vmul.f32 %v2978, %v2987
        %v2992 = vadd.f32 %v2969, %v2990
        %v2993 = vadd.f32 %v2970, %v2991
        %s2994 = scalar_lea.vmem [#allocation11], 151
        %v2995 = vld [vmem:[%s2994] ss:$8 sm:$0x3]
        %v2997 = vlaneseq
        %v2998 = vshrl.u32 %v2997, 7
        %v2999 = vsub.s32 0, %v2998
        %v3000 = vrot.slane %v2995, %v2999
        %v3001 = vlaneseq
        %v3002 = vshrl.u32 %v3001, 7
        %v3003 = vsub.s32 1, %v3002
        %v3004 = vrot.slane %v2995, %v3003
        %v3007 = vmul.f32 %v2902, %v3000
        %v3008 = vmul.f32 %v2903, %v3004
        %v3009 = vadd.f32 %v2992, %v3007
        %v3010 = vadd.f32 %v2993, %v3008
        %s3011 = scalar_lea.vmem [#allocation11], 100
        %v3012 = vld [vmem:[%s3011] ss:$8 sm:$0x3]
        %v3014 = vlaneseq
        %v3015 = vshrl.u32 %v3014, 7
        %v3016 = vsub.s32 0, %v3015
        %v3017 = vrot.slane %v3012, %v3016
        %v3018 = vlaneseq
        %v3019 = vshrl.u32 %v3018, 7
        %v3020 = vsub.s32 1, %v3019
        %v3021 = vrot.slane %v3012, %v3020
        %v3024 = vadd.f32 %v3009, %v3017
        %v3025 = vadd.f32 %v3010, %v3021
        %v3026 = vmax.f32 %v3024, 0.0
        %v3027 = vmax.f32 %v3025, 0.0
        %s3028 = scalar_lea.vmem [#allocation11], 98
        %v3029 = vld [vmem:[%s3028] ss:$8 sm:$0x3]
        %v3031 = vlaneseq
        %v3032 = vshrl.u32 %v3031, 7
        %v3033 = vsub.s32 0, %v3032
        %v3034 = vrot.slane %v3029, %v3033
        %v3035 = vlaneseq
        %v3036 = vshrl.u32 %v3035, 7
        %v3037 = vsub.s32 1, %v3036
        %v3038 = vrot.slane %v3029, %v3037
        %v3041 = vadd.f32 %v2669, %v3034
        %v3042 = vadd.f32 %v2670, %v3038
        %v3043 = vadd.f32 %v2671, %v3034
        %v3044 = vadd.f32 %v2672, %v3038
        %v3045 = vmax.f32 %v3041, 0.0
        %v3046 = vmax.f32 %v3042, 0.0
        %v3047 = vmax.f32 %v3043, 0.0
        %v3048 = vmax.f32 %v3044, 0.0
        %s3049 = scalar_lea.vmem [#allocation11], 160
        %v3050 = vld [vmem:[%s3049] ss:$8 sm:$0x3]
        %v3055 = vrot.slane %v3045, 4
        %v3056 = vrot.slane %v3047, 4
        %v3057 = vsel %vm839, %v3055, %v3056
        %v3058 = vrot.slane %v3046, 4
        %v3059 = vrot.slane %v3048, 4
        %v3060 = vsel %vm839, %v3058, %v3059
        %3063 = vrot.lane.b32.xlu0 %v3057, 32
        %v3064 = vpop.permute.xlu0 %3063
        %3065 = vrot.lane.b32.xlu0 %v3060, 32
        %v3066 = vpop.permute.xlu0 %3065
        %v3067 = vsel %vm1285, %v3064, %v3066
        %v3068 = vsel %vm1285, %v3066, %v3064
        %v3070 = vlaneseq
        %v3071 = vshrl.u32 %v3070, 7
        %v3072 = vsub.s32 0, %v3071
        %v3073 = vrot.slane %v3050, %v3072
        %v3074 = vlaneseq
        %v3075 = vshrl.u32 %v3074, 7
        %v3076 = vsub.s32 1, %v3075
        %v3077 = vrot.slane %v3050, %v3076
        %v3080 = vmul.f32 %v3068, %v3073
        %v3081 = vmul.f32 %v3067, %v3077
        %s3082 = scalar_lea.vmem [#allocation11], 161
        %v3083 = vld [vmem:[%s3082] ss:$8 sm:$0x3]
        %v3085 = vlaneseq
        %v3086 = vshrl.u32 %v3085, 7
        %v3087 = vsub.s32 0, %v3086
        %v3088 = vrot.slane %v3083, %v3087
        %v3089 = vlaneseq
        %v3090 = vshrl.u32 %v3089, 7
        %v3091 = vsub.s32 1, %v3090
        %v3092 = vrot.slane %v3083, %v3091
        %v3095 = vmul.f32 %v3045, %v3088
        %v3096 = vmul.f32 %v3046, %v3092
        %v3097 = vmul.f32 %v3047, %v3088
        %v3098 = vmul.f32 %v3048, %v3092
        %v3103 = vrot.slane %v3095, 4
        %v3104 = vrot.slane %v3097, 4
        %v3105 = vsel %vm839, %v3103, %v3104
        %v3106 = vrot.slane %v3096, 4
        %v3107 = vrot.slane %v3098, 4
        %v3108 = vsel %vm839, %v3106, %v3107
        %v3111 = vadd.f32 %v3080, %v3105
        %v3112 = vadd.f32 %v3081, %v3108
        %s3113 = scalar_lea.vmem [#allocation11], 162
        %v3114 = vld [vmem:[%s3113] ss:$8 sm:$0x3]
        %3115 = vrot.lane.b32.xlu0 %v3057, 96
        %v3116 = vpop.permute.xlu0 %3115
        %3117 = vrot.lane.b32.xlu0 %v3060, 96
        %v3118 = vpop.permute.xlu0 %3117
        %v3119 = vsel %vm1340, %v3116, %v3118
        %v3120 = vsel %vm1340, %v3118, %v3116
        %v3122 = vlaneseq
        %v3123 = vshrl.u32 %v3122, 7
        %v3124 = vsub.s32 0, %v3123
        %v3125 = vrot.slane %v3114, %v3124
        %v3126 = vlaneseq
        %v3127 = vshrl.u32 %v3126, 7
        %v3128 = vsub.s32 1, %v3127
        %v3129 = vrot.slane %v3114, %v3128
        %v3132 = vmul.f32 %v3119, %v3125
        %v3133 = vmul.f32 %v3120, %v3129
        %v3134 = vadd.f32 %v3111, %v3132
        %v3135 = vadd.f32 %v3112, %v3133
        %s3136 = scalar_lea.vmem [#allocation11], 101
        %v3137 = vld [vmem:[%s3136] ss:$8 sm:$0x3]
        %v3139 = vlaneseq
        %v3140 = vshrl.u32 %v3139, 7
        %v3141 = vsub.s32 0, %v3140
        %v3142 = vrot.slane %v3137, %v3141
        %v3143 = vlaneseq
        %v3144 = vshrl.u32 %v3143, 7
        %v3145 = vsub.s32 1, %v3144
        %v3146 = vrot.slane %v3137, %v3145
        %v3149 = vadd.f32 %v3134, %v3142
        %v3150 = vadd.f32 %v3135, %v3146
        %v3151 = vmax.f32 %v3149, 0.0
        %v3152 = vmax.f32 %v3150, 0.0
        %v3153 = vadd.f32 %v3026, %v3151
        %v3154 = vadd.f32 %v3027, %v3152
        %s3155 = scalar_lea.vmem [#allocation11], 99
        %v3156 = vld [vmem:[%s3155] ss:$8 sm:$0x3]
        %v3158 = vlaneseq
        %v3159 = vshrl.u32 %v3158, 7
        %v3160 = vsub.s32 0, %v3159
        %v3161 = vrot.slane %v3156, %v3160
        %v3162 = vlaneseq
        %v3163 = vshrl.u32 %v3162, 7
        %v3164 = vsub.s32 1, %v3163
        %v3165 = vrot.slane %v3156, %v3164
        %v3168 = vadd.f32 %v2861, %v3161
        %v3169 = vadd.f32 %v2862, %v3165
        %v3170 = vmax.f32 %v3168, 0.0
        %v3171 = vmax.f32 %v3169, 0.0
        %s3172 = scalar_lea.vmem [#allocation11], 163
        %v3173 = vld [vmem:[%s3172] ss:$8 sm:$0x3]
        %3174 = vrot.lane.b32.xlu0 %v3170, 32
        %v3175 = vpop.permute.xlu0 %3174
        %3176 = vrot.lane.b32.xlu0 %v3171, 32
        %v3177 = vpop.permute.xlu0 %3176
        %v3178 = vsel %vm1285, %v3175, %v3177
        %v3179 = vsel %vm1285, %v3177, %v3175
        %v3181 = vlaneseq
        %v3182 = vshrl.u32 %v3181, 7
        %v3183 = vsub.s32 0, %v3182
        %v3184 = vrot.slane %v3173, %v3183
        %v3185 = vlaneseq
        %v3186 = vshrl.u32 %v3185, 7
        %v3187 = vsub.s32 1, %v3186
        %v3188 = vrot.slane %v3173, %v3187
        %v3191 = vmul.f32 %v3178, %v3184
        %v3192 = vmul.f32 %v3179, %v3188
        %s3193 = scalar_lea.vmem [#allocation11], 164
        %v3194 = vld [vmem:[%s3193] ss:$8 sm:$0x3]
        %v3196 = vlaneseq
        %v3197 = vshrl.u32 %v3196, 7
        %v3198 = vsub.s32 0, %v3197
        %v3199 = vrot.slane %v3194, %v3198
        %v3200 = vlaneseq
        %v3201 = vshrl.u32 %v3200, 7
        %v3202 = vsub.s32 1, %v3201
        %v3203 = vrot.slane %v3194, %v3202
        %v3206 = vmul.f32 %v3171, %v3199
        %v3207 = vmul.f32 %v3170, %v3203
        %v3208 = vadd.f32 %v3191, %v3206
        %v3209 = vadd.f32 %v3192, %v3207
        %s3210 = scalar_lea.vmem [#allocation11], 165
        %v3211 = vld [vmem:[%s3210] ss:$8 sm:$0x3]
        %3212 = vrot.lane.b32.xlu0 %v3170, 96
        %v3213 = vpop.permute.xlu0 %3212
        %3214 = vrot.lane.b32.xlu0 %v3171, 96
        %v3215 = vpop.permute.xlu0 %3214
        %v3216 = vsel %vm1340, %v3213, %v3215
        %v3217 = vsel %vm1340, %v3215, %v3213
        %v3219 = vlaneseq
        %v3220 = vshrl.u32 %v3219, 7
        %v3221 = vsub.s32 0, %v3220
        %v3222 = vrot.slane %v3211, %v3221
        %v3223 = vlaneseq
        %v3224 = vshrl.u32 %v3223, 7
        %v3225 = vsub.s32 1, %v3224
        %v3226 = vrot.slane %v3211, %v3225
        %v3229 = vmul.f32 %v3217, %v3222
        %v3230 = vmul.f32 %v3216, %v3226
        %v3231 = vadd.f32 %v3208, %v3229
        %v3232 = vadd.f32 %v3209, %v3230
        %s3233 = scalar_lea.vmem [#allocation11], 166
        %v3234 = vld [vmem:[%s3233] ss:$8 sm:$0x3]
        %3235 = vrot.lane.b32.xlu0 %v3170, 64
        %v3236 = vpop.permute.xlu0 %3235
        %3237 = vrot.lane.b32.xlu0 %v3171, 64
        %v3238 = vpop.permute.xlu0 %3237
        %v3239 = vsel %vm1263, %v3236, %v3238
        %v3240 = vsel %vm1263, %v3238, %v3236
        %v3242 = vlaneseq
        %v3243 = vshrl.u32 %v3242, 7
        %v3244 = vsub.s32 0, %v3243
        %v3245 = vrot.slane %v3234, %v3244
        %v3246 = vlaneseq
        %v3247 = vshrl.u32 %v3246, 7
        %v3248 = vsub.s32 1, %v3247
        %v3249 = vrot.slane %v3234, %v3248
        %v3252 = vmul.f32 %v3240, %v3245
        %v3253 = vmul.f32 %v3239, %v3249
        %v3254 = vadd.f32 %v3231, %v3252
        %v3255 = vadd.f32 %v3232, %v3253
        %s3256 = scalar_lea.vmem [#allocation11], 167
        %v3257 = vld [vmem:[%s3256] ss:$8 sm:$0x3]
        %v3259 = vlaneseq
        %v3260 = vshrl.u32 %v3259, 7
        %v3261 = vsub.s32 0, %v3260
        %v3262 = vrot.slane %v3257, %v3261
        %v3263 = vlaneseq
        %v3264 = vshrl.u32 %v3263, 7
        %v3265 = vsub.s32 1, %v3264
        %v3266 = vrot.slane %v3257, %v3265
        %v3269 = vmul.f32 %v3179, %v3262
        %v3270 = vmul.f32 %v3178, %v3266
        %v3271 = vadd.f32 %v3254, %v3269
        %v3272 = vadd.f32 %v3255, %v3270
        %s3273 = scalar_lea.vmem [#allocation11], 176
        %v3274 = vld [vmem:[%s3273] ss:$8 sm:$0x3]
        %v3276 = vlaneseq
        %v3277 = vshrl.u32 %v3276, 7
        %v3278 = vsub.s32 0, %v3277
        %v3279 = vrot.slane %v3274, %v3278
        %v3280 = vlaneseq
        %v3281 = vshrl.u32 %v3280, 7
        %v3282 = vsub.s32 1, %v3281
        %v3283 = vrot.slane %v3274, %v3282
        %v3286 = vmul.f32 %v3170, %v3279
        %v3287 = vmul.f32 %v3171, %v3283
        %v3288 = vadd.f32 %v3271, %v3286
        %v3289 = vadd.f32 %v3272, %v3287
        %s3290 = scalar_lea.vmem [#allocation11], 177
        %v3291 = vld [vmem:[%s3290] ss:$8 sm:$0x3]
        %v3293 = vlaneseq
        %v3294 = vshrl.u32 %v3293, 7
        %v3295 = vsub.s32 0, %v3294
        %v3296 = vrot.slane %v3291, %v3295
        %v3297 = vlaneseq
        %v3298 = vshrl.u32 %v3297, 7
        %v3299 = vsub.s32 1, %v3298
        %v3300 = vrot.slane %v3291, %v3299
        %v3303 = vmul.f32 %v3216, %v3296
        %v3304 = vmul.f32 %v3217, %v3300
        %v3305 = vadd.f32 %v3288, %v3303
        %v3306 = vadd.f32 %v3289, %v3304
        %s3307 = scalar_lea.vmem [#allocation11], 178
        %v3308 = vld [vmem:[%s3307] ss:$8 sm:$0x3]
        %v3310 = vlaneseq
        %v3311 = vshrl.u32 %v3310, 7
        %v3312 = vsub.s32 0, %v3311
        %v3313 = vrot.slane %v3308, %v3312
        %v3314 = vlaneseq
        %v3315 = vshrl.u32 %v3314, 7
        %v3316 = vsub.s32 1, %v3315
        %v3317 = vrot.slane %v3308, %v3316
        %v3320 = vmul.f32 %v3239, %v3313
        %v3321 = vmul.f32 %v3240, %v3317
        %v3322 = vadd.f32 %v3305, %v3320
        %v3323 = vadd.f32 %v3306, %v3321
        %s3324 = scalar_lea.vmem [#allocation11], 179
        %v3325 = vld [vmem:[%s3324] ss:$8 sm:$0x3]
        %v3327 = vlaneseq
        %v3328 = vshrl.u32 %v3327, 7
        %v3329 = vsub.s32 0, %v3328
        %v3330 = vrot.slane %v3325, %v3329
        %v3331 = vlaneseq
        %v3332 = vshrl.u32 %v3331, 7
        %v3333 = vsub.s32 1, %v3332
        %v3334 = vrot.slane %v3325, %v3333
        %v3337 = vmul.f32 %v3178, %v3330
        %v3338 = vmul.f32 %v3179, %v3334
        %v3339 = vadd.f32 %v3322, %v3337
        %v3340 = vadd.f32 %v3323, %v3338
        %s3341 = scalar_lea.vmem [#allocation11], 180
        %v3342 = vld [vmem:[%s3341] ss:$8 sm:$0x3]
        %v3344 = vlaneseq
        %v3345 = vshrl.u32 %v3344, 7
        %v3346 = vsub.s32 0, %v3345
        %v3347 = vrot.slane %v3342, %v3346
        %v3348 = vlaneseq
        %v3349 = vshrl.u32 %v3348, 7
        %v3350 = vsub.s32 1, %v3349
        %v3351 = vrot.slane %v3342, %v3350
        %v3354 = vmul.f32 %v3171, %v3347
        %v3355 = vmul.f32 %v3170, %v3351
        %v3356 = vadd.f32 %v3339, %v3354
        %v3357 = vadd.f32 %v3340, %v3355
        %s3358 = scalar_lea.vmem [#allocation11], 181
        %v3359 = vld [vmem:[%s3358] ss:$8 sm:$0x3]
        %v3361 = vlaneseq
        %v3362 = vshrl.u32 %v3361, 7
        %v3363 = vsub.s32 0, %v3362
        %v3364 = vrot.slane %v3359, %v3363
        %v3365 = vlaneseq
        %v3366 = vshrl.u32 %v3365, 7
        %v3367 = vsub.s32 1, %v3366
        %v3368 = vrot.slane %v3359, %v3367
        %v3371 = vmul.f32 %v3217, %v3364
        %v3372 = vmul.f32 %v3216, %v3368
        %v3373 = vadd.f32 %v3356, %v3371
        %v3374 = vadd.f32 %v3357, %v3372
        %s3375 = scalar_lea.vmem [#allocation11], 102
        %v3376 = vld [vmem:[%s3375] ss:$8 sm:$0x3]
        %v3378 = vlaneseq
        %v3379 = vshrl.u32 %v3378, 7
        %v3380 = vsub.s32 0, %v3379
        %v3381 = vrot.slane %v3376, %v3380
        %v3382 = vlaneseq
        %v3383 = vshrl.u32 %v3382, 7
        %v3384 = vsub.s32 1, %v3383
        %v3385 = vrot.slane %v3376, %v3384
        %v3388 = vadd.f32 %v3373, %v3381
        %v3389 = vadd.f32 %v3374, %v3385
        %v3390 = vmax.f32 %v3388, 0.0
        %v3391 = vmax.f32 %v3389, 0.0
        %v3392 = vadd.f32 %v3153, %v3390
        %v3393 = vadd.f32 %v3154, %v3391
        %v3394 = vpack.c.bf16 %v3392, %v3392
        %v3395 = vpack.c.bf16 %v3393, %v3393
        %v3396 = vld [vmem:[#allocation9 + $0x100] sm:$0xff]
        %v3397 = vld [vmem:[#allocation9 + $0x108] sm:$0xff]
        %v3398 = vld [vmem:[#allocation9 + $0x110] sm:$0xff]
        %v3399 = vld [vmem:[#allocation9 + $0x118] sm:$0xff]
        %v3400 = vld [vmem:[#allocation9 + $0x120] sm:$0xff]
        %v3401 = vld [vmem:[#allocation9 + $0x128] sm:$0xff]
        %v3402 = vld [vmem:[#allocation9 + $0x130] sm:$0xff]
        %v3403 = vld [vmem:[#allocation9 + $0x138] sm:$0xff]
        %v3404 = vld [vmem:[#allocation9 + $0x140] sm:$0xff]
        %v3405 = vld [vmem:[#allocation9 + $0x148] sm:$0xff]
        %v3406 = vld [vmem:[#allocation9 + $0x150] sm:$0xff]
        %v3407 = vld [vmem:[#allocation9 + $0x158] sm:$0xff]
        %v3408 = vld [vmem:[#allocation9 + $0x160] sm:$0xff]
        %v3409 = vld [vmem:[#allocation9 + $0x168] sm:$0xff]
        %v3410 = vld [vmem:[#allocation9 + $0x170] sm:$0xff]
        %v3411 = vld [vmem:[#allocation9 + $0x178] sm:$0xff]
        %v3412 = vld [vmem:[#allocation9 + $0x180] sm:$0xff]
        %v3413 = vld [vmem:[#allocation9 + $0x188] sm:$0xff]
        %v3414 = vld [vmem:[#allocation9 + $0x190] sm:$0xff]
        %v3415 = vld [vmem:[#allocation9 + $0x198] sm:$0xff]
        %v3416 = vld [vmem:[#allocation9 + $0x1a0] sm:$0xff]
        %v3417 = vld [vmem:[#allocation9 + $0x1a8] sm:$0xff]
        %v3418 = vld [vmem:[#allocation9 + $0x1b0] sm:$0xff]
        %v3419 = vld [vmem:[#allocation9 + $0x1b8] sm:$0xff]
        %v3420 = vld [vmem:[#allocation9 + $0x1c0] sm:$0xff]
        %v3421 = vld [vmem:[#allocation9 + $0x1c8] sm:$0xff]
        %v3422 = vld [vmem:[#allocation9 + $0x1d0] sm:$0xff]
        %v3423 = vld [vmem:[#allocation9 + $0x1d8] sm:$0xff]
        %v3424 = vld [vmem:[#allocation9 + $0x1e0] sm:$0xff]
        %v3425 = vld [vmem:[#allocation9 + $0x1e8] sm:$0xff]
        %v3426 = vld [vmem:[#allocation9 + $0x1f0] sm:$0xff]
        %v3427 = vld [vmem:[#allocation9 + $0x1f8] sm:$0xff]
        %s3428 = scalar_lea.vmem [#allocation11], 103
        %v3429 = vld [vmem:[%s3428] ss:$8 sm:$0x3]
        %v3431 = vlaneseq
        %v3432 = vshrl.u32 %v3431, 7
        %v3433 = vsub.s32 0, %v3432
        %v3434 = vrot.slane %v3429, %v3433
        %v3435 = vlaneseq
        %v3436 = vshrl.u32 %v3435, 7
        %v3437 = vsub.s32 1, %v3436
        %v3438 = vrot.slane %v3429, %v3437
        %v3473 = vunpack.c.l.b16 %v3396
        %v3474 = vunpack.c.h.b16 %v3396
        %v3475 = vunpack.c.l.b16 %v3397
        %v3476 = vunpack.c.h.b16 %v3397
        %v3477 = vunpack.c.l.b16 %v3398
        %v3478 = vunpack.c.h.b16 %v3398
        %v3479 = vunpack.c.l.b16 %v3399
        %v3480 = vunpack.c.h.b16 %v3399
        %v3481 = vunpack.c.l.b16 %v3400
        %v3482 = vunpack.c.h.b16 %v3400
        %v3483 = vunpack.c.l.b16 %v3401
        %v3484 = vunpack.c.h.b16 %v3401
        %v3485 = vunpack.c.l.b16 %v3402
        %v3486 = vunpack.c.h.b16 %v3402
        %v3487 = vunpack.c.l.b16 %v3403
        %v3488 = vunpack.c.h.b16 %v3403
        %v3489 = vunpack.c.l.b16 %v3404
        %v3490 = vunpack.c.h.b16 %v3404
        %v3491 = vunpack.c.l.b16 %v3405
        %v3492 = vunpack.c.h.b16 %v3405
        %v3493 = vunpack.c.l.b16 %v3406
        %v3494 = vunpack.c.h.b16 %v3406
        %v3495 = vunpack.c.l.b16 %v3407
        %v3496 = vunpack.c.h.b16 %v3407
        %v3497 = vunpack.c.l.b16 %v3408
        %v3498 = vunpack.c.h.b16 %v3408
        %v3499 = vunpack.c.l.b16 %v3409
        %v3500 = vunpack.c.h.b16 %v3409
        %v3501 = vunpack.c.l.b16 %v3410
        %v3502 = vunpack.c.h.b16 %v3410
        %v3503 = vunpack.c.l.b16 %v3411
        %v3504 = vunpack.c.h.b16 %v3411
        %v3505 = vunpack.c.l.b16 %v3412
        %v3506 = vunpack.c.h.b16 %v3412
        %v3507 = vunpack.c.l.b16 %v3413
        %v3508 = vunpack.c.h.b16 %v3413
        %v3509 = vunpack.c.l.b16 %v3414
        %v3510 = vunpack.c.h.b16 %v3414
        %v3511 = vunpack.c.l.b16 %v3415
        %v3512 = vunpack.c.h.b16 %v3415
        %v3513 = vunpack.c.l.b16 %v3416
        %v3514 = vunpack.c.h.b16 %v3416
        %v3515 = vunpack.c.l.b16 %v3417
        %v3516 = vunpack.c.h.b16 %v3417
        %v3517 = vunpack.c.l.b16 %v3418
        %v3518 = vunpack.c.h.b16 %v3418
        %v3519 = vunpack.c.l.b16 %v3419
        %v3520 = vunpack.c.h.b16 %v3419
        %v3521 = vunpack.c.l.b16 %v3420
        %v3522 = vunpack.c.h.b16 %v3420
        %v3523 = vunpack.c.l.b16 %v3421
        %v3524 = vunpack.c.h.b16 %v3421
        %v3525 = vunpack.c.l.b16 %v3422
        %v3526 = vunpack.c.h.b16 %v3422
        %v3527 = vunpack.c.l.b16 %v3423
        %v3528 = vunpack.c.h.b16 %v3423
        %v3529 = vunpack.c.l.b16 %v3424
        %v3530 = vunpack.c.h.b16 %v3424
        %v3531 = vunpack.c.l.b16 %v3425
        %v3532 = vunpack.c.h.b16 %v3425
        %v3533 = vunpack.c.l.b16 %v3426
        %v3534 = vunpack.c.h.b16 %v3426
        %v3535 = vunpack.c.l.b16 %v3427
        %v3536 = vunpack.c.h.b16 %v3427
        %v3537 = vpack.c.b16 %v3475, %v3473
        %v3538 = vpack.c.b16 %v3476, %v3474
        %v3539 = vpack.c.b16 %v3479, %v3477
        %v3540 = vpack.c.b16 %v3480, %v3478
        %v3541 = vpack.c.b16 %v3483, %v3481
        %v3542 = vpack.c.b16 %v3484, %v3482
        %v3543 = vpack.c.b16 %v3487, %v3485
        %v3544 = vpack.c.b16 %v3488, %v3486
        %v3545 = vpack.c.b16 %v3491, %v3489
        %v3546 = vpack.c.b16 %v3492, %v3490
        %v3547 = vpack.c.b16 %v3495, %v3493
        %v3548 = vpack.c.b16 %v3496, %v3494
        %v3549 = vpack.c.b16 %v3499, %v3497
        %v3550 = vpack.c.b16 %v3500, %v3498
        %v3551 = vpack.c.b16 %v3503, %v3501
        %v3552 = vpack.c.b16 %v3504, %v3502
        %v3553 = vpack.c.b16 %v3507, %v3505
        %v3554 = vpack.c.b16 %v3508, %v3506
        %v3555 = vpack.c.b16 %v3511, %v3509
        %v3556 = vpack.c.b16 %v3512, %v3510
        %v3557 = vpack.c.b16 %v3515, %v3513
        %v3558 = vpack.c.b16 %v3516, %v3514
        %v3559 = vpack.c.b16 %v3519, %v3517
        %v3560 = vpack.c.b16 %v3520, %v3518
        %v3561 = vpack.c.b16 %v3523, %v3521
        %v3562 = vpack.c.b16 %v3524, %v3522
        %v3563 = vpack.c.b16 %v3527, %v3525
        %v3564 = vpack.c.b16 %v3528, %v3526
        %v3565 = vpack.c.b16 %v3531, %v3529
        %v3566 = vpack.c.b16 %v3532, %v3530
        %v3567 = vpack.c.b16 %v3535, %v3533
        %v3568 = vpack.c.b16 %v3536, %v3534
        %3601 = vmatprep.subr.bf16.mxu0 %v3538
        %3602 = vmatpush1.bf16.msra.mxu0 %v3537
        %3603 = vmatprep.subr.bf16.mxu0 %v3540
        %3604 = vmatpush1.bf16.msra.mxu0 %v3539
        %3605 = vmatprep.subr.bf16.mxu0 %v3542
        %3606 = vmatpush1.bf16.msra.mxu0 %v3541
        %3607 = vmatprep.subr.bf16.mxu0 %v3544
        %3608 = vmatpush1.bf16.msra.mxu0 %v3543
        %3609 = vmatprep.subr.bf16.mxu0 %v3546
        %3610 = vmatpush1.bf16.msra.mxu0 %v3545
        %3611 = vmatprep.subr.bf16.mxu0 %v3548
        %3612 = vmatpush1.bf16.msra.mxu0 %v3547
        %3613 = vmatprep.subr.bf16.mxu0 %v3550
        %3614 = vmatpush1.bf16.msra.mxu0 %v3549
        %3615 = vmatprep.subr.bf16.mxu0 %v3552
        %3616 = vmatpush1.bf16.msra.mxu0 %v3551
        %3617 = vmatprep.subr.bf16.mxu0 %v3554
        %3618 = vmatpush1.bf16.msra.mxu0 %v3553
        %3619 = vmatprep.subr.bf16.mxu0 %v3556
        %3620 = vmatpush1.bf16.msra.mxu0 %v3555
        %3621 = vmatprep.subr.bf16.mxu0 %v3558
        %3622 = vmatpush1.bf16.msra.mxu0 %v3557
        %3623 = vmatprep.subr.bf16.mxu0 %v3560
        %3624 = vmatpush1.bf16.msra.mxu0 %v3559
        %3625 = vmatprep.subr.bf16.mxu0 %v3562
        %3626 = vmatpush1.bf16.msra.mxu0 %v3561
        %3627 = vmatprep.subr.bf16.mxu0 %v3564
        %3628 = vmatpush1.bf16.msra.mxu0 %v3563
        %3629 = vmatprep.subr.bf16.mxu0 %v3566
        %3630 = vmatpush1.bf16.msra.mxu0 %v3565
        %3631 = vmatprep.subr.bf16.mxu0 %v3568
        %3632 = vmatpush1.bf16.msra.mxu0 %v3567
        %3633 = vmatprep.mubr.bf16.mxu0 %v3395
        %3634 = vmatmul.mubr.bf16.gmra.mrb[0].mxu0 %v3394
        %v3635 = vpop.f32.mrb[0].mxu0
        %v3636 = vadd.f32 %v3434, %v3635
        %v3637 = vpop.f32.mrb[0].mxu0
        %v3638 = vadd.f32 %v3438, %v3637
        %v3639 = vpop.f32.mrb[0].mxu0
        %v3640 = vpop.f32.mrb[0].mxu0
        %3641 = vdwg.mxu0
        %v3642 = vadd.f32 %v2008, %v3636
        %v3643 = vadd.f32 %v2009, %v3638
        %v3644 = vmax.f32 %v3642, 0.0
        %v3645 = vmax.f32 %v3643, 0.0
        %3646 = vst [vmem:[%s297] sm:$0xff] %v3644
        %3647 = vst [vmem:[%s297 + $0x8] sm:$0xff] %v3645
        %s3648 = sand.u32 %s142, 1
        %s3649 = scalar_lea.sflag [#allocation5], %s3648
        %s3650 = sand.u32 %s142, 1
        %s3651 = smul.addr %s3650, 16
        %s3652 = scalar_lea.vmem [#allocation12], %s3651
        // Predicated region
        $region61: #{tpu_custom_call.1} parent=39 // pred_check
          %p3653 = pneg %p152
        $region62: #{tpu_custom_call.1} parent=39 // pred_check_branch
          %3655 = sbr.rel (%p3653) target = $region64
        $region63: #{tpu_custom_call.1} parent=39 // pred_region
          %s3657 = ssub.s32 256, 256
          %3658 = vsyncadd %s3649, %s3657
          %s3659 = smul.addr %s24, 2
          %s3660 = smul.addr %s3659, 128
          %s3661 = scalar_lea.hbm %s5, %s3660
          %s3663 = sshll.u32 %s3652, 4
          %s3664 = int_to_ptr.vmem [resolvable:$true] %s3663
          %3666 = dma.vmem_to_hbm [thread:$0]  %s3664, 256, %s3661, %s3649
        $region64: #{tpu_custom_call.1} parent=39 // pred_fallthru
          _
      $region40: #{tpu_custom_call.1} parent=5 // pred_fallthru
        _
      %p3667 = scmp.le.s32.totalorder 2, %s19
      // Predicated region
      $region65: #{tpu_custom_call.1} parent=5 // pred_check
        %p3668 = pneg %p3667
      $region66: #{tpu_custom_call.1} parent=5 // pred_check_branch
        %3670 = sbr.rel (%p3668) target = $region68
      $region67: #{tpu_custom_call.1} parent=5 // pred_region
        %s3671 = ssub.s32 %s19, 2
        // Predicated region
        $region69: #{tpu_custom_call.1} parent=67 // pred_check
          %p3672 = pneg %p158
        $region70: #{tpu_custom_call.1} parent=67 // pred_check_branch
          %3674 = sbr.rel (%p3672) target = $region72
        $region71: #{tpu_custom_call.1} parent=67 // pred_region
          %s3675 = sand.u32 %s143, 1
          %s3676 = scalar_lea.sflag [#allocation5], %s3675
          %s3677 = sand.u32 %s143, 1
          %s3678 = smul.addr %s3677, 16
          %s3679 = scalar_lea.vmem [#allocation12], %s3678
          %3680 = dma.done %s3676, 256
        $region72: #{tpu_custom_call.1} parent=67 // pred_fallthru
          _
      $region68: #{tpu_custom_call.1} parent=5 // pred_fallthru
        _
    $region6: #{tpu_custom_call.1} parent=1 // loop_footer
      %s23 = sadd.s32 1, %s19
    $region7: #{tpu_custom_call.1} parent=1 // loop_footer_branch
      %18 = sbr.rel target = $region3
    $region8: #{tpu_custom_call.1} parent=1 // loop_exit
      _
    %3681 = vsyncpa [#allocation4], 1
    %s3682 = scalar_lea.sflag [#allocation4], 1
    %3683 = vsyncpa %s3682, 1
    %3684 = vsyncpa [#allocation7], 1
    %3685 = vsyncpa [#allocation10], 1
    %3686 = vsyncpa [#allocation5], 1
    %s3687 = scalar_lea.sflag [#allocation5], 1
    %3688 = vsyncpa %s3687, 1

</llo_original>
